<compile_context>
chip_gen: v5e
topology: v5e:2x2
jax: 0.10.0
libtpu: 0.0.40
codegen_flags: <defaults>
</compile_context>

<pallas_src>
import math

import jax
import jax.numpy as jnp
from jax import lax
from jax.experimental import pallas as pl
from jax.experimental.pallas import tpu as pltpu

# ----------------------------- model config (scaled down) -----------------------------
ENCODER = "vits"
INTERMEDIATE_IDX = {"vits": [2, 5, 8, 11], "vitl": [4, 11, 17, 23]}[ENCODER]
DEPTH = 12
EMBED_DIM = 32
NUM_HEADS = 2
MLP_RATIO = 4
PATCH = 14
FEATURES = 16                      # DPT head "features" (scaled down from 256)
OUT_CHANNELS = [8, 16, 32, 32]     # scaled down from [256, 512, 1024, 1024]
T_HEADS = 2                        # heads of the temporal attention block
LN_EPS = 1e-6

_CPARAMS = pltpu.CompilerParams(
    dimension_semantics=("parallel",),
    vmem_limit_bytes=32 * 1024 * 1024,   # explicit scoped-VMEM limit (safe on v5e/v6e/v7x)
)


# ------------------------------------ small helpers ------------------------------------
def _const_spec(arr):
    """Full-array block, same block every grid step (weights stay VMEM-resident).
    TODO(synk): at real model scale add pipeline_mode=pl.Buffered(1) so constant operands
    are not double-buffered (pure VMEM waste on v7x's 64 MiB)."""
    nd = arr.ndim
    return pl.BlockSpec(arr.shape, lambda *_: (0,) * nd)


def _ln(x, g, b):
    mu = jnp.mean(x, axis=-1, keepdims=True)
    var = jnp.mean(jnp.square(x - mu), axis=-1, keepdims=True)
    return (x - mu) * lax.rsqrt(var + LN_EPS) * g + b


def _bdot(a, b):
    """bf16-in / f32-accumulate matmul (MXU friendly on v5e/v6e/v7x)."""
    return jnp.dot(a.astype(jnp.bfloat16), b.astype(jnp.bfloat16),
                   preferred_element_type=jnp.float32)


def _pick_batch(n_units, rows_per_unit, max_rows=1024):
    """Largest divisor b of n_units such that every block built from b units is either
    the full array extent (always legal) or 8-sublane aligned, and fits max_rows."""
    rpu = rows_per_unit if isinstance(rows_per_unit, (list, tuple)) else (rows_per_unit,)
    if n_units * max(rpu) <= max_rows:
        return n_units
    for b in range(n_units - 1, 0, -1):
        if n_units % b:
            continue
        if all((b * r) % 8 == 0 for r in rpu) and b * max(rpu) <= max_rows:
            return b
    return n_units


# --------------------------- fused transformer block kernel ----------------------------
def _make_block_kernel(num_heads, with_mlp):
    def kernel(*refs):
        if with_mlp:
            (x_ref, mask_ref, ln1_g, ln1_b, qkv_w, qkv_b, proj_w, proj_b,
             ln2_g, ln2_b, fc1_w, fc1_b, fc2_w, fc2_b, o_ref) = refs
        else:
            (x_ref, mask_ref, ln1_g, ln1_b, qkv_w, qkv_b, proj_w, proj_b, o_ref) = refs

        x = x_ref[...]                                  # (M, D) f32, M = TB * seq_len rows
        M, D = x.shape
        dh = D // num_heads
        scale = 1.0 / math.sqrt(dh)

        # ---- pre-LN multi-head self-attention over all TB sequences at once ----
        h = _ln(x, ln1_g[...], ln1_b[...])
        qkv = _bdot(h, qkv_w[...]) + qkv_b[...]         # (M, 3D): one wide MXU matmul
        mask = mask_ref[...]                            # (M, M) block-diagonal additive mask
        pw_all = proj_w[...]

        attn = jnp.zeros((M, D), jnp.float32)
        # TODO(synk): heads are Python-looped (num_heads=2, dh=16 < one 128-lane tile at
        # this toy scale); at vitl scale restructure qkv_w per head and batch heads in a
        # leading dot_general batch dim instead of lane-offset slicing.
        for hd in range(num_heads):
            q = qkv[:, hd * dh:(hd + 1) * dh]
            k = qkv[:, D + hd * dh:D + (hd + 1) * dh]
            v = qkv[:, 2 * D + hd * dh:2 * D + (hd + 1) * dh]
            s = lax.dot_general(q.astype(jnp.bfloat16), k.astype(jnp.bfloat16),
                                (((1,), (1,)), ((), ())),
                                preferred_element_type=jnp.float32) * scale + mask
            s = s - jnp.max(s, axis=-1, keepdims=True)
            p = jnp.exp(s)
            p = p * pl.reciprocal(jnp.sum(p, axis=-1, keepdims=True), approx=True)
            o_h = _bdot(p, v)                           # (M, dh)
            # concat-free output projection: sum over per-head slices of proj_w
            attn = attn + _bdot(o_h, pw_all[hd * dh:(hd + 1) * dh, :])
        x = x + attn + proj_b[...]

        # ---- MLP (position-wise -> operates on all M rows at once) ----
        if with_mlp:
            h2 = _ln(x, ln2_g[...], ln2_b[...])
            h2 = _bdot(h2, fc1_w[...]) + fc1_b[...]
            # TODO(synk): PyTorch nn.GELU defaults to exact erf; tanh approximation used.
            h2 = jax.nn.gelu(h2, approximate=True)
            # TODO(synk): at vitl scale on v5e, tile this (M, 4D) intermediate over rows.
            h2 = _bdot(h2, fc2_w[...]) + fc2_b[...]
            x = x + h2

        o_ref[...] = x
    return kernel


def fused_block(x2d, p, num_heads, seq_len, with_mlp=True):
    """x2d: (n_seq * seq_len, D) row-major sequences.  TB whole sequences per grid step;
    attention stays per-sequence via a block-diagonal additive mask (exact: masked scores
    underflow to 0 after the row-max subtraction)."""
    Mtot, D = x2d.shape
    nseq = Mtot // seq_len
    tb = _pick_batch(nseq, seq_len)
    M = tb * seq_len
    seq_id = jnp.arange(M, dtype=jnp.int32) // seq_len
    mask = jnp.where(seq_id[:, None] == seq_id[None, :], 0.0, -1e9).astype(jnp.float32)

    names = ["ln1_g", "ln1_b", "qkv_w", "qkv_b", "proj_w", "proj_b"]
    if with_mlp:
        names += ["ln2_g", "ln2_b", "fc1_w", "fc1_b", "fc2_w", "fc2_b"]
    ops = [p[n] for n in names]
    in_specs = ([pl.BlockSpec((M, D), lambda i: (i, 0)), _const_spec(mask)]
                + [_const_spec(o) for o in ops])
    return pl.pallas_call(
        _make_block_kernel(num_heads, with_mlp),
        grid=(nseq // tb,),
        in_specs=in_specs,
        out_specs=pl.BlockSpec((M, D), lambda i: (i, 0)),
        out_shape=jax.ShapeDtypeStruct((Mtot, D), jnp.float32),
        compiler_params=_CPARAMS,
    )(x2d, mask, *ops)


# ---------------------- fused patch-embed + cls + pos-embedding kernel -----------------
def _make_embed_kernel(tbe, n_patch, seq_len):
    def kernel(x_ref, w_ref, b_ref, clspos_ref, postok_ref, o_ref):
        tok = _bdot(x_ref[...], w_ref[...]) + b_ref[...]       # (tbe*n_patch, D)
        pos = postok_ref[...]                                  # (n_patch, D)
        for t in range(tbe):                                   # static, small
            o_ref[t * seq_len:t * seq_len + 1, :] = clspos_ref[...]
            o_ref[t * seq_len + 1:(t + 1) * seq_len, :] = (
                tok[t * n_patch:(t + 1) * n_patch, :] + pos)
    return kernel


def embed_tokens(patches, patch_w, patch_b, clspos, postok, n_frames, n_patch, seq_len):
    CPP = patches.shape[1]
    D = patch_w.shape[1]
    tbe = _pick_batch(n_frames, (n_patch, seq_len))
    in_specs = ([pl.BlockSpec((tbe * n_patch, CPP), lambda i: (i, 0))]
                + [_const_spec(o) for o in (patch_w, patch_b, clspos, postok)])
    return pl.pallas_call(
        _make_embed_kernel(tbe, n_patch, seq_len),
        grid=(n_frames // tbe,),
        in_specs=in_specs,
        out_specs=pl.BlockSpec((tbe * seq_len, D), lambda i: (i, 0)),
        out_shape=jax.ShapeDtypeStruct((n_frames * seq_len, D), jnp.float32),
        compiler_params=_CPARAMS,
    )(patches, patch_w, patch_b, clspos, postok)


# --------------------------- fused DPT-head projection kernel --------------------------
def _head_project_kernel(t0, t1, t2, t3, ng, nb, w_ref, b_ref, o_ref):
    g, b = ng[...], nb[...]
    # final encoder norm on each tap, lane-concat -> ONE (R, 4D) x (4D, FEATURES) matmul
    xcat = jnp.concatenate([_ln(t[...], g, b) for t in (t0, t1, t2, t3)], axis=-1)
    o_ref[...] = _bdot(xcat, w_ref[...]) + b_ref[...]


def head_project(taps, w_cat, b_sum, norm_g, norm_b):
    Mtot, D = taps[0].shape
    F_ = w_cat.shape[1]
    R = _pick_batch(Mtot, 1, max_rows=2048)
    in_specs = ([pl.BlockSpec((R, D), lambda i: (i, 0))] * 4
                + [_const_spec(o) for o in (norm_g, norm_b, w_cat, b_sum)])
    return pl.pallas_call(
        _head_project_kernel,
        grid=(Mtot // R,),
        in_specs=in_specs,
        out_specs=pl.BlockSpec((R, F_), lambda i: (i, 0)),
        out_shape=jax.ShapeDtypeStruct((Mtot, F_), jnp.float32),
        compiler_params=_CPARAMS,
    )(*taps, norm_g, norm_b, w_cat, b_sum)


# ------------------ fused output convs + unflatten + bilinear upsample -----------------
def _make_head_output_kernel(tbo, seq_len):
    def kernel(f_ref, w1, b1, w2, b2, w3t, b3, u_ref, o_ref):
        x = f_ref[...]                                        # (tbo*S, F)
        y = _bdot(x, w1[...]) + b1[...]                       # out1
        y = jnp.maximum(_bdot(y, w2[...]) + b2[...], 0.0)     # out2 + relu
        # out3 has N=1: VPU multiply + lane-reduce instead of a lane-sparse MXU matmul
        z = jnp.maximum(jnp.sum(y * w3t[...], axis=-1, keepdims=True) + b3[...], 0.0)
        u = u_ref[...]                                        # (S, H*W): cls-drop + unflatten
        for t in range(tbo):                                  # + align_corners bilinear, folded
            zt = z[t * seq_len:(t + 1) * seq_len, :]          # (S, 1)
            row = jnp.sum(zt * u, axis=0, keepdims=True)      # (1, H*W) lane-dense
            o_ref[t:t + 1, :] = jnp.maximum(row, 0.0)         # final F.relu
    return kernel


def head_output(fused2d, head, umat, seq_len, n_frames):
    Mtot, F_ = fused2d.shape
    HW = umat.shape[1]
    tbo = _pick_batch(n_frames, (seq_len, 1))
    ops = [head["out1_w"], head["out1_b"], head["out2_w"], head["out2_b"],
           jnp.transpose(head["out3_w"]), head["out3_b"], umat]
    in_specs = ([pl.BlockSpec((tbo * seq_len, F_), lambda i: (i, 0))]
                + [_const_spec(o) for o in ops])
    return pl.pallas_call(
        _make_head_output_kernel(tbo, seq_len),
        grid=(n_frames // tbo,),
        in_specs=in_specs,
        out_specs=pl.BlockSpec((tbo, HW), lambda i: (i, 0)),
        out_shape=jax.ShapeDtypeStruct((n_frames, HW), jnp.float32),
        compiler_params=_CPARAMS,
    )(fused2d, *ops)


# -------------------------------- bilinear helper matrices -----------------------------
def bilinear_matrix(out_size, in_size):
    # align_corners=True interpolation weights (out_size, in_size)
    if in_size == 1:
        return jnp.ones((out_size, 1), jnp.float32)
    src = jnp.arange(out_size, dtype=jnp.float32) * (in_size - 1) / (out_size - 1)
    i0 = jnp.clip(jnp.floor(src).astype(jnp.int32), 0, in_size - 2)
    frac = src - i0.astype(jnp.float32)
    cols = jnp.arange(in_size)
    return ((cols[None, :] == i0[:, None]) * (1.0 - frac)[:, None]
            + (cols[None, :] == i0[:, None] + 1) * frac[:, None]).astype(jnp.float32)


def build_upsample_operator(H, W, ph, pw, seq_len):
    """(S, H*W) operator folding cls-drop, token unflatten and align_corners bilinear.
    TODO(synk): at real resolution this dense operator is too large; use the separable
    two-matmul form with the W axis tiled into 128-lane output blocks instead."""
    n_patch = ph * pw
    Wr = bilinear_matrix(H, ph)                       # (H, ph)
    Wc = bilinear_matrix(W, pw)                       # (W, pw)
    rr = jnp.arange(n_patch) // pw
    cc = jnp.arange(n_patch) % pw
    up = Wr.T[rr][:, :, None] * Wc.T[cc][:, None, :]  # (n_patch, H, W)
    up = up.reshape(n_patch, H * W)
    return jnp.concatenate([jnp.zeros((1, H * W), jnp.float32), up], axis=0)


# ------------------------------------- forward pass ------------------------------------
def video_depth_forward(params, x, skip_tmp_block=False):
    B, T, C, H, W = x.shape
    ph, pw = H // PATCH, W // PATCH
    n_patch = ph * pw
    BT = B * T
    D = EMBED_DIM
    S = n_patch + 1  # + cls token
    F_ = FEATURES

    # ---- patchify (single host relayout of the raw video) + fused embed kernel ----
    patches = (x.reshape(BT, C, ph, PATCH, pw, PATCH)
                .transpose(0, 2, 4, 1, 3, 5)
                .reshape(BT * n_patch, C * PATCH * PATCH))
    clspos = params["cls"][0] + params["pos"][0, :1, :]        # (1, D): cls + pos[0]
    postok = params["pos"][0, 1:, :]                           # (n_patch, D)
    h = embed_tokens(patches, params["patch_w"], params["patch_b"],
                     clspos, postok, BT, n_patch, S)           # (BT*S, D)

    # ---- ViT encoder: one fused kernel per block, taps kept for the DPT head ----
    taps = []
    for i, blk in enumerate(params["blocks"]):
        h = fused_block(h, blk, NUM_HEADS, S, with_mlp=True)
        if i in INTERMEDIATE_IDX:
            taps.append(h)                                     # norm applied in the head

    # ---- DPTHeadTemporal (simplified) ----
    # TODO(synk): original DPTHead uses per-level resize convs, 3x3 scratch convs and
    # RefineNet fusion at multiple resolutions; simplified to per-level 1x1s + sum since
    # the DPTHeadTemporal source was not provided.  The project@scratch folding below is
    # only valid because there is no nonlinearity between them in this simplified head.
    head = params["head"]
    wf, bf = [], []
    for i in range(4):
        pw_i = head["projects"][i]["w"].astype(jnp.float32)
        pb_i = head["projects"][i]["b"]
        sw_i = head["scratch"][i]["w"].astype(jnp.float32)
        sb_i = head["scratch"][i]["b"]
        wf.append(pw_i @ sw_i)
        bf.append(pb_i @ sw_i + sb_i)
    w_cat = jnp.concatenate(wf, axis=0).astype(jnp.bfloat16)   # (4D, FEATURES)
    b_sum = sum(bf)                                            # (1, FEATURES)
    fused = head_project(taps, w_cat, b_sum,
                         params["norm_g"], params["norm_b"])   # (BT*S, FEATURES)

    if not skip_tmp_block:
        # temporal attention over the T axis per spatial position (cls row rides along,
        # it cannot influence the patch positions).
        # TODO(synk): the two relayouts below are host-side XLA transposes; at real scale
        # gather the per-position (T, F) sequences through the BlockSpec index_map instead.
        t = fused.reshape(B, T, S, F_).transpose(0, 2, 1, 3).reshape(B * S * T, F_)
        tp = {"ln1_g": head["tln_g"], "ln1_b": head["tln_b"],
              "qkv_w": head["tattn"]["qkv_w"], "qkv_b": head["tattn"]["qkv_b"],
              "proj_w": head["tattn"]["proj_w"], "proj_b": head["tattn"]["proj_b"]}
        t = fused_block(t, tp, T_HEADS, T, with_mlp=False)
        fused = t.reshape(B, S, T, F_).transpose(0, 2, 1, 3).reshape(BT * S, F_)

    # ---- output convs + F.interpolate(..., (H, W), bilinear, align_corners=True) + relu ----
    umat = build_upsample_operator(H, W, ph, pw, S)            # (S, H*W)
    up = head_output(fused, head, umat, S, BT)                 # (BT, H*W) lane-dense
    # depth.squeeze(1).unflatten(0, (B, T))
    return up.reshape(B, T, H, W)


forward_jit = jax.jit(video_depth_forward, static_argnames=("skip_tmp_block",))


# ----------------------------------- parameter init ------------------------------------
class KeyGen:
    def __init__(self, key):
        self.key = key

    def __call__(self):
        self.key, sub = jax.random.split(self.key)
        return sub


def dense(kg, fan_in, fan_out, scale=0.02, wdtype=jnp.bfloat16):
    w = (scale * jax.random.normal(kg(), (fan_in, fan_out), dtype=jnp.float32)).astype(wdtype)
    b = jnp.zeros((1, fan_out), jnp.float32)
    return w, b


def init_params(key, n_patch):
    kg = KeyGen(key)
    D = EMBED_DIM
    S = n_patch + 1
    params = {}
    params["patch_w"], params["patch_b"] = dense(kg, 3 * PATCH * PATCH, D)
    params["cls"] = 0.02 * jax.random.normal(kg(), (1, 1, D), dtype=jnp.float32)
    params["pos"] = 0.02 * jax.random.normal(kg(), (1, S, D), dtype=jnp.float32)

    blocks = []
    for _ in range(DEPTH):
        blk = {}
        blk["ln1_g"] = jnp.ones((1, D), jnp.float32)
        blk["ln1_b"] = jnp.zeros((1, D), jnp.float32)
        blk["qkv_w"], blk["qkv_b"] = dense(kg, D, 3 * D)
        blk["proj_w"], blk["proj_b"] = dense(kg, D, D)
        blk["ln2_g"] = jnp.ones((1, D), jnp.float32)
        blk["ln2_b"] = jnp.zeros((1, D), jnp.float32)
        blk["fc1_w"], blk["fc1_b"] = dense(kg, D, MLP_RATIO * D)
        blk["fc2_w"], blk["fc2_b"] = dense(kg, MLP_RATIO * D, D)
        blocks.append(blk)
    params["blocks"] = blocks
    params["norm_g"] = jnp.ones((1, D), jnp.float32)
    params["norm_b"] = jnp.zeros((1, D), jnp.float32)

    head = {}
    head["projects"], head["scratch"] = [], []
    for ci in OUT_CHANNELS:
        w, b = dense(kg, D, ci)
        head["projects"].append({"w": w, "b": b})
        w, b = dense(kg, ci, FEATURES)
        head["scratch"].append({"w": w, "b": b})
    head["tln_g"] = jnp.ones((1, FEATURES), jnp.float32)
    head["tln_b"] = jnp.zeros((1, FEATURES), jnp.float32)
    tattn = {}
    tattn["qkv_w"], tattn["qkv_b"] = dense(kg, FEATURES, 3 * FEATURES)
    tattn["proj_w"], tattn["proj_b"] = dense(kg, FEATURES, FEATURES)
    head["tattn"] = tattn
    head["out1_w"], head["out1_b"] = dense(kg, FEATURES, FEATURES // 2)
    head["out2_w"], head["out2_b"] = dense(kg, FEATURES // 2, 8)
    head["out3_w"], head["out3_b"] = dense(kg, 8, 1, wdtype=jnp.float32)
    params["head"] = head
    return params


# ---------------------------------------- main -----------------------------------------
if __name__ == "__main__":
    key = jax.random.PRNGKey(0)
    key_x, key_p = jax.random.split(key)

    B, T, C = 1, 2, 3
    H = W = 2 * PATCH  # 28 -> patch grid 2x2
    x = jax.random.normal(key_x, (B, T, C, H, W), dtype=jnp.float32)

    params = init_params(key_p, n_patch=(H // PATCH) * (W // PATCH))

    out = forward_jit(params, x, skip_tmp_block=False)
    out = jax.block_until_ready(out)
    assert out.shape == (B, T, H, W), out.shape
    assert bool(jnp.all(out >= 0.0))  # final F.relu
    print("KERNEL_OK")
</pallas_src>

<mosaic_0001>
module attributes {stable_mosaic.version = 11 : i64} {
  func.func @kernel(%arg0: i32, %arg1: memref<8x588xf32, #tpu.memory_space<vmem>>, %arg2: memref<588x32xbf16, #tpu.memory_space<vmem>>, %arg3: memref<1x32xf32, #tpu.memory_space<vmem>>, %arg4: memref<1x32xf32, #tpu.memory_space<vmem>>, %arg5: memref<4x32xf32, #tpu.memory_space<vmem>>, %arg6: memref<10x32xf32, #tpu.memory_space<vmem>>) attributes {dimension_semantics = [#tpu.dimension_semantics<parallel>], iteration_bounds = array<i64: 1>, scalar_prefetch = 0 : i64, scratch_operands = 0 : i64, tpu.core_type = #tpu.core_type<tc>, window_params = [{transform_indices = @transform_0, window_bounds = array<i64: 8, 588>}, {pipeline_mode = #tpu.pipeline_mode<synchronous>, transform_indices = @transform_1, window_bounds = array<i64: 588, 32>}, {pipeline_mode = #tpu.pipeline_mode<synchronous>, transform_indices = @transform_2, window_bounds = array<i64: 1, 32>}, {pipeline_mode = #tpu.pipeline_mode<synchronous>, transform_indices = @transform_3, window_bounds = array<i64: 1, 32>}, {pipeline_mode = #tpu.pipeline_mode<synchronous>, transform_indices = @transform_4, window_bounds = array<i64: 4, 32>}, {transform_indices = @transform_5, window_bounds = array<i64: 10, 32>}]} {
    %c0 = arith.constant 0 : index
    %c0_0 = arith.constant 0 : index
    %0 = vector.load %arg1[%c0, %c0_0] : memref<8x588xf32, #tpu.memory_space<vmem>>, vector<8x588xf32>
    %c0_1 = arith.constant 0 : index
    %c0_2 = arith.constant 0 : index
    %1 = vector.load %arg2[%c0_1, %c0_2] : memref<588x32xbf16, #tpu.memory_space<vmem>>, vector<588x32xbf16>
    %2 = arith.truncf %0 : vector<8x588xf32> to vector<8x588xbf16>
    %cst = arith.constant dense<0.000000e+00> : vector<8x32xf32>
    %3 = tpu.matmul %2, %1, %cst {dimension_numbers = #tpu.dot_dimension_numbers<[1], [0], [0], [1], [0, 0, 1, 1], [], []>} : vector<8x588xbf16>, vector<588x32xbf16>, vector<8x32xf32> -> vector<8x32xf32>
    %c0_3 = arith.constant 0 : index
    %c0_4 = arith.constant 0 : index
    %4 = vector.load %arg3[%c0_3, %c0_4] : memref<1x32xf32, #tpu.memory_space<vmem>>, vector<1x32xf32>
    %5 = vector.broadcast %4 : vector<1x32xf32> to vector<8x32xf32>
    %6 = arith.addf %3, %5 : vector<8x32xf32>
    %c0_5 = arith.constant 0 : index
    %c0_6 = arith.constant 0 : index
    %7 = vector.load %arg5[%c0_5, %c0_6] : memref<4x32xf32, #tpu.memory_space<vmem>>, vector<4x32xf32>
    %c0_7 = arith.constant 0 : index
    %c0_8 = arith.constant 0 : index
    %8 = vector.load %arg4[%c0_7, %c0_8] : memref<1x32xf32, #tpu.memory_space<vmem>>, vector<1x32xf32>
    %c0_9 = arith.constant 0 : index
    %c0_10 = arith.constant 0 : index
    %9 = vector.load %arg6[%c0_9, %c0_10] : memref<10x32xf32, #tpu.memory_space<vmem>>, vector<1x32xf32>
    tpu.vector_store %arg6[%c0_9, %c0_10], %8 {strides = array<i32>} : memref<10x32xf32, #tpu.memory_space<vmem>>, vector<1x32xf32>,
    %10 = vector.extract_strided_slice %6 {offsets = [0, 0], sizes = [4, 32], strides = [1, 1]} : vector<8x32xf32> to vector<4x32xf32>
    %11 = arith.addf %10, %7 : vector<4x32xf32>
    %c1 = arith.constant 1 : index
    %c0_11 = arith.constant 0 : index
    %12 = vector.load %arg6[%c1, %c0_11] : memref<10x32xf32, #tpu.memory_space<vmem>>, vector<4x32xf32>
    tpu.vector_store %arg6[%c1, %c0_11], %11 {strides = array<i32>} : memref<10x32xf32, #tpu.memory_space<vmem>>, vector<4x32xf32>,
    %c0_12 = arith.constant 0 : index
    %c0_13 = arith.constant 0 : index
    %13 = vector.load %arg4[%c0_12, %c0_13] : memref<1x32xf32, #tpu.memory_space<vmem>>, vector<1x32xf32>
    %c5 = arith.constant 5 : index
    %c0_14 = arith.constant 0 : index
    %14 = vector.load %arg6[%c5, %c0_14] : memref<10x32xf32, #tpu.memory_space<vmem>>, vector<1x32xf32>
    tpu.vector_store %arg6[%c5, %c0_14], %13 {strides = array<i32>} : memref<10x32xf32, #tpu.memory_space<vmem>>, vector<1x32xf32>,
    %15 = vector.extract_strided_slice %6 {offsets = [4, 0], sizes = [4, 32], strides = [1, 1]} : vector<8x32xf32> to vector<4x32xf32>
    %16 = arith.addf %15, %7 : vector<4x32xf32>
    %c6 = arith.constant 6 : index
    %c0_15 = arith.constant 0 : index
    %17 = vector.load %arg6[%c6, %c0_15] : memref<10x32xf32, #tpu.memory_space<vmem>>, vector<4x32xf32>
    tpu.vector_store %arg6[%c6, %c0_15], %16 {strides = array<i32>} : memref<10x32xf32, #tpu.memory_space<vmem>>, vector<4x32xf32>,
    return
  }
  func.func @transform_0(%arg0: i32) -> (i32, i32) {
    %c0_i32 = arith.constant 0 : i32
    %c0_i32_0 = arith.constant 0 : i32
    return %arg0, %c0_i32 : i32, i32
  }
  func.func @transform_1(%arg0: i32) -> (i32, i32) {
    %c0_i32 = arith.constant 0 : i32
    %c0_i32_0 = arith.constant 0 : i32
    %c0_i32_1 = arith.constant 0 : i32
    return %c0_i32, %c0_i32_0 : i32, i32
  }
  func.func @transform_2(%arg0: i32) -> (i32, i32) {
    %c0_i32 = arith.constant 0 : i32
    %c0_i32_0 = arith.constant 0 : i32
    %c0_i32_1 = arith.constant 0 : i32
    return %c0_i32, %c0_i32_0 : i32, i32
  }
  func.func @transform_3(%arg0: i32) -> (i32, i32) {
    %c0_i32 = arith.constant 0 : i32
    %c0_i32_0 = arith.constant 0 : i32
    %c0_i32_1 = arith.constant 0 : i32
    return %c0_i32, %c0_i32_0 : i32, i32
  }
  func.func @transform_4(%arg0: i32) -> (i32, i32) {
    %c0_i32 = arith.constant 0 : i32
    %c0_i32_0 = arith.constant 0 : i32
    %c0_i32_1 = arith.constant 0 : i32
    return %c0_i32, %c0_i32_0 : i32, i32
  }
  func.func @transform_5(%arg0: i32) -> (i32, i32) {
    %c0_i32 = arith.constant 0 : i32
    %c0_i32_0 = arith.constant 0 : i32
    return %arg0, %c0_i32 : i32, i32
  }
}

module attributes {stable_mosaic.version = 11 : i64} {
  func.func @kernel(%arg0: i32, %arg1: memref<10x32xf32, #tpu.memory_space<vmem>>, %arg2: memref<10x10xf32, #tpu.memory_space<vmem>>, %arg3: memref<1x32xf32, #tpu.memory_space<vmem>>, %arg4: memref<1x32xf32, #tpu.memory_space<vmem>>, %arg5: memref<32x96xbf16, #tpu.memory_space<vmem>>, %arg6: memref<1x96xf32, #tpu.memory_space<vmem>>, %arg7: memref<32x32xbf16, #tpu.memory_space<vmem>>, %arg8: memref<1x32xf32, #tpu.memory_space<vmem>>, %arg9: memref<1x32xf32, #tpu.memory_space<vmem>>, %arg10: memref<1x32xf32, #tpu.memory_space<vmem>>, %arg11: memref<32x128xbf16, #tpu.memory_space<vmem>>, %arg12: memref<1x128xf32, #tpu.memory_space<vmem>>, %arg13: memref<128x32xbf16, #tpu.memory_space<vmem>>, %arg14: memref<1x32xf32, #tpu.memory_space<vmem>>, %arg15: memref<10x32xf32, #tpu.memory_space<vmem>>) attributes {dimension_semantics = [#tpu.dimension_semantics<parallel>], iteration_bounds = array<i64: 1>, scalar_prefetch = 0 : i64, scratch_operands = 0 : i64, tpu.core_type = #tpu.core_type<tc>, window_params = [{transform_indices = @transform_0, window_bounds = array<i64: 10, 32>}, {pipeline_mode = #tpu.pipeline_mode<synchronous>, transform_indices = @transform_1, window_bounds = array<i64: 10, 10>}, {pipeline_mode = #tpu.pipeline_mode<synchronous>, transform_indices = @transform_2, window_bounds = array<i64: 1, 32>}, {pipeline_mode = #tpu.pipeline_mode<synchronous>, transform_indices = @transform_3, window_bounds = array<i64: 1, 32>}, {pipeline_mode = #tpu.pipeline_mode<synchronous>, transform_indices = @transform_4, window_bounds = array<i64: 32, 96>}, {pipeline_mode = #tpu.pipeline_mode<synchronous>, transform_indices = @transform_5, window_bounds = array<i64: 1, 96>}, {pipeline_mode = #tpu.pipeline_mode<synchronous>, transform_indices = @transform_6, window_bounds = array<i64: 32, 32>}, {pipeline_mode = #tpu.pipeline_mode<synchronous>, transform_indices = @transform_7, window_bounds = array<i64: 1, 32>}, {pipeline_mode = #tpu.pipeline_mode<synchronous>, transform_indices = @transform_8, window_bounds = array<i64: 1, 32>}, {pipeline_mode = #tpu.pipeline_mode<synchronous>, transform_indices = @transform_9, window_bounds = array<i64: 1, 32>}, {pipeline_mode = #tpu.pipeline_mode<synchronous>, transform_indices = @transform_10, window_bounds = array<i64: 32, 128>}, {pipeline_mode = #tpu.pipeline_mode<synchronous>, transform_indices = @transform_11, window_bounds = array<i64: 1, 128>}, {pipeline_mode = #tpu.pipeline_mode<synchronous>, transform_indices = @transform_12, window_bounds = array<i64: 128, 32>}, {pipeline_mode = #tpu.pipeline_mode<synchronous>, transform_indices = @transform_13, window_bounds = array<i64: 1, 32>}, {transform_indices = @transform_14, window_bounds = array<i64: 10, 32>}]} {
    %c0 = arith.constant 0 : index
    %c0_0 = arith.constant 0 : index
    %0 = vector.load %arg1[%c0, %c0_0] : memref<10x32xf32, #tpu.memory_space<vmem>>, vector<10x32xf32>
    %c0_1 = arith.constant 0 : index
    %c0_2 = arith.constant 0 : index
    %1 = vector.load %arg3[%c0_1, %c0_2] : memref<1x32xf32, #tpu.memory_space<vmem>>, vector<1x32xf32>
    %c0_3 = arith.constant 0 : index
    %c0_4 = arith.constant 0 : index
    %2 = vector.load %arg4[%c0_3, %c0_4] : memref<1x32xf32, #tpu.memory_space<vmem>>, vector<1x32xf32>
    %cst = arith.constant dense<0.000000e+00> : vector<10xf32>
    %3 = vector.multi_reduction <add>, %0, %cst [1] : vector<10x32xf32> to vector<10xf32>
    %4 = vector.shape_cast %3 : vector<10xf32> to vector<10x1xf32>
    %cst_5 = arith.constant 3.200000e+01 : f32
    %5 = vector.broadcast %cst_5 : f32 to vector<10x1xf32>
    %6 = arith.divf %4, %5 : vector<10x1xf32>
    %7 = vector.broadcast %6 : vector<10x1xf32> to vector<10x32xf32>
    %8 = arith.subf %0, %7 : vector<10x32xf32>
    %9 = arith.mulf %8, %8 : vector<10x32xf32>
    %cst_6 = arith.constant dense<0.000000e+00> : vector<10xf32>
    %10 = vector.multi_reduction <add>, %9, %cst_6 [1] : vector<10x32xf32> to vector<10xf32>
    %11 = vector.shape_cast %10 : vector<10xf32> to vector<10x1xf32>
    %cst_7 = arith.constant 3.200000e+01 : f32
    %12 = vector.broadcast %cst_7 : f32 to vector<10x1xf32>
    %13 = arith.divf %11, %12 : vector<10x1xf32>
    %14 = vector.broadcast %6 : vector<10x1xf32> to vector<10x32xf32>
    %15 = arith.subf %0, %14 : vector<10x32xf32>
    %cst_8 = arith.constant 9.99999997E-7 : f32
    %16 = vector.broadcast %cst_8 : f32 to vector<10x1xf32>
    %17 = arith.addf %13, %16 : vector<10x1xf32>
    %18 = math.rsqrt %17 : vector<10x1xf32>
    %19 = vector.broadcast %18 : vector<10x1xf32> to vector<10x32xf32>
    %20 = arith.mulf %15, %19 : vector<10x32xf32>
    %21 = vector.broadcast %1 : vector<1x32xf32> to vector<10x32xf32>
    %22 = arith.mulf %20, %21 : vector<10x32xf32>
    %23 = vector.broadcast %2 : vector<1x32xf32> to vector<10x32xf32>
    %24 = arith.addf %22, %23 : vector<10x32xf32>
    %c0_9 = arith.constant 0 : index
    %c0_10 = arith.constant 0 : index
    %25 = vector.load %arg5[%c0_9, %c0_10] : memref<32x96xbf16, #tpu.memory_space<vmem>>, vector<32x96xbf16>
    %26 = arith.truncf %24 : vector<10x32xf32> to vector<10x32xbf16>
    %cst_11 = arith.constant dense<0.000000e+00> : vector<10x96xf32>
    %27 = tpu.matmul %26, %25, %cst_11 {dimension_numbers = #tpu.dot_dimension_numbers<[1], [0], [0], [1], [0, 0, 1, 1], [], []>} : vector<10x32xbf16>, vector<32x96xbf16>, vector<10x96xf32> -> vector<10x96xf32>
    %c0_12 = arith.constant 0 : index
    %c0_13 = arith.constant 0 : index
    %28 = vector.load %arg6[%c0_12, %c0_13] : memref<1x96xf32, #tpu.memory_space<vmem>>, vector<1x96xf32>
    %29 = vector.broadcast %28 : vector<1x96xf32> to vector<10x96xf32>
    %30 = arith.addf %27, %29 : vector<10x96xf32>
    %c0_14 = arith.constant 0 : index
    %c0_15 = arith.constant 0 : index
    %31 = vector.load %arg2[%c0_14, %c0_15] : memref<10x10xf32, #tpu.memory_space<vmem>>, vector<10x10xf32>
    %c0_16 = arith.constant 0 : index
    %c0_17 = arith.constant 0 : index
    %32 = vector.load %arg7[%c0_16, %c0_17] : memref<32x32xbf16, #tpu.memory_space<vmem>>, vector<32x32xbf16>
    %cst_18 = arith.constant 0.000000e+00 : f32
    %33 = vector.broadcast %cst_18 : f32 to vector<10x32xf32>
    %34 = vector.extract_strided_slice %30 {offsets = [0, 0], sizes = [10, 16], strides = [1, 1]} : vector<10x96xf32> to vector<10x16xf32>
    %35 = vector.extract_strided_slice %30 {offsets = [0, 32], sizes = [10, 16], strides = [1, 1]} : vector<10x96xf32> to vector<10x16xf32>
    %36 = vector.extract_strided_slice %30 {offsets = [0, 64], sizes = [10, 16], strides = [1, 1]} : vector<10x96xf32> to vector<10x16xf32>
    %37 = arith.truncf %34 : vector<10x16xf32> to vector<10x16xbf16>
    %38 = arith.truncf %35 : vector<10x16xf32> to vector<10x16xbf16>
    %cst_19 = arith.constant dense<0.000000e+00> : vector<10x10xf32>
    %39 = tpu.matmul %37, %38, %cst_19 {dimension_numbers = #tpu.dot_dimension_numbers<[1], [1], [0], [0], [0, 0, 1, 0], [], []>} : vector<10x16xbf16>, vector<10x16xbf16>, vector<10x10xf32> -> vector<10x10xf32>
    %cst_20 = arith.constant 2.500000e-01 : f32
    %40 = vector.broadcast %cst_20 : f32 to vector<10x10xf32>
    %41 = arith.mulf %39, %40 : vector<10x10xf32>
    %42 = arith.addf %41, %31 : vector<10x10xf32>
    %cst_21 = arith.constant dense<0xFF800000> : vector<10xf32>
    %43 = vector.multi_reduction <maximumf>, %42, %cst_21 [1] : vector<10x10xf32> to vector<10xf32>
    %44 = vector.shape_cast %43 : vector<10xf32> to vector<10x1xf32>
    %45 = vector.broadcast %44 : vector<10x1xf32> to vector<10x10xf32>
    %46 = arith.subf %42, %45 : vector<10x10xf32>
    %47 = math.exp %46 : vector<10x10xf32>
    %cst_22 = arith.constant dense<0.000000e+00> : vector<10xf32>
    %48 = vector.multi_reduction <add>, %47, %cst_22 [1] : vector<10x10xf32> to vector<10xf32>
    %49 = vector.shape_cast %48 : vector<10xf32> to vector<10x1xf32>
    %50 = tpu.reciprocal %49 {approx = true} : vector<10x1xf32> -> vector<10x1xf32>
    %51 = vector.broadcast %50 : vector<10x1xf32> to vector<10x10xf32>
    %52 = arith.mulf %47, %51 : vector<10x10xf32>
    %53 = arith.truncf %52 : vector<10x10xf32> to vector<10x10xbf16>
    %54 = arith.truncf %36 : vector<10x16xf32> to vector<10x16xbf16>
    %cst_23 = arith.constant dense<0.000000e+00> : vector<10x16xf32>
    %55 = tpu.matmul %53, %54, %cst_23 {dimension_numbers = #tpu.dot_dimension_numbers<[1], [0], [0], [1], [0, 0, 1, 1], [], []>} : vector<10x10xbf16>, vector<10x16xbf16>, vector<10x16xf32> -> vector<10x16xf32>
    %56 = vector.extract_strided_slice %32 {offsets = [0, 0], sizes = [16, 32], strides = [1, 1]} : vector<32x32xbf16> to vector<16x32xbf16>
    %57 = arith.truncf %55 : vector<10x16xf32> to vector<10x16xbf16>
    %cst_24 = arith.constant dense<0.000000e+00> : vector<10x32xf32>
    %58 = tpu.matmul %57, %56, %cst_24 {dimension_numbers = #tpu.dot_dimension_numbers<[1], [0], [0], [1], [0, 0, 1, 1], [], []>} : vector<10x16xbf16>, vector<16x32xbf16>, vector<10x32xf32> -> vector<10x32xf32>
    %59 = arith.addf %33, %58 : vector<10x32xf32>
    %60 = vector.extract_strided_slice %30 {offsets = [0, 16], sizes = [10, 16], strides = [1, 1]} : vector<10x96xf32> to vector<10x16xf32>
    %61 = vector.extract_strided_slice %30 {offsets = [0, 48], sizes = [10, 16], strides = [1, 1]} : vector<10x96xf32> to vector<10x16xf32>
    %62 = vector.extract_strided_slice %30 {offsets = [0, 80], sizes = [10, 16], strides = [1, 1]} : vector<10x96xf32> to vector<10x16xf32>
    %63 = arith.truncf %60 : vector<10x16xf32> to vector<10x16xbf16>
    %64 = arith.truncf %61 : vector<10x16xf32> to vector<10x16xbf16>
    %cst_25 = arith.constant dense<0.000000e+00> : vector<10x10xf32>
    %65 = tpu.matmul %63, %64, %cst_25 {dimension_numbers = #tpu.dot_dimension_numbers<[1], [1], [0], [0], [0, 0, 1, 0], [], []>} : vector<10x16xbf16>, vector<10x16xbf16>, vector<10x10xf32> -> vector<10x10xf32>
    %cst_26 = arith.constant 2.500000e-01 : f32
    %66 = vector.broadcast %cst_26 : f32 to vector<10x10xf32>
    %67 = arith.mulf %65, %66 : vector<10x10xf32>
    %68 = arith.addf %67, %31 : vector<10x10xf32>
    %cst_27 = arith.constant dense<0xFF800000> : vector<10xf32>
    %69 = vector.multi_reduction <maximumf>, %68, %cst_27 [1] : vector<10x10xf32> to vector<10xf32>
    %70 = vector.shape_cast %69 : vector<10xf32> to vector<10x1xf32>
    %71 = vector.broadcast %70 : vector<10x1xf32> to vector<10x10xf32>
    %72 = arith.subf %68, %71 : vector<10x10xf32>
    %73 = math.exp %72 : vector<10x10xf32>
    %cst_28 = arith.constant dense<0.000000e+00> : vector<10xf32>
    %74 = vector.multi_reduction <add>, %73, %cst_28 [1] : vector<10x10xf32> to vector<10xf32>
    %75 = vector.shape_cast %74 : vector<10xf32> to vector<10x1xf32>
    %76 = tpu.reciprocal %75 {approx = true} : vector<10x1xf32> -> vector<10x1xf32>
    %77 = vector.broadcast %76 : vector<10x1xf32> to vector<10x10xf32>
    %78 = arith.mulf %73, %77 : vector<10x10xf32>
    %79 = arith.truncf %78 : vector<10x10xf32> to vector<10x10xbf16>
    %80 = arith.truncf %62 : vector<10x16xf32> to vector<10x16xbf16>
    %cst_29 = arith.constant dense<0.000000e+00> : vector<10x16xf32>
    %81 = tpu.matmul %79, %80, %cst_29 {dimension_numbers = #tpu.dot_dimension_numbers<[1], [0], [0], [1], [0, 0, 1, 1], [], []>} : vector<10x10xbf16>, vector<10x16xbf16>, vector<10x16xf32> -> vector<10x16xf32>
    %82 = vector.extract_strided_slice %32 {offsets = [16, 0], sizes = [16, 32], strides = [1, 1]} : vector<32x32xbf16> to vector<16x32xbf16>
    %83 = arith.truncf %81 : vector<10x16xf32> to vector<10x16xbf16>
    %cst_30 = arith.constant dense<0.000000e+00> : vector<10x32xf32>
    %84 = tpu.matmul %83, %82, %cst_30 {dimension_numbers = #tpu.dot_dimension_numbers<[1], [0], [0], [1], [0, 0, 1, 1], [], []>} : vector<10x16xbf16>, vector<16x32xbf16>, vector<10x32xf32> -> vector<10x32xf32>
    %85 = arith.addf %59, %84 : vector<10x32xf32>
    %86 = arith.addf %0, %85 : vector<10x32xf32>
    %c0_31 = arith.constant 0 : index
    %c0_32 = arith.constant 0 : index
    %87 = vector.load %arg8[%c0_31, %c0_32] : memref<1x32xf32, #tpu.memory_space<vmem>>, vector<1x32xf32>
    %88 = vector.broadcast %87 : vector<1x32xf32> to vector<10x32xf32>
    %89 = arith.addf %86, %88 : vector<10x32xf32>
    %c0_33 = arith.constant 0 : index
    %c0_34 = arith.constant 0 : index
    %90 = vector.load %arg9[%c0_33, %c0_34] : memref<1x32xf32, #tpu.memory_space<vmem>>, vector<1x32xf32>
    %c0_35 = arith.constant 0 : index
    %c0_36 = arith.constant 0 : index
    %91 = vector.load %arg10[%c0_35, %c0_36] : memref<1x32xf32, #tpu.memory_space<vmem>>, vector<1x32xf32>
    %cst_37 = arith.constant dense<0.000000e+00> : vector<10xf32>
    %92 = vector.multi_reduction <add>, %89, %cst_37 [1] : vector<10x32xf32> to vector<10xf32>
    %93 = vector.shape_cast %92 : vector<10xf32> to vector<10x1xf32>
    %cst_38 = arith.constant 3.200000e+01 : f32
    %94 = vector.broadcast %cst_38 : f32 to vector<10x1xf32>
    %95 = arith.divf %93, %94 : vector<10x1xf32>
    %96 = vector.broadcast %95 : vector<10x1xf32> to vector<10x32xf32>
    %97 = arith.subf %89, %96 : vector<10x32xf32>
    %98 = arith.mulf %97, %97 : vector<10x32xf32>
    %cst_39 = arith.constant dense<0.000000e+00> : vector<10xf32>
    %99 = vector.multi_reduction <add>, %98, %cst_39 [1] : vector<10x32xf32> to vector<10xf32>
    %100 = vector.shape_cast %99 : vector<10xf32> to vector<10x1xf32>
    %cst_40 = arith.constant 3.200000e+01 : f32
    %101 = vector.broadcast %cst_40 : f32 to vector<10x1xf32>
    %102 = arith.divf %100, %101 : vector<10x1xf32>
    %103 = vector.broadcast %95 : vector<10x1xf32> to vector<10x32xf32>
    %104 = arith.subf %89, %103 : vector<10x32xf32>
    %cst_41 = arith.constant 9.99999997E-7 : f32
    %105 = vector.broadcast %cst_41 : f32 to vector<10x1xf32>
    %106 = arith.addf %102, %105 : vector<10x1xf32>
    %107 = math.rsqrt %106 : vector<10x1xf32>
    %108 = vector.broadcast %107 : vector<10x1xf32> to vector<10x32xf32>
    %109 = arith.mulf %104, %108 : vector<10x32xf32>
    %110 = vector.broadcast %90 : vector<1x32xf32> to vector<10x32xf32>
    %111 = arith.mulf %109, %110 : vector<10x32xf32>
    %112 = vector.broadcast %91 : vector<1x32xf32> to vector<10x32xf32>
    %113 = arith.addf %111, %112 : vector<10x32xf32>
    %c0_42 = arith.constant 0 : index
    %c0_43 = arith.constant 0 : index
    %114 = vector.load %arg11[%c0_42, %c0_43] : memref<32x128xbf16, #tpu.memory_space<vmem>>, vector<32x128xbf16>
    %115 = arith.truncf %113 : vector<10x32xf32> to vector<10x32xbf16>
    %cst_44 = arith.constant dense<0.000000e+00> : vector<10x128xf32>
    %116 = tpu.matmul %115, %114, %cst_44 {dimension_numbers = #tpu.dot_dimension_numbers<[1], [0], [0], [1], [0, 0, 1, 1], [], []>} : vector<10x32xbf16>, vector<32x128xbf16>, vector<10x128xf32> -> vector<10x128xf32>
    %c0_45 = arith.constant 0 : index
    %c0_46 = arith.constant 0 : index
    %117 = vector.load %arg12[%c0_45, %c0_46] : memref<1x128xf32, #tpu.memory_space<vmem>>, vector<1x128xf32>
    %118 = vector.broadcast %117 : vector<1x128xf32> to vector<10x128xf32>
    %119 = arith.addf %116, %118 : vector<10x128xf32>
    %120 = arith.mulf %119, %119 : vector<10x128xf32>
    %121 = arith.mulf %119, %120 : vector<10x128xf32>
    %cst_47 = arith.constant 4.471500e-02 : f32
    %122 = vector.broadcast %cst_47 : f32 to vector<10x128xf32>
    %123 = arith.mulf %122, %121 : vector<10x128xf32>
    %124 = arith.addf %119, %123 : vector<10x128xf32>
    %cst_48 = arith.constant 0.797884583 : f32
    %125 = vector.broadcast %cst_48 : f32 to vector<10x128xf32>
    %126 = arith.mulf %125, %124 : vector<10x128xf32>
    %127 = math.tanh %126 : vector<10x128xf32>
    %cst_49 = arith.constant 1.000000e+00 : f32
    %128 = vector.broadcast %cst_49 : f32 to vector<10x128xf32>
    %129 = arith.addf %128, %127 : vector<10x128xf32>
    %cst_50 = arith.constant 5.000000e-01 : f32
    %130 = vector.broadcast %cst_50 : f32 to vector<10x128xf32>
    %131 = arith.mulf %130, %129 : vector<10x128xf32>
    %132 = arith.mulf %119, %131 : vector<10x128xf32>
    %c0_51 = arith.constant 0 : index
    %c0_52 = arith.constant 0 : index
    %133 = vector.load %arg13[%c0_51, %c0_52] : memref<128x32xbf16, #tpu.memory_space<vmem>>, vector<128x32xbf16>
    %134 = arith.truncf %132 : vector<10x128xf32> to vector<10x128xbf16>
    %cst_53 = arith.constant dense<0.000000e+00> : vector<10x32xf32>
    %135 = tpu.matmul %134, %133, %cst_53 {dimension_numbers = #tpu.dot_dimension_numbers<[1], [0], [0], [1], [0, 0, 1, 1], [], []>} : vector<10x128xbf16>, vector<128x32xbf16>, vector<10x32xf32> -> vector<10x32xf32>
    %c0_54 = arith.constant 0 : index
    %c0_55 = arith.constant 0 : index
    %136 = vector.load %arg14[%c0_54, %c0_55] : memref<1x32xf32, #tpu.memory_space<vmem>>, vector<1x32xf32>
    %137 = vector.broadcast %136 : vector<1x32xf32> to vector<10x32xf32>
    %138 = arith.addf %135, %137 : vector<10x32xf32>
    %139 = arith.addf %89, %138 : vector<10x32xf32>
    %c0_56 = arith.constant 0 : index
    %c0_57 = arith.constant 0 : index
    %140 = vector.load %arg15[%c0_56, %c0_57] : memref<10x32xf32, #tpu.memory_space<vmem>>, vector<10x32xf32>
    tpu.vector_store %arg15[%c0_56, %c0_57], %139 {strides = array<i32>} : memref<10x32xf32, #tpu.memory_space<vmem>>, vector<10x32xf32>,
    return
  }
  func.func @transform_0(%arg0: i32) -> (i32, i32) {
    %c0_i32 = arith.constant 0 : i32
    %c0_i32_0 = arith.constant 0 : i32
    return %arg0, %c0_i32 : i32, i32
  }
  func.func @transform_1(%arg0: i32) -> (i32, i32) {
    %c0_i32 = arith.constant 0 : i32
    %c0_i32_0 = arith.constant 0 : i32
    %c0_i32_1 = arith.constant 0 : i32
    return %c0_i32, %c0_i32_0 : i32, i32
  }
  func.func @transform_2(%arg0: i32) -> (i32, i32) {
    %c0_i32 = arith.constant 0 : i32
    %c0_i32_0 = arith.constant 0 : i32
    %c0_i32_1 = arith.constant 0 : i32
    return %c0_i32, %c0_i32_0 : i32, i32
  }
  func.func @transform_3(%arg0: i32) -> (i32, i32) {
    %c0_i32 = arith.constant 0 : i32
    %c0_i32_0 = arith.constant 0 : i32
    %c0_i32_1 = arith.constant 0 : i32
    return %c0_i32, %c0_i32_0 : i32, i32
  }
  func.func @transform_4(%arg0: i32) -> (i32, i32) {
    %c0_i32 = arith.constant 0 : i32
    %c0_i32_0 = arith.constant 0 : i32
    %c0_i32_1 = arith.constant 0 : i32
    return %c0_i32, %c0_i32_0 : i32, i32
  }
  func.func @transform_5(%arg0: i32) -> (i32, i32) {
    %c0_i32 = arith.constant 0 : i32
    %c0_i32_0 = arith.constant 0 : i32
    %c0_i32_1 = arith.constant 0 : i32
    return %c0_i32, %c0_i32_0 : i32, i32
  }
  func.func @transform_6(%arg0: i32) -> (i32, i32) {
    %c0_i32 = arith.constant 0 : i32
    %c0_i32_0 = arith.constant 0 : i32
    %c0_i32_1 = arith.constant 0 : i32
    return %c0_i32, %c0_i32_0 : i32, i32
  }
  func.func @transform_7(%arg0: i32) -> (i32, i32) {
    %c0_i32 = arith.constant 0 : i32
    %c0_i32_0 = arith.constant 0 : i32
    %c0_i32_1 = arith.constant 0 : i32
    return %c0_i32, %c0_i32_0 : i32, i32
  }
  func.func @transform_8(%arg0: i32) -> (i32, i32) {
    %c0_i32 = arith.constant 0 : i32
    %c0_i32_0 = arith.constant 0 : i32
    %c0_i32_1 = arith.constant 0 : i32
    return %c0_i32, %c0_i32_0 : i32, i32
  }
  func.func @transform_9(%arg0: i32) -> (i32, i32) {
    %c0_i32 = arith.constant 0 : i32
    %c0_i32_0 = arith.constant 0 : i32
    %c0_i32_1 = arith.constant 0 : i32
    return %c0_i32, %c0_i32_0 : i32, i32
  }
  func.func @transform_10(%arg0: i32) -> (i32, i32) {
    %c0_i32 = arith.constant 0 : i32
    %c0_i32_0 = arith.constant 0 : i32
    %c0_i32_1 = arith.constant 0 : i32
    return %c0_i32, %c0_i32_0 : i32, i32
  }
  func.func @transform_11(%arg0: i32) -> (i32, i32) {
    %c0_i32 = arith.constant 0 : i32
    %c0_i32_0 = arith.constant 0 : i32
    %c0_i32_1 = arith.constant 0 : i32
    return %c0_i32, %c0_i32_0 : i32, i32
  }
  func.func @transform_12(%arg0: i32) -> (i32, i32) {
    %c0_i32 = arith.constant 0 : i32
    %c0_i32_0 = arith.constant 0 : i32
    %c0_i32_1 = arith.constant 0 : i32
    return %c0_i32, %c0_i32_0 : i32, i32
  }
  func.func @transform_13(%arg0: i32) -> (i32, i32) {
    %c0_i32 = arith.constant 0 : i32
    %c0_i32_0 = arith.constant 0 : i32
    %c0_i32_1 = arith.constant 0 : i32
    return %c0_i32, %c0_i32_0 : i32, i32
  }
  func.func @transform_14(%arg0: i32) -> (i32, i32) {
    %c0_i32 = arith.constant 0 : i32
    %c0_i32_0 = arith.constant 0 : i32
    return %arg0, %c0_i32 : i32, i32
  }
}

module attributes {stable_mosaic.version = 11 : i64} {
  func.func @_head_project_kernel(%arg0: i32, %arg1: memref<10x32xf32, #tpu.memory_space<vmem>>, %arg2: memref<10x32xf32, #tpu.memory_space<vmem>>, %arg3: memref<10x32xf32, #tpu.memory_space<vmem>>, %arg4: memref<10x32xf32, #tpu.memory_space<vmem>>, %arg5: memref<1x32xf32, #tpu.memory_space<vmem>>, %arg6: memref<1x32xf32, #tpu.memory_space<vmem>>, %arg7: memref<128x16xbf16, #tpu.memory_space<vmem>>, %arg8: memref<1x16xf32, #tpu.memory_space<vmem>>, %arg9: memref<10x16xf32, #tpu.memory_space<vmem>>) attributes {dimension_semantics = [#tpu.dimension_semantics<parallel>], iteration_bounds = array<i64: 1>, scalar_prefetch = 0 : i64, scratch_operands = 0 : i64, tpu.core_type = #tpu.core_type<tc>, window_params = [{transform_indices = @transform_0, window_bounds = array<i64: 10, 32>}, {transform_indices = @transform_1, window_bounds = array<i64: 10, 32>}, {transform_indices = @transform_2, window_bounds = array<i64: 10, 32>}, {transform_indices = @transform_3, window_bounds = array<i64: 10, 32>}, {pipeline_mode = #tpu.pipeline_mode<synchronous>, transform_indices = @transform_4, window_bounds = array<i64: 1, 32>}, {pipeline_mode = #tpu.pipeline_mode<synchronous>, transform_indices = @transform_5, window_bounds = array<i64: 1, 32>}, {pipeline_mode = #tpu.pipeline_mode<synchronous>, transform_indices = @transform_6, window_bounds = array<i64: 128, 16>}, {pipeline_mode = #tpu.pipeline_mode<synchronous>, transform_indices = @transform_7, window_bounds = array<i64: 1, 16>}, {transform_indices = @transform_8, window_bounds = array<i64: 10, 16>}]} {
    %c0 = arith.constant 0 : index
    %c0_0 = arith.constant 0 : index
    %0 = vector.load %arg5[%c0, %c0_0] : memref<1x32xf32, #tpu.memory_space<vmem>>, vector<1x32xf32>
    %c0_1 = arith.constant 0 : index
    %c0_2 = arith.constant 0 : index
    %1 = vector.load %arg6[%c0_1, %c0_2] : memref<1x32xf32, #tpu.memory_space<vmem>>, vector<1x32xf32>
    %c0_3 = arith.constant 0 : index
    %c0_4 = arith.constant 0 : index
    %2 = vector.load %arg1[%c0_3, %c0_4] : memref<10x32xf32, #tpu.memory_space<vmem>>, vector<10x32xf32>
    %cst = arith.constant dense<0.000000e+00> : vector<10xf32>
    %3 = vector.multi_reduction <add>, %2, %cst [1] : vector<10x32xf32> to vector<10xf32>
    %4 = vector.shape_cast %3 : vector<10xf32> to vector<10x1xf32>
    %cst_5 = arith.constant 3.200000e+01 : f32
    %5 = vector.broadcast %cst_5 : f32 to vector<10x1xf32>
    %6 = arith.divf %4, %5 : vector<10x1xf32>
    %7 = vector.broadcast %6 : vector<10x1xf32> to vector<10x32xf32>
    %8 = arith.subf %2, %7 : vector<10x32xf32>
    %9 = arith.mulf %8, %8 : vector<10x32xf32>
    %cst_6 = arith.constant dense<0.000000e+00> : vector<10xf32>
    %10 = vector.multi_reduction <add>, %9, %cst_6 [1] : vector<10x32xf32> to vector<10xf32>
    %11 = vector.shape_cast %10 : vector<10xf32> to vector<10x1xf32>
    %cst_7 = arith.constant 3.200000e+01 : f32
    %12 = vector.broadcast %cst_7 : f32 to vector<10x1xf32>
    %13 = arith.divf %11, %12 : vector<10x1xf32>
    %14 = vector.broadcast %6 : vector<10x1xf32> to vector<10x32xf32>
    %15 = arith.subf %2, %14 : vector<10x32xf32>
    %cst_8 = arith.constant 9.99999997E-7 : f32
    %16 = vector.broadcast %cst_8 : f32 to vector<10x1xf32>
    %17 = arith.addf %13, %16 : vector<10x1xf32>
    %18 = math.rsqrt %17 : vector<10x1xf32>
    %19 = vector.broadcast %18 : vector<10x1xf32> to vector<10x32xf32>
    %20 = arith.mulf %15, %19 : vector<10x32xf32>
    %21 = vector.broadcast %0 : vector<1x32xf32> to vector<10x32xf32>
    %22 = arith.mulf %20, %21 : vector<10x32xf32>
    %23 = vector.broadcast %1 : vector<1x32xf32> to vector<10x32xf32>
    %24 = arith.addf %22, %23 : vector<10x32xf32>
    %c0_9 = arith.constant 0 : index
    %c0_10 = arith.constant 0 : index
    %25 = vector.load %arg2[%c0_9, %c0_10] : memref<10x32xf32, #tpu.memory_space<vmem>>, vector<10x32xf32>
    %cst_11 = arith.constant dense<0.000000e+00> : vector<10xf32>
    %26 = vector.multi_reduction <add>, %25, %cst_11 [1] : vector<10x32xf32> to vector<10xf32>
    %27 = vector.shape_cast %26 : vector<10xf32> to vector<10x1xf32>
    %cst_12 = arith.constant 3.200000e+01 : f32
    %28 = vector.broadcast %cst_12 : f32 to vector<10x1xf32>
    %29 = arith.divf %27, %28 : vector<10x1xf32>
    %30 = vector.broadcast %29 : vector<10x1xf32> to vector<10x32xf32>
    %31 = arith.subf %25, %30 : vector<10x32xf32>
    %32 = arith.mulf %31, %31 : vector<10x32xf32>
    %cst_13 = arith.constant dense<0.000000e+00> : vector<10xf32>
    %33 = vector.multi_reduction <add>, %32, %cst_13 [1] : vector<10x32xf32> to vector<10xf32>
    %34 = vector.shape_cast %33 : vector<10xf32> to vector<10x1xf32>
    %cst_14 = arith.constant 3.200000e+01 : f32
    %35 = vector.broadcast %cst_14 : f32 to vector<10x1xf32>
    %36 = arith.divf %34, %35 : vector<10x1xf32>
    %37 = vector.broadcast %29 : vector<10x1xf32> to vector<10x32xf32>
    %38 = arith.subf %25, %37 : vector<10x32xf32>
    %cst_15 = arith.constant 9.99999997E-7 : f32
    %39 = vector.broadcast %cst_15 : f32 to vector<10x1xf32>
    %40 = arith.addf %36, %39 : vector<10x1xf32>
    %41 = math.rsqrt %40 : vector<10x1xf32>
    %42 = vector.broadcast %41 : vector<10x1xf32> to vector<10x32xf32>
    %43 = arith.mulf %38, %42 : vector<10x32xf32>
    %44 = vector.broadcast %0 : vector<1x32xf32> to vector<10x32xf32>
    %45 = arith.mulf %43, %44 : vector<10x32xf32>
    %46 = vector.broadcast %1 : vector<1x32xf32> to vector<10x32xf32>
    %47 = arith.addf %45, %46 : vector<10x32xf32>
    %c0_16 = arith.constant 0 : index
    %c0_17 = arith.constant 0 : index
    %48 = vector.load %arg3[%c0_16, %c0_17] : memref<10x32xf32, #tpu.memory_space<vmem>>, vector<10x32xf32>
    %cst_18 = arith.constant dense<0.000000e+00> : vector<10xf32>
    %49 = vector.multi_reduction <add>, %48, %cst_18 [1] : vector<10x32xf32> to vector<10xf32>
    %50 = vector.shape_cast %49 : vector<10xf32> to vector<10x1xf32>
    %cst_19 = arith.constant 3.200000e+01 : f32
    %51 = vector.broadcast %cst_19 : f32 to vector<10x1xf32>
    %52 = arith.divf %50, %51 : vector<10x1xf32>
    %53 = vector.broadcast %52 : vector<10x1xf32> to vector<10x32xf32>
    %54 = arith.subf %48, %53 : vector<10x32xf32>
    %55 = arith.mulf %54, %54 : vector<10x32xf32>
    %cst_20 = arith.constant dense<0.000000e+00> : vector<10xf32>
    %56 = vector.multi_reduction <add>, %55, %cst_20 [1] : vector<10x32xf32> to vector<10xf32>
    %57 = vector.shape_cast %56 : vector<10xf32> to vector<10x1xf32>
    %cst_21 = arith.constant 3.200000e+01 : f32
    %58 = vector.broadcast %cst_21 : f32 to vector<10x1xf32>
    %59 = arith.divf %57, %58 : vector<10x1xf32>
    %60 = vector.broadcast %52 : vector<10x1xf32> to vector<10x32xf32>
    %61 = arith.subf %48, %60 : vector<10x32xf32>
    %cst_22 = arith.constant 9.99999997E-7 : f32
    %62 = vector.broadcast %cst_22 : f32 to vector<10x1xf32>
    %63 = arith.addf %59, %62 : vector<10x1xf32>
    %64 = math.rsqrt %63 : vector<10x1xf32>
    %65 = vector.broadcast %64 : vector<10x1xf32> to vector<10x32xf32>
    %66 = arith.mulf %61, %65 : vector<10x32xf32>
    %67 = vector.broadcast %0 : vector<1x32xf32> to vector<10x32xf32>
    %68 = arith.mulf %66, %67 : vector<10x32xf32>
    %69 = vector.broadcast %1 : vector<1x32xf32> to vector<10x32xf32>
    %70 = arith.addf %68, %69 : vector<10x32xf32>
    %c0_23 = arith.constant 0 : index
    %c0_24 = arith.constant 0 : index
    %71 = vector.load %arg4[%c0_23, %c0_24] : memref<10x32xf32, #tpu.memory_space<vmem>>, vector<10x32xf32>
    %cst_25 = arith.constant dense<0.000000e+00> : vector<10xf32>
    %72 = vector.multi_reduction <add>, %71, %cst_25 [1] : vector<10x32xf32> to vector<10xf32>
    %73 = vector.shape_cast %72 : vector<10xf32> to vector<10x1xf32>
    %cst_26 = arith.constant 3.200000e+01 : f32
    %74 = vector.broadcast %cst_26 : f32 to vector<10x1xf32>
    %75 = arith.divf %73, %74 : vector<10x1xf32>
    %76 = vector.broadcast %75 : vector<10x1xf32> to vector<10x32xf32>
    %77 = arith.subf %71, %76 : vector<10x32xf32>
    %78 = arith.mulf %77, %77 : vector<10x32xf32>
    %cst_27 = arith.constant dense<0.000000e+00> : vector<10xf32>
    %79 = vector.multi_reduction <add>, %78, %cst_27 [1] : vector<10x32xf32> to vector<10xf32>
    %80 = vector.shape_cast %79 : vector<10xf32> to vector<10x1xf32>
    %cst_28 = arith.constant 3.200000e+01 : f32
    %81 = vector.broadcast %cst_28 : f32 to vector<10x1xf32>
    %82 = arith.divf %80, %81 : vector<10x1xf32>
    %83 = vector.broadcast %75 : vector<10x1xf32> to vector<10x32xf32>
    %84 = arith.subf %71, %83 : vector<10x32xf32>
    %cst_29 = arith.constant 9.99999997E-7 : f32
    %85 = vector.broadcast %cst_29 : f32 to vector<10x1xf32>
    %86 = arith.addf %82, %85 : vector<10x1xf32>
    %87 = math.rsqrt %86 : vector<10x1xf32>
    %88 = vector.broadcast %87 : vector<10x1xf32> to vector<10x32xf32>
    %89 = arith.mulf %84, %88 : vector<10x32xf32>
    %90 = vector.broadcast %0 : vector<1x32xf32> to vector<10x32xf32>
    %91 = arith.mulf %89, %90 : vector<10x32xf32>
    %92 = vector.broadcast %1 : vector<1x32xf32> to vector<10x32xf32>
    %93 = arith.addf %91, %92 : vector<10x32xf32>
    %94 = tpu.concatenate %24, %47, %70, %93 in 1 : vector<10x32xf32>, vector<10x32xf32>, vector<10x32xf32>, vector<10x32xf32> -> vector<10x128xf32>
    %c0_30 = arith.constant 0 : index
    %c0_31 = arith.constant 0 : index
    %95 = vector.load %arg7[%c0_30, %c0_31] : memref<128x16xbf16, #tpu.memory_space<vmem>>, vector<128x16xbf16>
    %96 = arith.truncf %94 : vector<10x128xf32> to vector<10x128xbf16>
    %cst_32 = arith.constant dense<0.000000e+00> : vector<10x16xf32>
    %97 = tpu.matmul %96, %95, %cst_32 {dimension_numbers = #tpu.dot_dimension_numbers<[1], [0], [0], [1], [0, 0, 1, 1], [], []>} : vector<10x128xbf16>, vector<128x16xbf16>, vector<10x16xf32> -> vector<10x16xf32>
    %c0_33 = arith.constant 0 : index
    %c0_34 = arith.constant 0 : index
    %98 = vector.load %arg8[%c0_33, %c0_34] : memref<1x16xf32, #tpu.memory_space<vmem>>, vector<1x16xf32>
    %99 = vector.broadcast %98 : vector<1x16xf32> to vector<10x16xf32>
    %100 = arith.addf %97, %99 : vector<10x16xf32>
    %c0_35 = arith.constant 0 : index
    %c0_36 = arith.constant 0 : index
    %101 = vector.load %arg9[%c0_35, %c0_36] : memref<10x16xf32, #tpu.memory_space<vmem>>, vector<10x16xf32>
    tpu.vector_store %arg9[%c0_35, %c0_36], %100 {strides = array<i32>} : memref<10x16xf32, #tpu.memory_space<vmem>>, vector<10x16xf32>,
    return
  }
  func.func @transform_0(%arg0: i32) -> (i32, i32) {
    %c0_i32 = arith.constant 0 : i32
    %c0_i32_0 = arith.constant 0 : i32
    return %arg0, %c0_i32 : i32, i32
  }
  func.func @transform_1(%arg0: i32) -> (i32, i32) {
    %c0_i32 = arith.constant 0 : i32
    %c0_i32_0 = arith.constant 0 : i32
    return %arg0, %c0_i32 : i32, i32
  }
  func.func @transform_2(%arg0: i32) -> (i32, i32) {
    %c0_i32 = arith.constant 0 : i32
    %c0_i32_0 = arith.constant 0 : i32
    return %arg0, %c0_i32 : i32, i32
  }
  func.func @transform_3(%arg0: i32) -> (i32, i32) {
    %c0_i32 = arith.constant 0 : i32
    %c0_i32_0 = arith.constant 0 : i32
    return %arg0, %c0_i32 : i32, i32
  }
  func.func @transform_4(%arg0: i32) -> (i32, i32) {
    %c0_i32 = arith.constant 0 : i32
    %c0_i32_0 = arith.constant 0 : i32
    %c0_i32_1 = arith.constant 0 : i32
    return %c0_i32, %c0_i32_0 : i32, i32
  }
  func.func @transform_5(%arg0: i32) -> (i32, i32) {
    %c0_i32 = arith.constant 0 : i32
    %c0_i32_0 = arith.constant 0 : i32
    %c0_i32_1 = arith.constant 0 : i32
    return %c0_i32, %c0_i32_0 : i32, i32
  }
  func.func @transform_6(%arg0: i32) -> (i32, i32) {
    %c0_i32 = arith.constant 0 : i32
    %c0_i32_0 = arith.constant 0 : i32
    %c0_i32_1 = arith.constant 0 : i32
    return %c0_i32, %c0_i32_0 : i32, i32
  }
  func.func @transform_7(%arg0: i32) -> (i32, i32) {
    %c0_i32 = arith.constant 0 : i32
    %c0_i32_0 = arith.constant 0 : i32
    %c0_i32_1 = arith.constant 0 : i32
    return %c0_i32, %c0_i32_0 : i32, i32
  }
  func.func @transform_8(%arg0: i32) -> (i32, i32) {
    %c0_i32 = arith.constant 0 : i32
    %c0_i32_0 = arith.constant 0 : i32
    return %arg0, %c0_i32 : i32, i32
  }
}

module attributes {stable_mosaic.version = 11 : i64} {
  func.func @kernel(%arg0: i32, %arg1: memref<10x16xf32, #tpu.memory_space<vmem>>, %arg2: memref<10x10xf32, #tpu.memory_space<vmem>>, %arg3: memref<1x16xf32, #tpu.memory_space<vmem>>, %arg4: memref<1x16xf32, #tpu.memory_space<vmem>>, %arg5: memref<16x48xbf16, #tpu.memory_space<vmem>>, %arg6: memref<1x48xf32, #tpu.memory_space<vmem>>, %arg7: memref<16x16xbf16, #tpu.memory_space<vmem>>, %arg8: memref<1x16xf32, #tpu.memory_space<vmem>>, %arg9: memref<10x16xf32, #tpu.memory_space<vmem>>) attributes {dimension_semantics = [#tpu.dimension_semantics<parallel>], iteration_bounds = array<i64: 1>, scalar_prefetch = 0 : i64, scratch_operands = 0 : i64, tpu.core_type = #tpu.core_type<tc>, window_params = [{transform_indices = @transform_0, window_bounds = array<i64: 10, 16>}, {pipeline_mode = #tpu.pipeline_mode<synchronous>, transform_indices = @transform_1, window_bounds = array<i64: 10, 10>}, {pipeline_mode = #tpu.pipeline_mode<synchronous>, transform_indices = @transform_2, window_bounds = array<i64: 1, 16>}, {pipeline_mode = #tpu.pipeline_mode<synchronous>, transform_indices = @transform_3, window_bounds = array<i64: 1, 16>}, {pipeline_mode = #tpu.pipeline_mode<synchronous>, transform_indices = @transform_4, window_bounds = array<i64: 16, 48>}, {pipeline_mode = #tpu.pipeline_mode<synchronous>, transform_indices = @transform_5, window_bounds = array<i64: 1, 48>}, {pipeline_mode = #tpu.pipeline_mode<synchronous>, transform_indices = @transform_6, window_bounds = array<i64: 16, 16>}, {pipeline_mode = #tpu.pipeline_mode<synchronous>, transform_indices = @transform_7, window_bounds = array<i64: 1, 16>}, {transform_indices = @transform_8, window_bounds = array<i64: 10, 16>}]} {
    %c0 = arith.constant 0 : index
    %c0_0 = arith.constant 0 : index
    %0 = vector.load %arg1[%c0, %c0_0] : memref<10x16xf32, #tpu.memory_space<vmem>>, vector<10x16xf32>
    %c0_1 = arith.constant 0 : index
    %c0_2 = arith.constant 0 : index
    %1 = vector.load %arg3[%c0_1, %c0_2] : memref<1x16xf32, #tpu.memory_space<vmem>>, vector<1x16xf32>
    %c0_3 = arith.constant 0 : index
    %c0_4 = arith.constant 0 : index
    %2 = vector.load %arg4[%c0_3, %c0_4] : memref<1x16xf32, #tpu.memory_space<vmem>>, vector<1x16xf32>
    %cst = arith.constant dense<0.000000e+00> : vector<10xf32>
    %3 = vector.multi_reduction <add>, %0, %cst [1] : vector<10x16xf32> to vector<10xf32>
    %4 = vector.shape_cast %3 : vector<10xf32> to vector<10x1xf32>
    %cst_5 = arith.constant 1.600000e+01 : f32
    %5 = vector.broadcast %cst_5 : f32 to vector<10x1xf32>
    %6 = arith.divf %4, %5 : vector<10x1xf32>
    %7 = vector.broadcast %6 : vector<10x1xf32> to vector<10x16xf32>
    %8 = arith.subf %0, %7 : vector<10x16xf32>
    %9 = arith.mulf %8, %8 : vector<10x16xf32>
    %cst_6 = arith.constant dense<0.000000e+00> : vector<10xf32>
    %10 = vector.multi_reduction <add>, %9, %cst_6 [1] : vector<10x16xf32> to vector<10xf32>
    %11 = vector.shape_cast %10 : vector<10xf32> to vector<10x1xf32>
    %cst_7 = arith.constant 1.600000e+01 : f32
    %12 = vector.broadcast %cst_7 : f32 to vector<10x1xf32>
    %13 = arith.divf %11, %12 : vector<10x1xf32>
    %14 = vector.broadcast %6 : vector<10x1xf32> to vector<10x16xf32>
    %15 = arith.subf %0, %14 : vector<10x16xf32>
    %cst_8 = arith.constant 9.99999997E-7 : f32
    %16 = vector.broadcast %cst_8 : f32 to vector<10x1xf32>
    %17 = arith.addf %13, %16 : vector<10x1xf32>
    %18 = math.rsqrt %17 : vector<10x1xf32>
    %19 = vector.broadcast %18 : vector<10x1xf32> to vector<10x16xf32>
    %20 = arith.mulf %15, %19 : vector<10x16xf32>
    %21 = vector.broadcast %1 : vector<1x16xf32> to vector<10x16xf32>
    %22 = arith.mulf %20, %21 : vector<10x16xf32>
    %23 = vector.broadcast %2 : vector<1x16xf32> to vector<10x16xf32>
    %24 = arith.addf %22, %23 : vector<10x16xf32>
    %c0_9 = arith.constant 0 : index
    %c0_10 = arith.constant 0 : index
    %25 = vector.load %arg5[%c0_9, %c0_10] : memref<16x48xbf16, #tpu.memory_space<vmem>>, vector<16x48xbf16>
    %26 = arith.truncf %24 : vector<10x16xf32> to vector<10x16xbf16>
    %cst_11 = arith.constant dense<0.000000e+00> : vector<10x48xf32>
    %27 = tpu.matmul %26, %25, %cst_11 {dimension_numbers = #tpu.dot_dimension_numbers<[1], [0], [0], [1], [0, 0, 1, 1], [], []>} : vector<10x16xbf16>, vector<16x48xbf16>, vector<10x48xf32> -> vector<10x48xf32>
    %c0_12 = arith.constant 0 : index
    %c0_13 = arith.constant 0 : index
    %28 = vector.load %arg6[%c0_12, %c0_13] : memref<1x48xf32, #tpu.memory_space<vmem>>, vector<1x48xf32>
    %29 = vector.broadcast %28 : vector<1x48xf32> to vector<10x48xf32>
    %30 = arith.addf %27, %29 : vector<10x48xf32>
    %c0_14 = arith.constant 0 : index
    %c0_15 = arith.constant 0 : index
    %31 = vector.load %arg2[%c0_14, %c0_15] : memref<10x10xf32, #tpu.memory_space<vmem>>, vector<10x10xf32>
    %c0_16 = arith.constant 0 : index
    %c0_17 = arith.constant 0 : index
    %32 = vector.load %arg7[%c0_16, %c0_17] : memref<16x16xbf16, #tpu.memory_space<vmem>>, vector<16x16xbf16>
    %cst_18 = arith.constant 0.000000e+00 : f32
    %33 = vector.broadcast %cst_18 : f32 to vector<10x16xf32>
    %34 = vector.extract_strided_slice %30 {offsets = [0, 0], sizes = [10, 8], strides = [1, 1]} : vector<10x48xf32> to vector<10x8xf32>
    %35 = vector.extract_strided_slice %30 {offsets = [0, 16], sizes = [10, 8], strides = [1, 1]} : vector<10x48xf32> to vector<10x8xf32>
    %36 = vector.extract_strided_slice %30 {offsets = [0, 32], sizes = [10, 8], strides = [1, 1]} : vector<10x48xf32> to vector<10x8xf32>
    %37 = arith.truncf %34 : vector<10x8xf32> to vector<10x8xbf16>
    %38 = arith.truncf %35 : vector<10x8xf32> to vector<10x8xbf16>
    %cst_19 = arith.constant dense<0.000000e+00> : vector<10x10xf32>
    %39 = tpu.matmul %37, %38, %cst_19 {dimension_numbers = #tpu.dot_dimension_numbers<[1], [1], [0], [0], [0, 0, 1, 0], [], []>} : vector<10x8xbf16>, vector<10x8xbf16>, vector<10x10xf32> -> vector<10x10xf32>
    %cst_20 = arith.constant 0.353553385 : f32
    %40 = vector.broadcast %cst_20 : f32 to vector<10x10xf32>
    %41 = arith.mulf %39, %40 : vector<10x10xf32>
    %42 = arith.addf %41, %31 : vector<10x10xf32>
    %cst_21 = arith.constant dense<0xFF800000> : vector<10xf32>
    %43 = vector.multi_reduction <maximumf>, %42, %cst_21 [1] : vector<10x10xf32> to vector<10xf32>
    %44 = vector.shape_cast %43 : vector<10xf32> to vector<10x1xf32>
    %45 = vector.broadcast %44 : vector<10x1xf32> to vector<10x10xf32>
    %46 = arith.subf %42, %45 : vector<10x10xf32>
    %47 = math.exp %46 : vector<10x10xf32>
    %cst_22 = arith.constant dense<0.000000e+00> : vector<10xf32>
    %48 = vector.multi_reduction <add>, %47, %cst_22 [1] : vector<10x10xf32> to vector<10xf32>
    %49 = vector.shape_cast %48 : vector<10xf32> to vector<10x1xf32>
    %50 = tpu.reciprocal %49 {approx = true} : vector<10x1xf32> -> vector<10x1xf32>
    %51 = vector.broadcast %50 : vector<10x1xf32> to vector<10x10xf32>
    %52 = arith.mulf %47, %51 : vector<10x10xf32>
    %53 = arith.truncf %52 : vector<10x10xf32> to vector<10x10xbf16>
    %54 = arith.truncf %36 : vector<10x8xf32> to vector<10x8xbf16>
    %cst_23 = arith.constant dense<0.000000e+00> : vector<10x8xf32>
    %55 = tpu.matmul %53, %54, %cst_23 {dimension_numbers = #tpu.dot_dimension_numbers<[1], [0], [0], [1], [0, 0, 1, 1], [], []>} : vector<10x10xbf16>, vector<10x8xbf16>, vector<10x8xf32> -> vector<10x8xf32>
    %56 = vector.extract_strided_slice %32 {offsets = [0, 0], sizes = [8, 16], strides = [1, 1]} : vector<16x16xbf16> to vector<8x16xbf16>
    %57 = arith.truncf %55 : vector<10x8xf32> to vector<10x8xbf16>
    %cst_24 = arith.constant dense<0.000000e+00> : vector<10x16xf32>
    %58 = tpu.matmul %57, %56, %cst_24 {dimension_numbers = #tpu.dot_dimension_numbers<[1], [0], [0], [1], [0, 0, 1, 1], [], []>} : vector<10x8xbf16>, vector<8x16xbf16>, vector<10x16xf32> -> vector<10x16xf32>
    %59 = arith.addf %33, %58 : vector<10x16xf32>
    %60 = vector.extract_strided_slice %30 {offsets = [0, 8], sizes = [10, 8], strides = [1, 1]} : vector<10x48xf32> to vector<10x8xf32>
    %61 = vector.extract_strided_slice %30 {offsets = [0, 24], sizes = [10, 8], strides = [1, 1]} : vector<10x48xf32> to vector<10x8xf32>
    %62 = vector.extract_strided_slice %30 {offsets = [0, 40], sizes = [10, 8], strides = [1, 1]} : vector<10x48xf32> to vector<10x8xf32>
    %63 = arith.truncf %60 : vector<10x8xf32> to vector<10x8xbf16>
    %64 = arith.truncf %61 : vector<10x8xf32> to vector<10x8xbf16>
    %cst_25 = arith.constant dense<0.000000e+00> : vector<10x10xf32>
    %65 = tpu.matmul %63, %64, %cst_25 {dimension_numbers = #tpu.dot_dimension_numbers<[1], [1], [0], [0], [0, 0, 1, 0], [], []>} : vector<10x8xbf16>, vector<10x8xbf16>, vector<10x10xf32> -> vector<10x10xf32>
    %cst_26 = arith.constant 0.353553385 : f32
    %66 = vector.broadcast %cst_26 : f32 to vector<10x10xf32>
    %67 = arith.mulf %65, %66 : vector<10x10xf32>
    %68 = arith.addf %67, %31 : vector<10x10xf32>
    %cst_27 = arith.constant dense<0xFF800000> : vector<10xf32>
    %69 = vector.multi_reduction <maximumf>, %68, %cst_27 [1] : vector<10x10xf32> to vector<10xf32>
    %70 = vector.shape_cast %69 : vector<10xf32> to vector<10x1xf32>
    %71 = vector.broadcast %70 : vector<10x1xf32> to vector<10x10xf32>
    %72 = arith.subf %68, %71 : vector<10x10xf32>
    %73 = math.exp %72 : vector<10x10xf32>
    %cst_28 = arith.constant dense<0.000000e+00> : vector<10xf32>
    %74 = vector.multi_reduction <add>, %73, %cst_28 [1] : vector<10x10xf32> to vector<10xf32>
    %75 = vector.shape_cast %74 : vector<10xf32> to vector<10x1xf32>
    %76 = tpu.reciprocal %75 {approx = true} : vector<10x1xf32> -> vector<10x1xf32>
    %77 = vector.broadcast %76 : vector<10x1xf32> to vector<10x10xf32>
    %78 = arith.mulf %73, %77 : vector<10x10xf32>
    %79 = arith.truncf %78 : vector<10x10xf32> to vector<10x10xbf16>
    %80 = arith.truncf %62 : vector<10x8xf32> to vector<10x8xbf16>
    %cst_29 = arith.constant dense<0.000000e+00> : vector<10x8xf32>
    %81 = tpu.matmul %79, %80, %cst_29 {dimension_numbers = #tpu.dot_dimension_numbers<[1], [0], [0], [1], [0, 0, 1, 1], [], []>} : vector<10x10xbf16>, vector<10x8xbf16>, vector<10x8xf32> -> vector<10x8xf32>
    %82 = vector.extract_strided_slice %32 {offsets = [8, 0], sizes = [8, 16], strides = [1, 1]} : vector<16x16xbf16> to vector<8x16xbf16>
    %83 = arith.truncf %81 : vector<10x8xf32> to vector<10x8xbf16>
    %cst_30 = arith.constant dense<0.000000e+00> : vector<10x16xf32>
    %84 = tpu.matmul %83, %82, %cst_30 {dimension_numbers = #tpu.dot_dimension_numbers<[1], [0], [0], [1], [0, 0, 1, 1], [], []>} : vector<10x8xbf16>, vector<8x16xbf16>, vector<10x16xf32> -> vector<10x16xf32>
    %85 = arith.addf %59, %84 : vector<10x16xf32>
    %86 = arith.addf %0, %85 : vector<10x16xf32>
    %c0_31 = arith.constant 0 : index
    %c0_32 = arith.constant 0 : index
    %87 = vector.load %arg8[%c0_31, %c0_32] : memref<1x16xf32, #tpu.memory_space<vmem>>, vector<1x16xf32>
    %88 = vector.broadcast %87 : vector<1x16xf32> to vector<10x16xf32>
    %89 = arith.addf %86, %88 : vector<10x16xf32>
    %c0_33 = arith.constant 0 : index
    %c0_34 = arith.constant 0 : index
    %90 = vector.load %arg9[%c0_33, %c0_34] : memref<10x16xf32, #tpu.memory_space<vmem>>, vector<10x16xf32>
    tpu.vector_store %arg9[%c0_33, %c0_34], %89 {strides = array<i32>} : memref<10x16xf32, #tpu.memory_space<vmem>>, vector<10x16xf32>,
    return
  }
  func.func @transform_0(%arg0: i32) -> (i32, i32) {
    %c0_i32 = arith.constant 0 : i32
    %c0_i32_0 = arith.constant 0 : i32
    return %arg0, %c0_i32 : i32, i32
  }
  func.func @transform_1(%arg0: i32) -> (i32, i32) {
    %c0_i32 = arith.constant 0 : i32
    %c0_i32_0 = arith.constant 0 : i32
    %c0_i32_1 = arith.constant 0 : i32
    return %c0_i32, %c0_i32_0 : i32, i32
  }
  func.func @transform_2(%arg0: i32) -> (i32, i32) {
    %c0_i32 = arith.constant 0 : i32
    %c0_i32_0 = arith.constant 0 : i32
    %c0_i32_1 = arith.constant 0 : i32
    return %c0_i32, %c0_i32_0 : i32, i32
  }
  func.func @transform_3(%arg0: i32) -> (i32, i32) {
    %c0_i32 = arith.constant 0 : i32
    %c0_i32_0 = arith.constant 0 : i32
    %c0_i32_1 = arith.constant 0 : i32
    return %c0_i32, %c0_i32_0 : i32, i32
  }
  func.func @transform_4(%arg0: i32) -> (i32, i32) {
    %c0_i32 = arith.constant 0 : i32
    %c0_i32_0 = arith.constant 0 : i32
    %c0_i32_1 = arith.constant 0 : i32
    return %c0_i32, %c0_i32_0 : i32, i32
  }
  func.func @transform_5(%arg0: i32) -> (i32, i32) {
    %c0_i32 = arith.constant 0 : i32
    %c0_i32_0 = arith.constant 0 : i32
    %c0_i32_1 = arith.constant 0 : i32
    return %c0_i32, %c0_i32_0 : i32, i32
  }
  func.func @transform_6(%arg0: i32) -> (i32, i32) {
    %c0_i32 = arith.constant 0 : i32
    %c0_i32_0 = arith.constant 0 : i32
    %c0_i32_1 = arith.constant 0 : i32
    return %c0_i32, %c0_i32_0 : i32, i32
  }
  func.func @transform_7(%arg0: i32) -> (i32, i32) {
    %c0_i32 = arith.constant 0 : i32
    %c0_i32_0 = arith.constant 0 : i32
    %c0_i32_1 = arith.constant 0 : i32
    return %c0_i32, %c0_i32_0 : i32, i32
  }
  func.func @transform_8(%arg0: i32) -> (i32, i32) {
    %c0_i32 = arith.constant 0 : i32
    %c0_i32_0 = arith.constant 0 : i32
    return %arg0, %c0_i32 : i32, i32
  }
}

module attributes {stable_mosaic.version = 11 : i64} {
  func.func @kernel(%arg0: i32, %arg1: memref<10x16xf32, #tpu.memory_space<vmem>>, %arg2: memref<16x8xbf16, #tpu.memory_space<vmem>>, %arg3: memref<1x8xf32, #tpu.memory_space<vmem>>, %arg4: memref<8x8xbf16, #tpu.memory_space<vmem>>, %arg5: memref<1x8xf32, #tpu.memory_space<vmem>>, %arg6: memref<1x8xf32, #tpu.memory_space<vmem>>, %arg7: memref<1x1xf32, #tpu.memory_space<vmem>>, %arg8: memref<5x784xf32, #tpu.memory_space<vmem>>, %arg9: memref<2x784xf32, #tpu.memory_space<vmem>>) attributes {dimension_semantics = [#tpu.dimension_semantics<parallel>], iteration_bounds = array<i64: 1>, scalar_prefetch = 0 : i64, scratch_operands = 0 : i64, tpu.core_type = #tpu.core_type<tc>, window_params = [{transform_indices = @transform_0, window_bounds = array<i64: 10, 16>}, {pipeline_mode = #tpu.pipeline_mode<synchronous>, transform_indices = @transform_1, window_bounds = array<i64: 16, 8>}, {pipeline_mode = #tpu.pipeline_mode<synchronous>, transform_indices = @transform_2, window_bounds = array<i64: 1, 8>}, {pipeline_mode = #tpu.pipeline_mode<synchronous>, transform_indices = @transform_3, window_bounds = array<i64: 8, 8>}, {pipeline_mode = #tpu.pipeline_mode<synchronous>, transform_indices = @transform_4, window_bounds = array<i64: 1, 8>}, {pipeline_mode = #tpu.pipeline_mode<synchronous>, transform_indices = @transform_5, window_bounds = array<i64: 1, 8>}, {pipeline_mode = #tpu.pipeline_mode<synchronous>, transform_indices = @transform_6, window_bounds = array<i64: 1, 1>}, {pipeline_mode = #tpu.pipeline_mode<synchronous>, transform_indices = @transform_7, window_bounds = array<i64: 5, 784>}, {transform_indices = @transform_8, window_bounds = array<i64: 2, 784>}]} {
    %c0 = arith.constant 0 : index
    %c0_0 = arith.constant 0 : index
    %0 = vector.load %arg1[%c0, %c0_0] : memref<10x16xf32, #tpu.memory_space<vmem>>, vector<10x16xf32>
    %c0_1 = arith.constant 0 : index
    %c0_2 = arith.constant 0 : index
    %1 = vector.load %arg2[%c0_1, %c0_2] : memref<16x8xbf16, #tpu.memory_space<vmem>>, vector<16x8xbf16>
    %2 = arith.truncf %0 : vector<10x16xf32> to vector<10x16xbf16>
    %cst = arith.constant dense<0.000000e+00> : vector<10x8xf32>
    %3 = tpu.matmul %2, %1, %cst {dimension_numbers = #tpu.dot_dimension_numbers<[1], [0], [0], [1], [0, 0, 1, 1], [], []>} : vector<10x16xbf16>, vector<16x8xbf16>, vector<10x8xf32> -> vector<10x8xf32>
    %c0_3 = arith.constant 0 : index
    %c0_4 = arith.constant 0 : index
    %4 = vector.load %arg3[%c0_3, %c0_4] : memref<1x8xf32, #tpu.memory_space<vmem>>, vector<1x8xf32>
    %5 = vector.broadcast %4 : vector<1x8xf32> to vector<10x8xf32>
    %6 = arith.addf %3, %5 : vector<10x8xf32>
    %c0_5 = arith.constant 0 : index
    %c0_6 = arith.constant 0 : index
    %7 = vector.load %arg4[%c0_5, %c0_6] : memref<8x8xbf16, #tpu.memory_space<vmem>>, vector<8x8xbf16>
    %8 = arith.truncf %6 : vector<10x8xf32> to vector<10x8xbf16>
    %cst_7 = arith.constant dense<0.000000e+00> : vector<10x8xf32>
    %9 = tpu.matmul %8, %7, %cst_7 {dimension_numbers = #tpu.dot_dimension_numbers<[1], [0], [0], [1], [0, 0, 1, 1], [], []>} : vector<10x8xbf16>, vector<8x8xbf16>, vector<10x8xf32> -> vector<10x8xf32>
    %c0_8 = arith.constant 0 : index
    %c0_9 = arith.constant 0 : index
    %10 = vector.load %arg5[%c0_8, %c0_9] : memref<1x8xf32, #tpu.memory_space<vmem>>, vector<1x8xf32>
    %11 = vector.broadcast %10 : vector<1x8xf32> to vector<10x8xf32>
    %12 = arith.addf %9, %11 : vector<10x8xf32>
    %cst_10 = arith.constant 0.000000e+00 : f32
    %13 = vector.broadcast %cst_10 : f32 to vector<10x8xf32>
    %14 = arith.maximumf %12, %13 : vector<10x8xf32>
    %c0_11 = arith.constant 0 : index
    %c0_12 = arith.constant 0 : index
    %15 = vector.load %arg6[%c0_11, %c0_12] : memref<1x8xf32, #tpu.memory_space<vmem>>, vector<1x8xf32>
    %16 = vector.broadcast %15 : vector<1x8xf32> to vector<10x8xf32>
    %17 = arith.mulf %14, %16 : vector<10x8xf32>
    %cst_13 = arith.constant dense<0.000000e+00> : vector<10xf32>
    %18 = vector.multi_reduction <add>, %17, %cst_13 [1] : vector<10x8xf32> to vector<10xf32>
    %19 = vector.shape_cast %18 : vector<10xf32> to vector<10x1xf32>
    %c0_14 = arith.constant 0 : index
    %c0_15 = arith.constant 0 : index
    %20 = vector.load %arg7[%c0_14, %c0_15] : memref<1x1xf32, #tpu.memory_space<vmem>>, vector<1x1xf32>
    %21 = vector.broadcast %20 : vector<1x1xf32> to vector<10x1xf32>
    %22 = arith.addf %19, %21 : vector<10x1xf32>
    %cst_16 = arith.constant 0.000000e+00 : f32
    %23 = vector.broadcast %cst_16 : f32 to vector<10x1xf32>
    %24 = arith.maximumf %22, %23 : vector<10x1xf32>
    %c0_17 = arith.constant 0 : index
    %c0_18 = arith.constant 0 : index
    %25 = vector.load %arg8[%c0_17, %c0_18] : memref<5x784xf32, #tpu.memory_space<vmem>>, vector<5x784xf32>
    %26 = vector.extract_strided_slice %24 {offsets = [0, 0], sizes = [5, 1], strides = [1, 1]} : vector<10x1xf32> to vector<5x1xf32>
    %27 = vector.broadcast %26 : vector<5x1xf32> to vector<5x784xf32>
    %28 = arith.mulf %27, %25 : vector<5x784xf32>
    %cst_19 = arith.constant dense<0.000000e+00> : vector<784xf32>
    %29 = vector.multi_reduction <add>, %28, %cst_19 [0] : vector<5x784xf32> to vector<784xf32>
    %30 = vector.shape_cast %29 : vector<784xf32> to vector<1x784xf32>
    %cst_20 = arith.constant 0.000000e+00 : f32
    %31 = vector.broadcast %cst_20 : f32 to vector<1x784xf32>
    %32 = arith.maximumf %30, %31 : vector<1x784xf32>
    %c0_21 = arith.constant 0 : index
    %c0_22 = arith.constant 0 : index
    %33 = vector.load %arg9[%c0_21, %c0_22] : memref<2x784xf32, #tpu.memory_space<vmem>>, vector<1x784xf32>
    tpu.vector_store %arg9[%c0_21, %c0_22], %32 {strides = array<i32>} : memref<2x784xf32, #tpu.memory_space<vmem>>, vector<1x784xf32>,
    %34 = vector.extract_strided_slice %24 {offsets = [5, 0], sizes = [5, 1], strides = [1, 1]} : vector<10x1xf32> to vector<5x1xf32>
    %35 = vector.broadcast %34 : vector<5x1xf32> to vector<5x784xf32>
    %36 = arith.mulf %35, %25 : vector<5x784xf32>
    %cst_23 = arith.constant dense<0.000000e+00> : vector<784xf32>
    %37 = vector.multi_reduction <add>, %36, %cst_23 [0] : vector<5x784xf32> to vector<784xf32>
    %38 = vector.shape_cast %37 : vector<784xf32> to vector<1x784xf32>
    %cst_24 = arith.constant 0.000000e+00 : f32
    %39 = vector.broadcast %cst_24 : f32 to vector<1x784xf32>
    %40 = arith.maximumf %38, %39 : vector<1x784xf32>
    %c1 = arith.constant 1 : index
    %c0_25 = arith.constant 0 : index
    %41 = vector.load %arg9[%c1, %c0_25] : memref<2x784xf32, #tpu.memory_space<vmem>>, vector<1x784xf32>
    tpu.vector_store %arg9[%c1, %c0_25], %40 {strides = array<i32>} : memref<2x784xf32, #tpu.memory_space<vmem>>, vector<1x784xf32>,
    return
  }
  func.func @transform_0(%arg0: i32) -> (i32, i32) {
    %c0_i32 = arith.constant 0 : i32
    %c0_i32_0 = arith.constant 0 : i32
    return %arg0, %c0_i32 : i32, i32
  }
  func.func @transform_1(%arg0: i32) -> (i32, i32) {
    %c0_i32 = arith.constant 0 : i32
    %c0_i32_0 = arith.constant 0 : i32
    %c0_i32_1 = arith.constant 0 : i32
    return %c0_i32, %c0_i32_0 : i32, i32
  }
  func.func @transform_2(%arg0: i32) -> (i32, i32) {
    %c0_i32 = arith.constant 0 : i32
    %c0_i32_0 = arith.constant 0 : i32
    %c0_i32_1 = arith.constant 0 : i32
    return %c0_i32, %c0_i32_0 : i32, i32
  }
  func.func @transform_3(%arg0: i32) -> (i32, i32) {
    %c0_i32 = arith.constant 0 : i32
    %c0_i32_0 = arith.constant 0 : i32
    %c0_i32_1 = arith.constant 0 : i32
    return %c0_i32, %c0_i32_0 : i32, i32
  }
  func.func @transform_4(%arg0: i32) -> (i32, i32) {
    %c0_i32 = arith.constant 0 : i32
    %c0_i32_0 = arith.constant 0 : i32
    %c0_i32_1 = arith.constant 0 : i32
    return %c0_i32, %c0_i32_0 : i32, i32
  }
  func.func @transform_5(%arg0: i32) -> (i32, i32) {
    %c0_i32 = arith.constant 0 : i32
    %c0_i32_0 = arith.constant 0 : i32
    %c0_i32_1 = arith.constant 0 : i32
    return %c0_i32, %c0_i32_0 : i32, i32
  }
  func.func @transform_6(%arg0: i32) -> (i32, i32) {
    %c0_i32 = arith.constant 0 : i32
    %c0_i32_0 = arith.constant 0 : i32
    %c0_i32_1 = arith.constant 0 : i32
    return %c0_i32, %c0_i32_0 : i32, i32
  }
  func.func @transform_7(%arg0: i32) -> (i32, i32) {
    %c0_i32 = arith.constant 0 : i32
    %c0_i32_0 = arith.constant 0 : i32
    %c0_i32_1 = arith.constant 0 : i32
    return %c0_i32, %c0_i32_0 : i32, i32
  }
  func.func @transform_8(%arg0: i32) -> (i32, i32) {
    %c0_i32 = arith.constant 0 : i32
    %c0_i32_0 = arith.constant 0 : i32
    return %arg0, %c0_i32 : i32, i32
  }
}

</mosaic_0001>

<llo_original>
// kernel: video_depth_forward.16
$region0: #{video_depth_forward.16}
  #allocation0 [shape = 'u32[]', space=smem, size = 0x4, offset = 0x4, fixed_abs, tag = 'smem constant byte address 0x4 - core index']
  #allocation1 [shape = 'u32[72,128]{1,0:T(1,128)}', space=vmem, size = 0x9000, scoped, tag = 'internal scratch']
  %s0 = inlined_call_operand.vmem [shape: f32[8,588], index: 0, kind: input, shape index: {}]
  %s1 = inlined_call_operand.vmem [shape: bf16[588,32], index: 1, kind: input, shape index: {}]
  %s2 = inlined_call_operand.vmem [shape: f32[1,32], index: 2, kind: input, shape index: {}]
  %s3 = inlined_call_operand.vmem [shape: f32[1,32], index: 3, kind: input, shape index: {}]
  %s4 = inlined_call_operand.vmem [shape: f32[4,32], index: 4, kind: input, shape index: {}]
  %s5 = inlined_call_operand.vmem [shape: f32[10,32], index: 5, kind: output, shape index: {}]
  %s6 = sld [smem:[#allocation0]]
  $region30: #{video_depth_forward.16} parent=0
    _
  %s8 = ssub.s32 1, %s6
  %s9 = scalar_select 0, %s8, %s6
  // Predicated region
  $region2: #{video_depth_forward.16} parent=0 // pred_check
    _
  $region3: #{video_depth_forward.16} parent=0 // pred_check_branch
    %11 = sbr.rel (0) target = $region5
  $region4: #{video_depth_forward.16} parent=0 // pred_region
    _
  $region5: #{video_depth_forward.16} parent=0 // pred_fallthru
    _
  // Predicated region
  $region6: #{video_depth_forward.16} parent=0 // pred_check
    _
  $region7: #{video_depth_forward.16} parent=0 // pred_check_branch
    %13 = sbr.rel (0) target = $region9
  $region8: #{video_depth_forward.16} parent=0 // pred_region
    _
  $region9: #{video_depth_forward.16} parent=0 // pred_fallthru
    _
  // Predicated region
  $region10: #{video_depth_forward.16} parent=0 // pred_check
    _
  $region11: #{video_depth_forward.16} parent=0 // pred_check_branch
    %15 = sbr.rel (0) target = $region13
  $region12: #{video_depth_forward.16} parent=0 // pred_region
    _
  $region13: #{video_depth_forward.16} parent=0 // pred_fallthru
    _
  // Predicated region
  $region14: #{video_depth_forward.16} parent=0 // pred_check
    _
  $region15: #{video_depth_forward.16} parent=0 // pred_check_branch
    %17 = sbr.rel (0) target = $region17
  $region16: #{video_depth_forward.16} parent=0 // pred_region
    _
  $region17: #{video_depth_forward.16} parent=0 // pred_fallthru
    _
  // Predicated region
  $region18: #{video_depth_forward.16} parent=0 // pred_check
    _
  $region19: #{video_depth_forward.16} parent=0 // pred_check_branch
    %19 = sbr.rel (0) target = $region21
  $region20: #{video_depth_forward.16} parent=0 // pred_region
    _
  $region21: #{video_depth_forward.16} parent=0 // pred_fallthru
    _
  %v21 = vld [vmem:[%s0] sm:$0xff]
  %v22 = vld [vmem:[%s0 + $0x8] sm:$0xff]
  %v23 = vld [vmem:[%s0 + $0x10] sm:$0xff]
  %v24 = vld [vmem:[%s0 + $0x18] sm:$0xff]
  %v25 = vld [vmem:[%s0 + $0x20] sm:$0xff]
  %v26 = vld [vmem:[%s1] sm:$0xf]
  %v27 = vld [vmem:[%s1 + $0x4] sm:$0xf]
  %v28 = vld [vmem:[%s1 + $0x8] sm:$0xf]
  %v29 = vld [vmem:[%s1 + $0xc] sm:$0xf]
  %v30 = vld [vmem:[%s1 + $0x10] sm:$0xf]
  %v31 = vld [vmem:[%s1 + $0x14] sm:$0xf]
  %v32 = vld [vmem:[%s1 + $0x18] sm:$0xf]
  %v33 = vld [vmem:[%s1 + $0x1c] sm:$0xf]
  %v34 = vld [vmem:[%s1 + $0x20] sm:$0xf]
  %v35 = vld [vmem:[%s1 + $0x24] sm:$0xf]
  %v36 = vld [vmem:[%s1 + $0x28] sm:$0xf]
  %v37 = vld [vmem:[%s1 + $0x2c] sm:$0xf]
  %v38 = vld [vmem:[%s1 + $0x30] sm:$0xf]
  %v39 = vld [vmem:[%s1 + $0x34] sm:$0xf]
  %v40 = vld [vmem:[%s1 + $0x38] sm:$0xf]
  %v41 = vld [vmem:[%s1 + $0x3c] sm:$0xf]
  %v42 = vld [vmem:[%s1 + $0x40] sm:$0xf]
  %v43 = vld [vmem:[%s1 + $0x44] sm:$0xf]
  %v44 = vld [vmem:[%s1 + $0x48] sm:$0xf]
  %v45 = vld [vmem:[%s1 + $0x4c] sm:$0xf]
  %v46 = vld [vmem:[%s1 + $0x50] sm:$0xf]
  %v47 = vld [vmem:[%s1 + $0x54] sm:$0xf]
  %v48 = vld [vmem:[%s1 + $0x58] sm:$0xf]
  %v49 = vld [vmem:[%s1 + $0x5c] sm:$0xf]
  %v50 = vld [vmem:[%s1 + $0x60] sm:$0xf]
  %v51 = vld [vmem:[%s1 + $0x64] sm:$0xf]
  %v52 = vld [vmem:[%s1 + $0x68] sm:$0xf]
  %v53 = vld [vmem:[%s1 + $0x6c] sm:$0xf]
  %v54 = vld [vmem:[%s1 + $0x70] sm:$0xf]
  %v55 = vld [vmem:[%s1 + $0x74] sm:$0xf]
  %v56 = vld [vmem:[%s1 + $0x78] sm:$0xf]
  %v57 = vld [vmem:[%s1 + $0x7c] sm:$0xf]
  %v58 = vld [vmem:[%s1 + $0x80] sm:$0xf]
  %v59 = vld [vmem:[%s1 + $0x84] sm:$0xf]
  %v60 = vld [vmem:[%s1 + $0x88] sm:$0xf]
  %v61 = vld [vmem:[%s1 + $0x8c] sm:$0xf]
  %v62 = vld [vmem:[%s1 + $0x90] sm:$0xf]
  %v63 = vld [vmem:[%s1 + $0x94] sm:$0xf]
  %v64 = vld [vmem:[%s1 + $0x98] sm:$0xf]
  %v65 = vld [vmem:[%s1 + $0x9c] sm:$0xf]
  %v66 = vld [vmem:[%s1 + $0xa0] sm:$0xf]
  %v67 = vld [vmem:[%s1 + $0xa4] sm:$0xf]
  %v68 = vld [vmem:[%s1 + $0xa8] sm:$0xf]
  %v69 = vld [vmem:[%s1 + $0xac] sm:$0xf]
  %v70 = vld [vmem:[%s1 + $0xb0] sm:$0xf]
  %v71 = vld [vmem:[%s1 + $0xb4] sm:$0xf]
  %v72 = vld [vmem:[%s1 + $0xb8] sm:$0xf]
  %v73 = vld [vmem:[%s1 + $0xbc] sm:$0xf]
  %v74 = vld [vmem:[%s1 + $0xc0] sm:$0xf]
  %v75 = vld [vmem:[%s1 + $0xc4] sm:$0xf]
  %v76 = vld [vmem:[%s1 + $0xc8] sm:$0xf]
  %v77 = vld [vmem:[%s1 + $0xcc] sm:$0xf]
  %v78 = vld [vmem:[%s1 + $0xd0] sm:$0xf]
  %v79 = vld [vmem:[%s1 + $0xd4] sm:$0xf]
  %v80 = vld [vmem:[%s1 + $0xd8] sm:$0xf]
  %v81 = vld [vmem:[%s1 + $0xdc] sm:$0xf]
  %v82 = vld [vmem:[%s1 + $0xe0] sm:$0xf]
  %v83 = vld [vmem:[%s1 + $0xe4] sm:$0xf]
  %v84 = vld [vmem:[%s1 + $0xe8] sm:$0xf]
  %v85 = vld [vmem:[%s1 + $0xec] sm:$0xf]
  %v86 = vld [vmem:[%s1 + $0xf0] sm:$0xf]
  %v87 = vld [vmem:[%s1 + $0xf4] sm:$0xf]
  %v88 = vld [vmem:[%s1 + $0xf8] sm:$0xf]
  %v89 = vld [vmem:[%s1 + $0xfc] sm:$0xf]
  %v90 = vld [vmem:[%s1 + $0x100] sm:$0xf]
  %v91 = vld [vmem:[%s1 + $0x104] sm:$0xf]
  %v92 = vld [vmem:[%s1 + $0x108] sm:$0xf]
  %v93 = vld [vmem:[%s1 + $0x10c] sm:$0xf]
  %v94 = vld [vmem:[%s1 + $0x110] sm:$0xf]
  %v95 = vld [vmem:[%s1 + $0x114] sm:$0xf]
  %v96 = vld [vmem:[%s1 + $0x118] sm:$0xf]
  %v97 = vld [vmem:[%s1 + $0x11c] sm:$0xf]
  %v98 = vld [vmem:[%s1 + $0x120] sm:$0xf]
  %v99 = vld [vmem:[%s1 + $0x124] sm:$0x3]
  %v100 = vpack.c.bf16 %v21, %v21
  %v101 = vpack.c.bf16 %v22, %v22
  %v102 = vpack.c.bf16 %v23, %v23
  %v103 = vpack.c.bf16 %v24, %v24
  %v104 = vpack.c.bf16 %v25, %v25
  %v105 = vld [vmem:[%s2] sm:$0x1]
  %v107 = vperm.slane %v105, 0
  %v183 = vunpack.c.l.b16 %v26
  %v184 = vunpack.c.l.b16 %v27
  %v185 = vunpack.c.l.b16 %v28
  %v186 = vunpack.c.l.b16 %v29
  %v187 = vunpack.c.l.b16 %v30
  %v188 = vunpack.c.l.b16 %v31
  %v189 = vunpack.c.l.b16 %v32
  %v190 = vunpack.c.l.b16 %v33
  %v191 = vunpack.c.l.b16 %v34
  %v192 = vunpack.c.l.b16 %v35
  %v193 = vunpack.c.l.b16 %v36
  %v194 = vunpack.c.l.b16 %v37
  %v195 = vunpack.c.l.b16 %v38
  %v196 = vunpack.c.l.b16 %v39
  %v197 = vunpack.c.l.b16 %v40
  %v198 = vunpack.c.l.b16 %v41
  %v199 = vunpack.c.l.b16 %v42
  %v200 = vunpack.c.l.b16 %v43
  %v201 = vunpack.c.l.b16 %v44
  %v202 = vunpack.c.l.b16 %v45
  %v203 = vunpack.c.l.b16 %v46
  %v204 = vunpack.c.l.b16 %v47
  %v205 = vunpack.c.l.b16 %v48
  %v206 = vunpack.c.l.b16 %v49
  %v207 = vunpack.c.l.b16 %v50
  %v208 = vunpack.c.l.b16 %v51
  %v209 = vunpack.c.l.b16 %v52
  %v210 = vunpack.c.l.b16 %v53
  %v211 = vunpack.c.l.b16 %v54
  %v212 = vunpack.c.l.b16 %v55
  %v213 = vunpack.c.l.b16 %v56
  %v214 = vunpack.c.l.b16 %v57
  %v215 = vunpack.c.l.b16 %v58
  %v216 = vunpack.c.l.b16 %v59
  %v217 = vunpack.c.l.b16 %v60
  %v218 = vunpack.c.l.b16 %v61
  %v219 = vunpack.c.l.b16 %v62
  %v220 = vunpack.c.l.b16 %v63
  %v221 = vunpack.c.l.b16 %v64
  %v222 = vunpack.c.l.b16 %v65
  %v223 = vunpack.c.l.b16 %v66
  %v224 = vunpack.c.l.b16 %v67
  %v225 = vunpack.c.l.b16 %v68
  %v226 = vunpack.c.l.b16 %v69
  %v227 = vunpack.c.l.b16 %v70
  %v228 = vunpack.c.l.b16 %v71
  %v229 = vunpack.c.l.b16 %v72
  %v230 = vunpack.c.l.b16 %v73
  %v231 = vunpack.c.l.b16 %v74
  %v232 = vunpack.c.l.b16 %v75
  %v233 = vunpack.c.l.b16 %v76
  %v234 = vunpack.c.l.b16 %v77
  %v235 = vunpack.c.l.b16 %v78
  %v236 = vunpack.c.l.b16 %v79
  %v237 = vunpack.c.l.b16 %v80
  %v238 = vunpack.c.l.b16 %v81
  %v239 = vunpack.c.l.b16 %v82
  %v240 = vunpack.c.l.b16 %v83
  %v241 = vunpack.c.l.b16 %v84
  %v242 = vunpack.c.l.b16 %v85
  %v243 = vunpack.c.l.b16 %v86
  %v244 = vunpack.c.l.b16 %v87
  %v245 = vunpack.c.l.b16 %v88
  %v246 = vunpack.c.l.b16 %v89
  %v247 = vunpack.c.l.b16 %v90
  %v248 = vunpack.c.l.b16 %v91
  %v249 = vunpack.c.l.b16 %v92
  %v250 = vunpack.c.l.b16 %v93
  %v251 = vunpack.c.l.b16 %v94
  %v252 = vunpack.c.l.b16 %v95
  %v253 = vunpack.c.l.b16 %v96
  %v254 = vunpack.c.l.b16 %v97
  %v255 = vunpack.c.l.b16 %v98
  %v256 = vunpack.c.l.b16 %v99
  %v257 = vpack.c.b16 %v184, %v183
  %v258 = vpack.c.b16 %v186, %v185
  %v259 = vpack.c.b16 %v188, %v187
  %v260 = vpack.c.b16 %v190, %v189
  %v261 = vpack.c.b16 %v192, %v191
  %v262 = vpack.c.b16 %v194, %v193
  %v263 = vpack.c.b16 %v196, %v195
  %v264 = vpack.c.b16 %v198, %v197
  %v265 = vpack.c.b16 %v200, %v199
  %v266 = vpack.c.b16 %v202, %v201
  %v267 = vpack.c.b16 %v204, %v203
  %v268 = vpack.c.b16 %v206, %v205
  %v269 = vpack.c.b16 %v208, %v207
  %v270 = vpack.c.b16 %v210, %v209
  %v271 = vpack.c.b16 %v212, %v211
  %v272 = vpack.c.b16 %v214, %v213
  %v273 = vpack.c.b16 %v216, %v215
  %v274 = vpack.c.b16 %v218, %v217
  %v275 = vpack.c.b16 %v220, %v219
  %v276 = vpack.c.b16 %v222, %v221
  %v277 = vpack.c.b16 %v224, %v223
  %v278 = vpack.c.b16 %v226, %v225
  %v279 = vpack.c.b16 %v228, %v227
  %v280 = vpack.c.b16 %v230, %v229
  %v281 = vpack.c.b16 %v232, %v231
  %v282 = vpack.c.b16 %v234, %v233
  %v283 = vpack.c.b16 %v236, %v235
  %v284 = vpack.c.b16 %v238, %v237
  %v285 = vpack.c.b16 %v240, %v239
  %v286 = vpack.c.b16 %v242, %v241
  %v287 = vpack.c.b16 %v244, %v243
  %v288 = vpack.c.b16 %v246, %v245
  %v289 = vpack.c.b16 %v248, %v247
  %v290 = vpack.c.b16 %v250, %v249
  %v291 = vpack.c.b16 %v252, %v251
  %v292 = vpack.c.b16 %v254, %v253
  %v293 = vpack.c.b16 %v256, %v255
  %vm330 = vcmask 621568
  %v332 = vsel %vm330, %v104, 0
  %vm334 = vcmask 1045504
  %v336 = vsel %vm334, %v293, 0
  %338 = vmatpush.bf16.msra.mxu0 %v264
  %339 = vmatpush.bf16.msra.mxu0 %v263
  %340 = vmatpush.bf16.msra.mxu0 %v262
  %341 = vmatpush.bf16.msra.mxu0 %v261
  %342 = vmatpush.bf16.msra.mxu0 %v260
  %343 = vmatpush.bf16.msra.mxu0 %v259
  %344 = vmatpush.bf16.msra.mxu0 %v258
  %345 = vmatpush.bf16.msra.mxu0 %v257
  %346 = vmatmul.bf16.gmra.mxu0 %v100
  %v347 = vpop.f32.mrf.mxu0
  %v348 = vadd.f32 %v107, %v347
  %v349 = vpop.f32.mrf.mxu0
  %350 = vdwg.mxu0
  %351 = vmatpush.bf16.msra.mxu0 %v272
  %352 = vmatpush.bf16.msra.mxu0 %v271
  %353 = vmatpush.bf16.msra.mxu0 %v270
  %354 = vmatpush.bf16.msra.mxu0 %v269
  %355 = vmatpush.bf16.msra.mxu0 %v268
  %356 = vmatpush.bf16.msra.mxu0 %v267
  %357 = vmatpush.bf16.msra.mxu0 %v266
  %358 = vmatpush.bf16.msra.mxu0 %v265
  %359 = vmatmul.bf16.gmra.mxu0 %v101
  %v360 = vpop.f32.mrf.mxu0
  %v361 = vadd.f32 %v348, %v360
  %v362 = vpop.f32.mrf.mxu0
  %363 = vdwg.mxu0
  %364 = vmatpush.bf16.msra.mxu0 %v280
  %365 = vmatpush.bf16.msra.mxu0 %v279
  %366 = vmatpush.bf16.msra.mxu0 %v278
  %367 = vmatpush.bf16.msra.mxu0 %v277
  %368 = vmatpush.bf16.msra.mxu0 %v276
  %369 = vmatpush.bf16.msra.mxu0 %v275
  %370 = vmatpush.bf16.msra.mxu0 %v274
  %371 = vmatpush.bf16.msra.mxu0 %v273
  %372 = vmatmul.bf16.gmra.mxu0 %v102
  %v373 = vpop.f32.mrf.mxu0
  %v374 = vadd.f32 %v361, %v373
  %v375 = vpop.f32.mrf.mxu0
  %376 = vdwg.mxu0
  %377 = vmatpush.bf16.msra.mxu0 %v288
  %378 = vmatpush.bf16.msra.mxu0 %v287
  %379 = vmatpush.bf16.msra.mxu0 %v286
  %380 = vmatpush.bf16.msra.mxu0 %v285
  %381 = vmatpush.bf16.msra.mxu0 %v284
  %382 = vmatpush.bf16.msra.mxu0 %v283
  %383 = vmatpush.bf16.msra.mxu0 %v282
  %384 = vmatpush.bf16.msra.mxu0 %v281
  %385 = vmatmul.bf16.gmra.mxu0 %v103
  %v386 = vpop.f32.mrf.mxu0
  %v387 = vadd.f32 %v374, %v386
  %v388 = vpop.f32.mrf.mxu0
  %389 = vdwg.mxu0
  %390 = vmatpush.bf16.msra.mxu0 0
  %391 = vmatpush.bf16.msra.mxu0 0
  %392 = vmatpush.bf16.msra.mxu0 0
  %393 = vmatpush.bf16.msra.mxu0 %v336
  %394 = vmatpush.bf16.msra.mxu0 %v292
  %395 = vmatpush.bf16.msra.mxu0 %v291
  %396 = vmatpush.bf16.msra.mxu0 %v290
  %397 = vmatpush.bf16.msra.mxu0 %v289
  %398 = vmatmul.bf16.gmra.mxu0 %v332
  %v399 = vpop.f32.mrf.mxu0
  %v400 = vadd.f32 %v387, %v399
  %v401 = vpop.f32.mrf.mxu0
  %402 = vdwg.mxu0
  %v403 = vld [vmem:[%s4] sm:$0xf]
  %v404 = vld [vmem:[%s3] sm:$0x1]
  %vm405 = vcmask 253952
  %406 = vst.msk [vmem:[%s5] sm:$0x1] %vm405, %v404
  %v407 = vadd.f32 %v400, %v403
  %vm408 = vcmask 257024
  %409 = vst.msk [vmem:[%s5 + $0x1] sm:$0xf] %vm408, %v407
  %v410 = vld [vmem:[%s3] sm:$0x1]
  %411 = vst.msk [vmem:[%s5 + $0x5] sm:$0x1] %vm405, %v410
  %v413 = vrot.slane %v403, 4
  %v415 = vadd.f32 %v400, %v413
  %vm416 = vcmask 261124
  %417 = vst.msk [vmem:[%s5 + $0x2] sm:$0xf0] %vm416, %v415
  // Predicated region
  $region22: #{video_depth_forward.16} parent=0 // pred_check
    _
  $region23: #{video_depth_forward.16} parent=0 // pred_check_branch
    %419 = sbr.rel (0) target = $region25
  $region24: #{video_depth_forward.16} parent=0 // pred_region
    _
  $region25: #{video_depth_forward.16} parent=0 // pred_fallthru
    _
  // Predicated region
  $region26: #{video_depth_forward.16} parent=0 // pred_check
    _
  $region27: #{video_depth_forward.16} parent=0 // pred_check_branch
    %421 = sbr.rel (0) target = $region29
  $region28: #{video_depth_forward.16} parent=0 // pred_region
    _
  $region29: #{video_depth_forward.16} parent=0 // pred_fallthru
    _

// kernel: video_depth_forward.17
$region0: #{video_depth_forward.17}
  #allocation0 [shape = 'u32[]', space=smem, size = 0x4, offset = 0x4, fixed_abs, tag = 'smem constant byte address 0x4 - core index']
  #allocation1 [shape = 'u32[72,128]{1,0:T(1,128)}', space=vmem, size = 0x9000, scoped, tag = 'internal scratch']
  %s0 = inlined_call_operand.vmem [shape: f32[10,32], index: 0, kind: input, shape index: {}]
  %s1 = inlined_call_operand.vmem [shape: f32[10,10], index: 1, kind: input, shape index: {}]
  %s2 = inlined_call_operand.vmem [shape: f32[1,32], index: 2, kind: input, shape index: {}]
  %s3 = inlined_call_operand.vmem [shape: f32[1,32], index: 3, kind: input, shape index: {}]
  %s4 = inlined_call_operand.vmem [shape: bf16[32,96], index: 4, kind: input, shape index: {}]
  %s5 = inlined_call_operand.vmem [shape: f32[1,96], index: 5, kind: input, shape index: {}]
  %s6 = inlined_call_operand.vmem [shape: bf16[32,32], index: 6, kind: input, shape index: {}]
  %s7 = inlined_call_operand.vmem [shape: f32[1,32], index: 7, kind: input, shape index: {}]
  %s8 = inlined_call_operand.vmem [shape: f32[1,32], index: 8, kind: input, shape index: {}]
  %s9 = inlined_call_operand.vmem [shape: f32[1,32], index: 9, kind: input, shape index: {}]
  %s10 = inlined_call_operand.vmem [shape: bf16[32,128], index: 10, kind: input, shape index: {}]
  %s11 = inlined_call_operand.vmem [shape: f32[1,128], index: 11, kind: input, shape index: {}]
  %s12 = inlined_call_operand.vmem [shape: bf16[128,32], index: 12, kind: input, shape index: {}]
  %s13 = inlined_call_operand.vmem [shape: f32[1,32], index: 13, kind: input, shape index: {}]
  %s14 = inlined_call_operand.vmem [shape: f32[10,32], index: 14, kind: output, shape index: {}]
  %s15 = sld [smem:[#allocation0]]
  $region66: #{video_depth_forward.17} parent=0
    _
  %s17 = ssub.s32 1, %s15
  %s18 = scalar_select 0, %s17, %s15
  // Predicated region
  $region2: #{video_depth_forward.17} parent=0 // pred_check
    _
  $region3: #{video_depth_forward.17} parent=0 // pred_check_branch
    %20 = sbr.rel (0) target = $region5
  $region4: #{video_depth_forward.17} parent=0 // pred_region
    _
  $region5: #{video_depth_forward.17} parent=0 // pred_fallthru
    _
  // Predicated region
  $region6: #{video_depth_forward.17} parent=0 // pred_check
    _
  $region7: #{video_depth_forward.17} parent=0 // pred_check_branch
    %22 = sbr.rel (0) target = $region9
  $region8: #{video_depth_forward.17} parent=0 // pred_region
    _
  $region9: #{video_depth_forward.17} parent=0 // pred_fallthru
    _
  // Predicated region
  $region10: #{video_depth_forward.17} parent=0 // pred_check
    _
  $region11: #{video_depth_forward.17} parent=0 // pred_check_branch
    %24 = sbr.rel (0) target = $region13
  $region12: #{video_depth_forward.17} parent=0 // pred_region
    _
  $region13: #{video_depth_forward.17} parent=0 // pred_fallthru
    _
  // Predicated region
  $region14: #{video_depth_forward.17} parent=0 // pred_check
    _
  $region15: #{video_depth_forward.17} parent=0 // pred_check_branch
    %26 = sbr.rel (0) target = $region17
  $region16: #{video_depth_forward.17} parent=0 // pred_region
    _
  $region17: #{video_depth_forward.17} parent=0 // pred_fallthru
    _
  // Predicated region
  $region18: #{video_depth_forward.17} parent=0 // pred_check
    _
  $region19: #{video_depth_forward.17} parent=0 // pred_check_branch
    %28 = sbr.rel (0) target = $region21
  $region20: #{video_depth_forward.17} parent=0 // pred_region
    _
  $region21: #{video_depth_forward.17} parent=0 // pred_fallthru
    _
  // Predicated region
  $region22: #{video_depth_forward.17} parent=0 // pred_check
    _
  $region23: #{video_depth_forward.17} parent=0 // pred_check_branch
    %30 = sbr.rel (0) target = $region25
  $region24: #{video_depth_forward.17} parent=0 // pred_region
    _
  $region25: #{video_depth_forward.17} parent=0 // pred_fallthru
    _
  // Predicated region
  $region26: #{video_depth_forward.17} parent=0 // pred_check
    _
  $region27: #{video_depth_forward.17} parent=0 // pred_check_branch
    %32 = sbr.rel (0) target = $region29
  $region28: #{video_depth_forward.17} parent=0 // pred_region
    _
  $region29: #{video_depth_forward.17} parent=0 // pred_fallthru
    _
  // Predicated region
  $region30: #{video_depth_forward.17} parent=0 // pred_check
    _
  $region31: #{video_depth_forward.17} parent=0 // pred_check_branch
    %34 = sbr.rel (0) target = $region33
  $region32: #{video_depth_forward.17} parent=0 // pred_region
    _
  $region33: #{video_depth_forward.17} parent=0 // pred_fallthru
    _
  // Predicated region
  $region34: #{video_depth_forward.17} parent=0 // pred_check
    _
  $region35: #{video_depth_forward.17} parent=0 // pred_check_branch
    %36 = sbr.rel (0) target = $region37
  $region36: #{video_depth_forward.17} parent=0 // pred_region
    _
  $region37: #{video_depth_forward.17} parent=0 // pred_fallthru
    _
  // Predicated region
  $region38: #{video_depth_forward.17} parent=0 // pred_check
    _
  $region39: #{video_depth_forward.17} parent=0 // pred_check_branch
    %38 = sbr.rel (0) target = $region41
  $region40: #{video_depth_forward.17} parent=0 // pred_region
    _
  $region41: #{video_depth_forward.17} parent=0 // pred_fallthru
    _
  // Predicated region
  $region42: #{video_depth_forward.17} parent=0 // pred_check
    _
  $region43: #{video_depth_forward.17} parent=0 // pred_check_branch
    %40 = sbr.rel (0) target = $region45
  $region44: #{video_depth_forward.17} parent=0 // pred_region
    _
  $region45: #{video_depth_forward.17} parent=0 // pred_fallthru
    _
  // Predicated region
  $region46: #{video_depth_forward.17} parent=0 // pred_check
    _
  $region47: #{video_depth_forward.17} parent=0 // pred_check_branch
    %42 = sbr.rel (0) target = $region49
  $region48: #{video_depth_forward.17} parent=0 // pred_region
    _
  $region49: #{video_depth_forward.17} parent=0 // pred_fallthru
    _
  // Predicated region
  $region50: #{video_depth_forward.17} parent=0 // pred_check
    _
  $region51: #{video_depth_forward.17} parent=0 // pred_check_branch
    %44 = sbr.rel (0) target = $region53
  $region52: #{video_depth_forward.17} parent=0 // pred_region
    _
  $region53: #{video_depth_forward.17} parent=0 // pred_fallthru
    _
  // Predicated region
  $region54: #{video_depth_forward.17} parent=0 // pred_check
    _
  $region55: #{video_depth_forward.17} parent=0 // pred_check_branch
    %46 = sbr.rel (0) target = $region57
  $region56: #{video_depth_forward.17} parent=0 // pred_region
    _
  $region57: #{video_depth_forward.17} parent=0 // pred_fallthru
    _
  %v48 = vld [vmem:[%s0] sm:$0xff]
  %v49 = vld [vmem:[%s0 + $0x8] sm:$0x3]
  %v50 = vld [vmem:[%s2] sm:$0x1]
  %v51 = vld [vmem:[%s3] sm:$0x1]
  %vm52 = vcmask 261120
  %v53 = vsel %vm52, %v48, 0.0
  %54 = vadd.xlane.f32.xlu0 %v53
  %v55 = vpop.xlane.xlu0 %54
  %vm56 = vcmask 254976
  %v57 = vsel %vm56, %v49, 0.0
  %58 = vadd.xlane.f32.xlu0 %v57
  %v59 = vpop.xlane.xlu0 %58
  %v60 = vrcp.pop 32.0
  %v61 = vmul.f32 32.0, %v60
  %v62 = vsub.f32 1.0, %v61
  %v63 = vmul.f32 %v60, %v62
  %v64 = vadd.f32 %v60, %v63
  %vm65 = vweird.f32 %v60
  %v66 = vsel %vm65, %v60, %v64
  %v67 = vmul.f32 %v55, %v66
  %v68 = vmul.f32 %v59, %v66
  %v69 = vsub.f32 %v48, %v67
  %v70 = vsub.f32 %v49, %v68
  %v71 = vmul.f32 %v69, %v69
  %v72 = vmul.f32 %v70, %v70
  %v73 = vsel %vm52, %v71, 0.0
  %74 = vadd.xlane.f32.xlu0 %v73
  %v75 = vpop.xlane.xlu0 %74
  %v76 = vsel %vm56, %v72, 0.0
  %77 = vadd.xlane.f32.xlu0 %v76
  %v78 = vpop.xlane.xlu0 %77
  %v79 = vmul.f32 %v75, %v66
  %v80 = vmul.f32 %v78, %v66
  %v81 = vadd.f32 %v79, 1e-06
  %v82 = vadd.f32 %v80, 1e-06
  %v83 = vrsqrt.pop %v81
  %v84 = vmul.f32 %v83, %v81
  %v85 = vmul.f32 %v84, %v83
  %v86 = vmul.f32 0.5, %v85
  %v87 = vsub.f32 1.5, %v86
  %v88 = vmul.f32 %v83, %v87
  %vm89 = vweird.f32 %v81
  %vm90 = vweird.f32 %v83
  %vm91 = vmor %vm89, %vm90
  %v92 = vsel %vm91, %v83, %v88
  %v93 = vrsqrt.pop %v82
  %v94 = vmul.f32 %v93, %v82
  %v95 = vmul.f32 %v94, %v93
  %v96 = vmul.f32 0.5, %v95
  %v97 = vsub.f32 1.5, %v96
  %v98 = vmul.f32 %v93, %v97
  %vm99 = vweird.f32 %v82
  %vm100 = vweird.f32 %v93
  %vm101 = vmor %vm99, %vm100
  %v102 = vsel %vm101, %v93, %v98
  %v103 = vmul.f32 %v69, %v92
  %v104 = vmul.f32 %v70, %v102
  %v106 = vperm.slane %v50, 0
  %v108 = vmul.f32 %v103, %v106
  %v109 = vmul.f32 %v104, %v106
  %v111 = vperm.slane %v51, 0
  %v113 = vadd.f32 %v108, %v111
  %v114 = vadd.f32 %v109, %v111
  %v115 = vld [vmem:[%s4] sm:$0xf]
  %v116 = vld [vmem:[%s4 + $0x4] sm:$0xf]
  %v117 = vld [vmem:[%s4 + $0x8] sm:$0xf]
  %v118 = vld [vmem:[%s4 + $0xc] sm:$0xf]
  %v119 = vpack.c.bf16 %v114, %v113
  %v120 = vld [vmem:[%s5] sm:$0x1]
  %v122 = vperm.slane %v120, 0
  %v128 = vunpack.c.l.b16 %v115
  %v129 = vunpack.c.l.b16 %v116
  %v130 = vunpack.c.l.b16 %v117
  %v131 = vunpack.c.l.b16 %v118
  %v132 = vpack.c.b16 %v129, %v128
  %v133 = vpack.c.b16 %v131, %v130
  %v137 = vsel %vm52, %v119, 0
  %139 = vmatpush.bf16.msra.mxu0 0
  %140 = vmatpush.bf16.msra.mxu0 0
  %141 = vmatpush.bf16.msra.mxu0 0
  %142 = vmatpush.bf16.msra.mxu0 0
  %143 = vmatpush.bf16.msra.mxu0 0
  %144 = vmatpush.bf16.msra.mxu0 0
  %145 = vmatpush.bf16.msra.mxu0 %v133
  %146 = vmatpush.bf16.msra.mxu0 %v132
  %147 = vmatmul.bf16.gmra.mxu0 %v137
  %v148 = vpop.f32.mrf.mxu0
  %v149 = vadd.f32 %v122, %v148
  %v150 = vpop.f32.mrf.mxu0
  %v151 = vadd.f32 %v122, %v150
  %152 = vdwg.mxu0
  %v153 = vld [vmem:[%s1] sm:$0xff]
  %v154 = vld [vmem:[%s1 + $0x8] sm:$0x3]
  %v155 = vld [vmem:[%s6] sm:$0xf]
  %v156 = vld [vmem:[%s6 + $0x4] sm:$0xf]
  %v157 = vld [vmem:[%s6 + $0x8] sm:$0xf]
  %v158 = vld [vmem:[%s6 + $0xc] sm:$0xf]
  %v159 = vpack.c.bf16 %v151, %v149
  %161 = vrot.lane.b32.xlu0 %v159, 96
  %v162 = vpop.permute.xlu0 %161
  %vm163 = vcmask 130048
  %v165 = vsel %vm163, %v159, 0
  %v168 = vsel %vm163, %v162, 0
  %170 = vmatpush.bf16.xpose.msra.mxu0 0
  %171 = vmatpush.bf16.xpose.msra.mxu0 0
  %172 = vmatpush.bf16.xpose.msra.mxu0 0
  %173 = vmatpush.bf16.xpose.msra.mxu0 0
  %174 = vmatpush.bf16.xpose.msra.mxu0 0
  %175 = vmatpush.bf16.xpose.msra.mxu0 0
  %176 = vmatpush.bf16.xpose.msra.mxu0 0
  %177 = vmatpush.bf16.xpose.msra.mxu0 %v168
  %178 = vmatmul.bf16.gmra.mxu0 %v165
  %v179 = vpop.f32.mrf.mxu0
  %v180 = vadd.f32 0.0, %v179
  %v181 = vpop.f32.mrf.mxu0
  %v182 = vadd.f32 0.0, %v181
  %183 = vdwg.mxu0
  %v184 = vmul.f32 %v180, 0.25
  %v185 = vmul.f32 %v182, 0.25
  %v186 = vadd.f32 %v184, %v153
  %v187 = vadd.f32 %v185, %v154
  %vm188 = vcmask 80896
  %v189 = vsel %vm188, %v186, -inf
  %190 = vmax.xlane.f32.xlu0 %v189
  %v191 = vpop.xlane.xlu0 %190
  %vm192 = vcmask 74752
  %v193 = vsel %vm192, %v187, -inf
  %194 = vmax.xlane.f32.xlu0 %v193
  %v195 = vpop.xlane.xlu0 %194
  %v196 = vsub.f32 %v186, %v191
  %v197 = vsub.f32 %v187, %v195
  %v198 = vmul.f32 %v196, 1.442695
  %v199 = vpow.pop %v198
  %v200 = vmul.f32 %v197, 1.442695
  %v201 = vpow.pop %v200
  %v202 = vsel %vm188, %v199, 0.0
  %203 = vadd.xlane.f32.xlu0 %v202
  %v204 = vpop.xlane.xlu0 %203
  %v205 = vsel %vm192, %v201, 0.0
  %206 = vadd.xlane.f32.xlu0 %v205
  %v207 = vpop.xlane.xlu0 %206
  %v208 = vrcp.pop %v204
  %v209 = vrcp.pop %v207
  %v210 = vmul.f32 %v199, %v208
  %v211 = vmul.f32 %v201, %v209
  %v212 = vpack.c.bf16 %v211, %v210
  %213 = vrot.lane.b32.xlu0 %v159, 64
  %v214 = vpop.permute.xlu0 %213
  %v216 = vsel %vm188, %v212, 0
  %vm218 = vcmask 1044480
  %v220 = vsel %vm218, %v214, 0
  %222 = vmatpush.bf16.msra.mxu0 0
  %223 = vmatpush.bf16.msra.mxu0 0
  %224 = vmatpush.bf16.msra.mxu0 0
  %225 = vmatpush.bf16.msra.mxu0 0
  %226 = vmatpush.bf16.msra.mxu0 0
  %227 = vmatpush.bf16.msra.mxu0 0
  %228 = vmatpush.bf16.msra.mxu0 0
  %229 = vmatpush.bf16.msra.mxu0 %v220
  %230 = vmatmul.bf16.gmra.mxu0 %v216
  %v231 = vpop.f32.mrf.mxu0
  %v232 = vadd.f32 0.0, %v231
  %v233 = vpop.f32.mrf.mxu0
  %v234 = vadd.f32 0.0, %v233
  %235 = vdwg.mxu0
  %v236 = vpack.c.bf16 %v234, %v232
  %237 = vrot.lane.b32.xlu0 %v159, 112
  %v238 = vpop.permute.xlu0 %237
  %239 = vrot.lane.b32.xlu0 %v159, 80
  %v240 = vpop.permute.xlu0 %239
  %v242 = vsel %vm163, %v238, 0
  %v245 = vsel %vm163, %v240, 0
  %247 = vmatpush.bf16.xpose.msra.mxu0 0
  %248 = vmatpush.bf16.xpose.msra.mxu0 0
  %249 = vmatpush.bf16.xpose.msra.mxu0 0
  %250 = vmatpush.bf16.xpose.msra.mxu0 0
  %251 = vmatpush.bf16.xpose.msra.mxu0 0
  %252 = vmatpush.bf16.xpose.msra.mxu0 0
  %253 = vmatpush.bf16.xpose.msra.mxu0 0
  %254 = vmatpush.bf16.xpose.msra.mxu0 %v245
  %255 = vmatmul.bf16.gmra.mxu0 %v242
  %v256 = vpop.f32.mrf.mxu0
  %v257 = vadd.f32 0.0, %v256
  %v258 = vpop.f32.mrf.mxu0
  %v259 = vadd.f32 0.0, %v258
  %260 = vdwg.mxu0
  %v261 = vmul.f32 %v257, 0.25
  %v262 = vmul.f32 %v259, 0.25
  %v263 = vadd.f32 %v261, %v153
  %v264 = vadd.f32 %v262, %v154
  %v265 = vsel %vm188, %v263, -inf
  %266 = vmax.xlane.f32.xlu0 %v265
  %v267 = vpop.xlane.xlu0 %266
  %v268 = vsel %vm192, %v264, -inf
  %269 = vmax.xlane.f32.xlu0 %v268
  %v270 = vpop.xlane.xlu0 %269
  %v271 = vsub.f32 %v263, %v267
  %v272 = vsub.f32 %v264, %v270
  %v273 = vmul.f32 %v271, 1.442695
  %v274 = vpow.pop %v273
  %v275 = vmul.f32 %v272, 1.442695
  %v276 = vpow.pop %v275
  %v277 = vsel %vm188, %v274, 0.0
  %278 = vadd.xlane.f32.xlu0 %v277
  %v279 = vpop.xlane.xlu0 %278
  %v280 = vsel %vm192, %v276, 0.0
  %281 = vadd.xlane.f32.xlu0 %v280
  %v282 = vpop.xlane.xlu0 %281
  %v283 = vrcp.pop %v279
  %v284 = vrcp.pop %v282
  %v285 = vmul.f32 %v274, %v283
  %v286 = vmul.f32 %v276, %v284
  %v287 = vpack.c.bf16 %v286, %v285
  %288 = vrot.lane.b32.xlu0 %v159, 48
  %v289 = vpop.permute.xlu0 %288
  %v291 = vsel %vm188, %v287, 0
  %v294 = vsel %vm218, %v289, 0
  %296 = vmatpush.bf16.msra.mxu0 0
  %297 = vmatpush.bf16.msra.mxu0 0
  %298 = vmatpush.bf16.msra.mxu0 0
  %299 = vmatpush.bf16.msra.mxu0 0
  %300 = vmatpush.bf16.msra.mxu0 0
  %301 = vmatpush.bf16.msra.mxu0 0
  %302 = vmatpush.bf16.msra.mxu0 0
  %303 = vmatpush.bf16.msra.mxu0 %v294
  %304 = vmatmul.bf16.gmra.mxu0 %v291
  %v305 = vpop.f32.mrf.mxu0
  %v306 = vadd.f32 0.0, %v305
  %v307 = vpop.f32.mrf.mxu0
  %v308 = vadd.f32 0.0, %v307
  %309 = vdwg.mxu0
  %v310 = vpack.c.bf16 %v308, %v306
  %v313 = vunpack.c.l.b16 %v157
  %v314 = vunpack.c.l.b16 %v158
  %v315 = vpack.c.b16 %v314, %v313
  %v318 = vsel %vm163, %v310, 0
  %320 = vmatpush.bf16.msra.mxu0 0
  %321 = vmatpush.bf16.msra.mxu0 0
  %322 = vmatpush.bf16.msra.mxu0 0
  %323 = vmatpush.bf16.msra.mxu0 0
  %324 = vmatpush.bf16.msra.mxu0 0
  %325 = vmatpush.bf16.msra.mxu0 0
  %326 = vmatpush.bf16.msra.mxu0 0
  %327 = vmatpush.bf16.msra.mxu0 %v315
  %328 = vmatmul.bf16.gmra.mxu0 %v318
  %v329 = vpop.f32.mrf.mxu0
  %v330 = vadd.f32 0.0, %v329
  %v331 = vpop.f32.mrf.mxu0
  %v332 = vadd.f32 0.0, %v331
  %333 = vdwg.mxu0
  %v336 = vunpack.c.l.b16 %v155
  %v337 = vunpack.c.l.b16 %v156
  %v338 = vpack.c.b16 %v337, %v336
  %v341 = vsel %vm163, %v236, 0
  %343 = vmatpush.bf16.msra.mxu0 0
  %344 = vmatpush.bf16.msra.mxu0 0
  %345 = vmatpush.bf16.msra.mxu0 0
  %346 = vmatpush.bf16.msra.mxu0 0
  %347 = vmatpush.bf16.msra.mxu0 0
  %348 = vmatpush.bf16.msra.mxu0 0
  %349 = vmatpush.bf16.msra.mxu0 0
  %350 = vmatpush.bf16.msra.mxu0 %v338
  %351 = vmatmul.bf16.gmra.mxu0 %v341
  %v352 = vpop.f32.mrf.mxu0
  %v353 = vadd.f32 %v330, %v352
  %v354 = vpop.f32.mrf.mxu0
  %v355 = vadd.f32 %v332, %v354
  %356 = vdwg.mxu0
  %v357 = vadd.f32 %v48, %v353
  %v358 = vadd.f32 %v49, %v355
  %v359 = vld [vmem:[%s7] sm:$0x1]
  %v361 = vperm.slane %v359, 0
  %v363 = vadd.f32 %v357, %v361
  %v364 = vadd.f32 %v358, %v361
  %v365 = vld [vmem:[%s8] sm:$0x1]
  %v366 = vld [vmem:[%s9] sm:$0x1]
  %v367 = vsel %vm52, %v363, 0.0
  %368 = vadd.xlane.f32.xlu0 %v367
  %v369 = vpop.xlane.xlu0 %368
  %v370 = vsel %vm56, %v364, 0.0
  %371 = vadd.xlane.f32.xlu0 %v370
  %v372 = vpop.xlane.xlu0 %371
  %v373 = vmul.f32 %v369, %v66
  %v374 = vmul.f32 %v372, %v66
  %v375 = vsub.f32 %v363, %v373
  %v376 = vsub.f32 %v364, %v374
  %v377 = vmul.f32 %v375, %v375
  %v378 = vmul.f32 %v376, %v376
  %v379 = vsel %vm52, %v377, 0.0
  %380 = vadd.xlane.f32.xlu0 %v379
  %v381 = vpop.xlane.xlu0 %380
  %v382 = vsel %vm56, %v378, 0.0
  %383 = vadd.xlane.f32.xlu0 %v382
  %v384 = vpop.xlane.xlu0 %383
  %v385 = vmul.f32 %v381, %v66
  %v386 = vmul.f32 %v384, %v66
  %v387 = vadd.f32 %v385, 1e-06
  %v388 = vadd.f32 %v386, 1e-06
  %v389 = vrsqrt.pop %v387
  %v390 = vmul.f32 %v389, %v387
  %v391 = vmul.f32 %v390, %v389
  %v392 = vmul.f32 0.5, %v391
  %v393 = vsub.f32 1.5, %v392
  %v394 = vmul.f32 %v389, %v393
  %vm395 = vweird.f32 %v387
  %vm396 = vweird.f32 %v389
  %vm397 = vmor %vm395, %vm396
  %v398 = vsel %vm397, %v389, %v394
  %v399 = vrsqrt.pop %v388
  %v400 = vmul.f32 %v399, %v388
  %v401 = vmul.f32 %v400, %v399
  %v402 = vmul.f32 0.5, %v401
  %v403 = vsub.f32 1.5, %v402
  %v404 = vmul.f32 %v399, %v403
  %vm405 = vweird.f32 %v388
  %vm406 = vweird.f32 %v399
  %vm407 = vmor %vm405, %vm406
  %v408 = vsel %vm407, %v399, %v404
  %v409 = vmul.f32 %v375, %v398
  %v410 = vmul.f32 %v376, %v408
  %v412 = vperm.slane %v365, 0
  %v414 = vmul.f32 %v409, %v412
  %v415 = vmul.f32 %v410, %v412
  %v417 = vperm.slane %v366, 0
  %v419 = vadd.f32 %v414, %v417
  %v420 = vadd.f32 %v415, %v417
  %v421 = vld [vmem:[%s10] sm:$0xf]
  %v422 = vld [vmem:[%s10 + $0x4] sm:$0xf]
  %v423 = vld [vmem:[%s10 + $0x8] sm:$0xf]
  %v424 = vld [vmem:[%s10 + $0xc] sm:$0xf]
  %v425 = vpack.c.bf16 %v420, %v419
  %v426 = vld [vmem:[%s11] sm:$0x1]
  %v428 = vperm.slane %v426, 0
  %v434 = vunpack.c.l.b16 %v421
  %v435 = vunpack.c.l.b16 %v422
  %v436 = vunpack.c.l.b16 %v423
  %v437 = vunpack.c.l.b16 %v424
  %v438 = vpack.c.b16 %v435, %v434
  %v439 = vpack.c.b16 %v437, %v436
  %v443 = vsel %vm52, %v425, 0
  %445 = vmatpush.bf16.msra.mxu0 0
  %446 = vmatpush.bf16.msra.mxu0 0
  %447 = vmatpush.bf16.msra.mxu0 0
  %448 = vmatpush.bf16.msra.mxu0 0
  %449 = vmatpush.bf16.msra.mxu0 0
  %450 = vmatpush.bf16.msra.mxu0 0
  %451 = vmatpush.bf16.msra.mxu0 %v439
  %452 = vmatpush.bf16.msra.mxu0 %v438
  %453 = vmatmul.bf16.gmra.mxu0 %v443
  %v454 = vpop.f32.mrf.mxu0
  %v455 = vadd.f32 %v428, %v454
  %v456 = vpop.f32.mrf.mxu0
  %v457 = vadd.f32 %v428, %v456
  %458 = vdwg.mxu0
  %v459 = vmul.f32 %v455, %v455
  %v460 = vmul.f32 %v457, %v457
  %v461 = vmul.f32 %v455, %v459
  %v462 = vmul.f32 %v457, %v460
  %v463 = vmul.f32 %v461, 0.044715
  %v464 = vmul.f32 %v462, 0.044715
  %v465 = vadd.f32 %v455, %v463
  %v466 = vadd.f32 %v457, %v464
  %v467 = vmul.f32 %v465, 0.7978846
  %v468 = vmul.f32 %v466, 0.7978846
  %v469 = vtanh.pop %v467
  %v470 = vtanh.pop %v468
  %v471 = vadd.f32 %v469, 1.0
  %v472 = vadd.f32 %v470, 1.0
  %v473 = vmul.f32 %v471, 0.5
  %v474 = vmul.f32 %v472, 0.5
  %v475 = vmul.f32 %v455, %v473
  %v476 = vmul.f32 %v457, %v474
  %v477 = vld [vmem:[%s12] sm:$0xf]
  %v478 = vld [vmem:[%s12 + $0x4] sm:$0xf]
  %v479 = vld [vmem:[%s12 + $0x8] sm:$0xf]
  %v480 = vld [vmem:[%s12 + $0xc] sm:$0xf]
  %v481 = vld [vmem:[%s12 + $0x10] sm:$0xf]
  %v482 = vld [vmem:[%s12 + $0x14] sm:$0xf]
  %v483 = vld [vmem:[%s12 + $0x18] sm:$0xf]
  %v484 = vld [vmem:[%s12 + $0x1c] sm:$0xf]
  %v485 = vld [vmem:[%s12 + $0x20] sm:$0xf]
  %v486 = vld [vmem:[%s12 + $0x24] sm:$0xf]
  %v487 = vld [vmem:[%s12 + $0x28] sm:$0xf]
  %v488 = vld [vmem:[%s12 + $0x2c] sm:$0xf]
  %v489 = vld [vmem:[%s12 + $0x30] sm:$0xf]
  %v490 = vld [vmem:[%s12 + $0x34] sm:$0xf]
  %v491 = vld [vmem:[%s12 + $0x38] sm:$0xf]
  %v492 = vld [vmem:[%s12 + $0x3c] sm:$0xf]
  %v493 = vpack.c.bf16 %v476, %v475
  %v494 = vld [vmem:[%s13] sm:$0x1]
  %v496 = vperm.slane %v494, 0
  %v514 = vunpack.c.l.b16 %v477
  %v515 = vunpack.c.l.b16 %v478
  %v516 = vunpack.c.l.b16 %v479
  %v517 = vunpack.c.l.b16 %v480
  %v518 = vunpack.c.l.b16 %v481
  %v519 = vunpack.c.l.b16 %v482
  %v520 = vunpack.c.l.b16 %v483
  %v521 = vunpack.c.l.b16 %v484
  %v522 = vunpack.c.l.b16 %v485
  %v523 = vunpack.c.l.b16 %v486
  %v524 = vunpack.c.l.b16 %v487
  %v525 = vunpack.c.l.b16 %v488
  %v526 = vunpack.c.l.b16 %v489
  %v527 = vunpack.c.l.b16 %v490
  %v528 = vunpack.c.l.b16 %v491
  %v529 = vunpack.c.l.b16 %v492
  %v530 = vpack.c.b16 %v515, %v514
  %v531 = vpack.c.b16 %v517, %v516
  %v532 = vpack.c.b16 %v519, %v518
  %v533 = vpack.c.b16 %v521, %v520
  %v534 = vpack.c.b16 %v523, %v522
  %v535 = vpack.c.b16 %v525, %v524
  %v536 = vpack.c.b16 %v527, %v526
  %v537 = vpack.c.b16 %v529, %v528
  %546 = vmatpush.bf16.msra.mxu0 %v537
  %547 = vmatpush.bf16.msra.mxu0 %v536
  %548 = vmatpush.bf16.msra.mxu0 %v535
  %549 = vmatpush.bf16.msra.mxu0 %v534
  %550 = vmatpush.bf16.msra.mxu0 %v533
  %551 = vmatpush.bf16.msra.mxu0 %v532
  %552 = vmatpush.bf16.msra.mxu0 %v531
  %553 = vmatpush.bf16.msra.mxu0 %v530
  %554 = vmatmul.bf16.gmra.mxu0 %v493
  %v555 = vpop.f32.mrf.mxu0
  %v556 = vadd.f32 %v496, %v555
  %v557 = vpop.f32.mrf.mxu0
  %v558 = vadd.f32 %v496, %v557
  %559 = vdwg.mxu0
  %v560 = vadd.f32 %v363, %v556
  %v561 = vadd.f32 %v364, %v558
  %562 = vst.msk [vmem:[%s14] sm:$0xff] %vm52, %v560
  %563 = vst.msk [vmem:[%s14 + $0x8] sm:$0x3] %vm56, %v561
  // Predicated region
  $region58: #{video_depth_forward.17} parent=0 // pred_check
    _
  $region59: #{video_depth_forward.17} parent=0 // pred_check_branch
    %565 = sbr.rel (0) target = $region61
  $region60: #{video_depth_forward.17} parent=0 // pred_region
    _
  $region61: #{video_depth_forward.17} parent=0 // pred_fallthru
    _
  // Predicated region
  $region62: #{video_depth_forward.17} parent=0 // pred_check
    _
  $region63: #{video_depth_forward.17} parent=0 // pred_check_branch
    %567 = sbr.rel (0) target = $region65
  $region64: #{video_depth_forward.17} parent=0 // pred_region
    _
  $region65: #{video_depth_forward.17} parent=0 // pred_fallthru
    _

// kernel: video_depth_forward.29
$region0: #{video_depth_forward.29}
  #allocation0 [shape = 'u32[]', space=smem, size = 0x4, offset = 0x4, fixed_abs, tag = 'smem constant byte address 0x4 - core index']
  #allocation1 [shape = 'u32[72,128]{1,0:T(1,128)}', space=vmem, size = 0x9000, scoped, tag = 'internal scratch']
  %s0 = inlined_call_operand.vmem [shape: f32[10,32], index: 0, kind: input, shape index: {}]
  %s1 = inlined_call_operand.vmem [shape: f32[10,32], index: 1, kind: input, shape index: {}]
  %s2 = inlined_call_operand.vmem [shape: f32[10,32], index: 2, kind: input, shape index: {}]
  %s3 = inlined_call_operand.vmem [shape: f32[10,32], index: 3, kind: input, shape index: {}]
  %s4 = inlined_call_operand.vmem [shape: f32[1,32], index: 4, kind: input, shape index: {}]
  %s5 = inlined_call_operand.vmem [shape: f32[1,32], index: 5, kind: input, shape index: {}]
  %s6 = inlined_call_operand.vmem [shape: bf16[128,16], index: 6, kind: input, shape index: {}]
  %s7 = inlined_call_operand.vmem [shape: f32[1,16], index: 7, kind: input, shape index: {}]
  %s8 = inlined_call_operand.vmem [shape: f32[10,16], index: 8, kind: output, shape index: {}]
  %s9 = sld [smem:[#allocation0]]
  $region42: #{video_depth_forward.29} parent=0
    _
  %s11 = ssub.s32 1, %s9
  %s12 = scalar_select 0, %s11, %s9
  // Predicated region
  $region2: #{video_depth_forward.29} parent=0 // pred_check
    _
  $region3: #{video_depth_forward.29} parent=0 // pred_check_branch
    %14 = sbr.rel (0) target = $region5
  $region4: #{video_depth_forward.29} parent=0 // pred_region
    _
  $region5: #{video_depth_forward.29} parent=0 // pred_fallthru
    _
  // Predicated region
  $region6: #{video_depth_forward.29} parent=0 // pred_check
    _
  $region7: #{video_depth_forward.29} parent=0 // pred_check_branch
    %16 = sbr.rel (0) target = $region9
  $region8: #{video_depth_forward.29} parent=0 // pred_region
    _
  $region9: #{video_depth_forward.29} parent=0 // pred_fallthru
    _
  // Predicated region
  $region10: #{video_depth_forward.29} parent=0 // pred_check
    _
  $region11: #{video_depth_forward.29} parent=0 // pred_check_branch
    %18 = sbr.rel (0) target = $region13
  $region12: #{video_depth_forward.29} parent=0 // pred_region
    _
  $region13: #{video_depth_forward.29} parent=0 // pred_fallthru
    _
  // Predicated region
  $region14: #{video_depth_forward.29} parent=0 // pred_check
    _
  $region15: #{video_depth_forward.29} parent=0 // pred_check_branch
    %20 = sbr.rel (0) target = $region17
  $region16: #{video_depth_forward.29} parent=0 // pred_region
    _
  $region17: #{video_depth_forward.29} parent=0 // pred_fallthru
    _
  // Predicated region
  $region18: #{video_depth_forward.29} parent=0 // pred_check
    _
  $region19: #{video_depth_forward.29} parent=0 // pred_check_branch
    %22 = sbr.rel (0) target = $region21
  $region20: #{video_depth_forward.29} parent=0 // pred_region
    _
  $region21: #{video_depth_forward.29} parent=0 // pred_fallthru
    _
  // Predicated region
  $region22: #{video_depth_forward.29} parent=0 // pred_check
    _
  $region23: #{video_depth_forward.29} parent=0 // pred_check_branch
    %24 = sbr.rel (0) target = $region25
  $region24: #{video_depth_forward.29} parent=0 // pred_region
    _
  $region25: #{video_depth_forward.29} parent=0 // pred_fallthru
    _
  // Predicated region
  $region26: #{video_depth_forward.29} parent=0 // pred_check
    _
  $region27: #{video_depth_forward.29} parent=0 // pred_check_branch
    %26 = sbr.rel (0) target = $region29
  $region28: #{video_depth_forward.29} parent=0 // pred_region
    _
  $region29: #{video_depth_forward.29} parent=0 // pred_fallthru
    _
  // Predicated region
  $region30: #{video_depth_forward.29} parent=0 // pred_check
    _
  $region31: #{video_depth_forward.29} parent=0 // pred_check_branch
    %28 = sbr.rel (0) target = $region33
  $region32: #{video_depth_forward.29} parent=0 // pred_region
    _
  $region33: #{video_depth_forward.29} parent=0 // pred_fallthru
    _
  %v29 = vld [vmem:[%s4] sm:$0x1]
  %v30 = vld [vmem:[%s5] sm:$0x1]
  %v31 = vld [vmem:[%s0] sm:$0xff]
  %v32 = vld [vmem:[%s0 + $0x8] sm:$0x3]
  %vm33 = vcmask 261120
  %v34 = vsel %vm33, %v31, 0.0
  %35 = vadd.xlane.f32.xlu0 %v34
  %v36 = vpop.xlane.xlu0 %35
  %vm37 = vcmask 254976
  %v38 = vsel %vm37, %v32, 0.0
  %39 = vadd.xlane.f32.xlu0 %v38
  %v40 = vpop.xlane.xlu0 %39
  %v41 = vrcp.pop 32.0
  %v42 = vmul.f32 32.0, %v41
  %v43 = vsub.f32 1.0, %v42
  %v44 = vmul.f32 %v41, %v43
  %v45 = vadd.f32 %v41, %v44
  %vm46 = vweird.f32 %v41
  %v47 = vsel %vm46, %v41, %v45
  %v48 = vmul.f32 %v36, %v47
  %v49 = vmul.f32 %v40, %v47
  %v50 = vsub.f32 %v31, %v48
  %v51 = vsub.f32 %v32, %v49
  %v52 = vmul.f32 %v50, %v50
  %v53 = vmul.f32 %v51, %v51
  %v54 = vsel %vm33, %v52, 0.0
  %55 = vadd.xlane.f32.xlu0 %v54
  %v56 = vpop.xlane.xlu0 %55
  %v57 = vsel %vm37, %v53, 0.0
  %58 = vadd.xlane.f32.xlu0 %v57
  %v59 = vpop.xlane.xlu0 %58
  %v60 = vmul.f32 %v56, %v47
  %v61 = vmul.f32 %v59, %v47
  %v62 = vadd.f32 %v60, 1e-06
  %v63 = vadd.f32 %v61, 1e-06
  %v64 = vrsqrt.pop %v62
  %v65 = vmul.f32 %v64, %v62
  %v66 = vmul.f32 %v65, %v64
  %v67 = vmul.f32 0.5, %v66
  %v68 = vsub.f32 1.5, %v67
  %v69 = vmul.f32 %v64, %v68
  %vm70 = vweird.f32 %v62
  %vm71 = vweird.f32 %v64
  %vm72 = vmor %vm70, %vm71
  %v73 = vsel %vm72, %v64, %v69
  %v74 = vrsqrt.pop %v63
  %v75 = vmul.f32 %v74, %v63
  %v76 = vmul.f32 %v75, %v74
  %v77 = vmul.f32 0.5, %v76
  %v78 = vsub.f32 1.5, %v77
  %v79 = vmul.f32 %v74, %v78
  %vm80 = vweird.f32 %v63
  %vm81 = vweird.f32 %v74
  %vm82 = vmor %vm80, %vm81
  %v83 = vsel %vm82, %v74, %v79
  %v84 = vmul.f32 %v50, %v73
  %v85 = vmul.f32 %v51, %v83
  %v87 = vperm.slane %v29, 0
  %v89 = vmul.f32 %v84, %v87
  %v90 = vmul.f32 %v85, %v87
  %v92 = vperm.slane %v30, 0
  %v94 = vadd.f32 %v89, %v92
  %v95 = vadd.f32 %v90, %v92
  %v96 = vld [vmem:[%s1] sm:$0xff]
  %v97 = vld [vmem:[%s1 + $0x8] sm:$0x3]
  %v98 = vsel %vm33, %v96, 0.0
  %99 = vadd.xlane.f32.xlu0 %v98
  %v100 = vpop.xlane.xlu0 %99
  %v101 = vsel %vm37, %v97, 0.0
  %102 = vadd.xlane.f32.xlu0 %v101
  %v103 = vpop.xlane.xlu0 %102
  %v104 = vmul.f32 %v100, %v47
  %v105 = vmul.f32 %v103, %v47
  %v106 = vsub.f32 %v96, %v104
  %v107 = vsub.f32 %v97, %v105
  %v108 = vmul.f32 %v106, %v106
  %v109 = vmul.f32 %v107, %v107
  %v110 = vsel %vm33, %v108, 0.0
  %111 = vadd.xlane.f32.xlu0 %v110
  %v112 = vpop.xlane.xlu0 %111
  %v113 = vsel %vm37, %v109, 0.0
  %114 = vadd.xlane.f32.xlu0 %v113
  %v115 = vpop.xlane.xlu0 %114
  %v116 = vmul.f32 %v112, %v47
  %v117 = vmul.f32 %v115, %v47
  %v118 = vadd.f32 %v116, 1e-06
  %v119 = vadd.f32 %v117, 1e-06
  %v120 = vrsqrt.pop %v118
  %v121 = vmul.f32 %v120, %v118
  %v122 = vmul.f32 %v121, %v120
  %v123 = vmul.f32 0.5, %v122
  %v124 = vsub.f32 1.5, %v123
  %v125 = vmul.f32 %v120, %v124
  %vm126 = vweird.f32 %v118
  %vm127 = vweird.f32 %v120
  %vm128 = vmor %vm126, %vm127
  %v129 = vsel %vm128, %v120, %v125
  %v130 = vrsqrt.pop %v119
  %v131 = vmul.f32 %v130, %v119
  %v132 = vmul.f32 %v131, %v130
  %v133 = vmul.f32 0.5, %v132
  %v134 = vsub.f32 1.5, %v133
  %v135 = vmul.f32 %v130, %v134
  %vm136 = vweird.f32 %v119
  %vm137 = vweird.f32 %v130
  %vm138 = vmor %vm136, %vm137
  %v139 = vsel %vm138, %v130, %v135
  %v140 = vmul.f32 %v106, %v129
  %v141 = vmul.f32 %v107, %v139
  %v142 = vmul.f32 %v140, %v87
  %v143 = vmul.f32 %v141, %v87
  %v144 = vadd.f32 %v142, %v92
  %v145 = vadd.f32 %v143, %v92
  %v146 = vld [vmem:[%s2] sm:$0xff]
  %v147 = vld [vmem:[%s2 + $0x8] sm:$0x3]
  %v148 = vsel %vm33, %v146, 0.0
  %149 = vadd.xlane.f32.xlu0 %v148
  %v150 = vpop.xlane.xlu0 %149
  %v151 = vsel %vm37, %v147, 0.0
  %152 = vadd.xlane.f32.xlu0 %v151
  %v153 = vpop.xlane.xlu0 %152
  %v154 = vmul.f32 %v150, %v47
  %v155 = vmul.f32 %v153, %v47
  %v156 = vsub.f32 %v146, %v154
  %v157 = vsub.f32 %v147, %v155
  %v158 = vmul.f32 %v156, %v156
  %v159 = vmul.f32 %v157, %v157
  %v160 = vsel %vm33, %v158, 0.0
  %161 = vadd.xlane.f32.xlu0 %v160
  %v162 = vpop.xlane.xlu0 %161
  %v163 = vsel %vm37, %v159, 0.0
  %164 = vadd.xlane.f32.xlu0 %v163
  %v165 = vpop.xlane.xlu0 %164
  %v166 = vmul.f32 %v162, %v47
  %v167 = vmul.f32 %v165, %v47
  %v168 = vadd.f32 %v166, 1e-06
  %v169 = vadd.f32 %v167, 1e-06
  %v170 = vrsqrt.pop %v168
  %v171 = vmul.f32 %v170, %v168
  %v172 = vmul.f32 %v171, %v170
  %v173 = vmul.f32 0.5, %v172
  %v174 = vsub.f32 1.5, %v173
  %v175 = vmul.f32 %v170, %v174
  %vm176 = vweird.f32 %v168
  %vm177 = vweird.f32 %v170
  %vm178 = vmor %vm176, %vm177
  %v179 = vsel %vm178, %v170, %v175
  %v180 = vrsqrt.pop %v169
  %v181 = vmul.f32 %v180, %v169
  %v182 = vmul.f32 %v181, %v180
  %v183 = vmul.f32 0.5, %v182
  %v184 = vsub.f32 1.5, %v183
  %v185 = vmul.f32 %v180, %v184
  %vm186 = vweird.f32 %v169
  %vm187 = vweird.f32 %v180
  %vm188 = vmor %vm186, %vm187
  %v189 = vsel %vm188, %v180, %v185
  %v190 = vmul.f32 %v156, %v179
  %v191 = vmul.f32 %v157, %v189
  %v192 = vmul.f32 %v190, %v87
  %v193 = vmul.f32 %v191, %v87
  %v194 = vadd.f32 %v192, %v92
  %v195 = vadd.f32 %v193, %v92
  %v196 = vld [vmem:[%s3] sm:$0xff]
  %v197 = vld [vmem:[%s3 + $0x8] sm:$0x3]
  %v198 = vsel %vm33, %v196, 0.0
  %199 = vadd.xlane.f32.xlu0 %v198
  %v200 = vpop.xlane.xlu0 %199
  %v201 = vsel %vm37, %v197, 0.0
  %202 = vadd.xlane.f32.xlu0 %v201
  %v203 = vpop.xlane.xlu0 %202
  %v204 = vmul.f32 %v200, %v47
  %v205 = vmul.f32 %v203, %v47
  %v206 = vsub.f32 %v196, %v204
  %v207 = vsub.f32 %v197, %v205
  %v208 = vmul.f32 %v206, %v206
  %v209 = vmul.f32 %v207, %v207
  %v210 = vsel %vm33, %v208, 0.0
  %211 = vadd.xlane.f32.xlu0 %v210
  %v212 = vpop.xlane.xlu0 %211
  %v213 = vsel %vm37, %v209, 0.0
  %214 = vadd.xlane.f32.xlu0 %v213
  %v215 = vpop.xlane.xlu0 %214
  %v216 = vmul.f32 %v212, %v47
  %v217 = vmul.f32 %v215, %v47
  %v218 = vadd.f32 %v216, 1e-06
  %v219 = vadd.f32 %v217, 1e-06
  %v220 = vrsqrt.pop %v218
  %v221 = vmul.f32 %v220, %v218
  %v222 = vmul.f32 %v221, %v220
  %v223 = vmul.f32 0.5, %v222
  %v224 = vsub.f32 1.5, %v223
  %v225 = vmul.f32 %v220, %v224
  %vm226 = vweird.f32 %v218
  %vm227 = vweird.f32 %v220
  %vm228 = vmor %vm226, %vm227
  %v229 = vsel %vm228, %v220, %v225
  %v230 = vrsqrt.pop %v219
  %v231 = vmul.f32 %v230, %v219
  %v232 = vmul.f32 %v231, %v230
  %v233 = vmul.f32 0.5, %v232
  %v234 = vsub.f32 1.5, %v233
  %v235 = vmul.f32 %v230, %v234
  %vm236 = vweird.f32 %v219
  %vm237 = vweird.f32 %v230
  %vm238 = vmor %vm236, %vm237
  %v239 = vsel %vm238, %v230, %v235
  %v240 = vmul.f32 %v206, %v229
  %v241 = vmul.f32 %v207, %v239
  %v242 = vmul.f32 %v240, %v87
  %v243 = vmul.f32 %v241, %v87
  %v244 = vadd.f32 %v242, %v92
  %v245 = vadd.f32 %v243, %v92
  %248 = vrot.lane.b32.xlu0 %v144, 32
  %v249 = vpop.permute.xlu0 %248
  %250 = vrot.lane.b32.xlu0 %v145, 32
  %v251 = vpop.permute.xlu0 %250
  %256 = vrot.lane.b32.xlu0 %v194, 64
  %v257 = vpop.permute.xlu0 %256
  %258 = vrot.lane.b32.xlu0 %v195, 64
  %v259 = vpop.permute.xlu0 %258
  %264 = vrot.lane.b32.xlu0 %v244, 96
  %v265 = vpop.permute.xlu0 %264
  %266 = vrot.lane.b32.xlu0 %v245, 96
  %v267 = vpop.permute.xlu0 %266
  %v270 = vsel %vm33, %v94, %v249
  %v271 = vsel %vm33, %v95, %v251
  %vm272 = vcmask 523264
  %v273 = vsel %vm272, %v270, %v257
  %v274 = vsel %vm272, %v271, %v259
  %vm275 = vcmask 785408
  %v276 = vsel %vm275, %v273, %v265
  %v277 = vsel %vm275, %v274, %v267
  %v278 = vld [vmem:[%s6] sm:$0xf]
  %v279 = vld [vmem:[%s6 + $0x4] sm:$0xf]
  %v280 = vld [vmem:[%s6 + $0x8] sm:$0xf]
  %v281 = vld [vmem:[%s6 + $0xc] sm:$0xf]
  %v282 = vld [vmem:[%s6 + $0x10] sm:$0xf]
  %v283 = vld [vmem:[%s6 + $0x14] sm:$0xf]
  %v284 = vld [vmem:[%s6 + $0x18] sm:$0xf]
  %v285 = vld [vmem:[%s6 + $0x1c] sm:$0xf]
  %v286 = vld [vmem:[%s6 + $0x20] sm:$0xf]
  %v287 = vld [vmem:[%s6 + $0x24] sm:$0xf]
  %v288 = vld [vmem:[%s6 + $0x28] sm:$0xf]
  %v289 = vld [vmem:[%s6 + $0x2c] sm:$0xf]
  %v290 = vld [vmem:[%s6 + $0x30] sm:$0xf]
  %v291 = vld [vmem:[%s6 + $0x34] sm:$0xf]
  %v292 = vld [vmem:[%s6 + $0x38] sm:$0xf]
  %v293 = vld [vmem:[%s6 + $0x3c] sm:$0xf]
  %v294 = vpack.c.bf16 %v277, %v276
  %v295 = vld [vmem:[%s7] sm:$0x1]
  %v297 = vperm.slane %v295, 0
  %v315 = vunpack.c.l.b16 %v278
  %v316 = vunpack.c.l.b16 %v279
  %v317 = vunpack.c.l.b16 %v280
  %v318 = vunpack.c.l.b16 %v281
  %v319 = vunpack.c.l.b16 %v282
  %v320 = vunpack.c.l.b16 %v283
  %v321 = vunpack.c.l.b16 %v284
  %v322 = vunpack.c.l.b16 %v285
  %v323 = vunpack.c.l.b16 %v286
  %v324 = vunpack.c.l.b16 %v287
  %v325 = vunpack.c.l.b16 %v288
  %v326 = vunpack.c.l.b16 %v289
  %v327 = vunpack.c.l.b16 %v290
  %v328 = vunpack.c.l.b16 %v291
  %v329 = vunpack.c.l.b16 %v292
  %v330 = vunpack.c.l.b16 %v293
  %v331 = vpack.c.b16 %v316, %v315
  %v332 = vpack.c.b16 %v318, %v317
  %v333 = vpack.c.b16 %v320, %v319
  %v334 = vpack.c.b16 %v322, %v321
  %v335 = vpack.c.b16 %v324, %v323
  %v336 = vpack.c.b16 %v326, %v325
  %v337 = vpack.c.b16 %v328, %v327
  %v338 = vpack.c.b16 %v330, %v329
  %347 = vmatpush.bf16.msra.mxu0 %v338
  %348 = vmatpush.bf16.msra.mxu0 %v337
  %349 = vmatpush.bf16.msra.mxu0 %v336
  %350 = vmatpush.bf16.msra.mxu0 %v335
  %351 = vmatpush.bf16.msra.mxu0 %v334
  %352 = vmatpush.bf16.msra.mxu0 %v333
  %353 = vmatpush.bf16.msra.mxu0 %v332
  %354 = vmatpush.bf16.msra.mxu0 %v331
  %355 = vmatmul.bf16.gmra.mxu0 %v294
  %v356 = vpop.f32.mrf.mxu0
  %v357 = vadd.f32 %v297, %v356
  %v358 = vpop.f32.mrf.mxu0
  %v359 = vadd.f32 %v297, %v358
  %360 = vdwg.mxu0
  %vm361 = vcmask 130048
  %362 = vst.msk [vmem:[%s8] sm:$0xff] %vm361, %v357
  %vm363 = vcmask 123904
  %364 = vst.msk [vmem:[%s8 + $0x8] sm:$0x3] %vm363, %v359
  // Predicated region
  $region34: #{video_depth_forward.29} parent=0 // pred_check
    _
  $region35: #{video_depth_forward.29} parent=0 // pred_check_branch
    %366 = sbr.rel (0) target = $region37
  $region36: #{video_depth_forward.29} parent=0 // pred_region
    _
  $region37: #{video_depth_forward.29} parent=0 // pred_fallthru
    _
  // Predicated region
  $region38: #{video_depth_forward.29} parent=0 // pred_check
    _
  $region39: #{video_depth_forward.29} parent=0 // pred_check_branch
    %368 = sbr.rel (0) target = $region41
  $region40: #{video_depth_forward.29} parent=0 // pred_region
    _
  $region41: #{video_depth_forward.29} parent=0 // pred_fallthru
    _

// kernel: video_depth_forward.30
$region0: #{video_depth_forward.30}
  #allocation0 [shape = 'u32[]', space=smem, size = 0x4, offset = 0x4, fixed_abs, tag = 'smem constant byte address 0x4 - core index']
  #allocation1 [shape = 'u32[72,128]{1,0:T(1,128)}', space=vmem, size = 0x9000, scoped, tag = 'internal scratch']
  %s0 = inlined_call_operand.vmem [shape: f32[10,16], index: 0, kind: input, shape index: {}]
  %s1 = inlined_call_operand.vmem [shape: f32[10,10], index: 1, kind: input, shape index: {}]
  %s2 = inlined_call_operand.vmem [shape: f32[1,16], index: 2, kind: input, shape index: {}]
  %s3 = inlined_call_operand.vmem [shape: f32[1,16], index: 3, kind: input, shape index: {}]
  %s4 = inlined_call_operand.vmem [shape: bf16[16,48], index: 4, kind: input, shape index: {}]
  %s5 = inlined_call_operand.vmem [shape: f32[1,48], index: 5, kind: input, shape index: {}]
  %s6 = inlined_call_operand.vmem [shape: bf16[16,16], index: 6, kind: input, shape index: {}]
  %s7 = inlined_call_operand.vmem [shape: f32[1,16], index: 7, kind: input, shape index: {}]
  %s8 = inlined_call_operand.vmem [shape: f32[10,16], index: 8, kind: output, shape index: {}]
  %s9 = sld [smem:[#allocation0]]
  $region42: #{video_depth_forward.30} parent=0
    _
  %s11 = ssub.s32 1, %s9
  %s12 = scalar_select 0, %s11, %s9
  // Predicated region
  $region2: #{video_depth_forward.30} parent=0 // pred_check
    _
  $region3: #{video_depth_forward.30} parent=0 // pred_check_branch
    %14 = sbr.rel (0) target = $region5
  $region4: #{video_depth_forward.30} parent=0 // pred_region
    _
  $region5: #{video_depth_forward.30} parent=0 // pred_fallthru
    _
  // Predicated region
  $region6: #{video_depth_forward.30} parent=0 // pred_check
    _
  $region7: #{video_depth_forward.30} parent=0 // pred_check_branch
    %16 = sbr.rel (0) target = $region9
  $region8: #{video_depth_forward.30} parent=0 // pred_region
    _
  $region9: #{video_depth_forward.30} parent=0 // pred_fallthru
    _
  // Predicated region
  $region10: #{video_depth_forward.30} parent=0 // pred_check
    _
  $region11: #{video_depth_forward.30} parent=0 // pred_check_branch
    %18 = sbr.rel (0) target = $region13
  $region12: #{video_depth_forward.30} parent=0 // pred_region
    _
  $region13: #{video_depth_forward.30} parent=0 // pred_fallthru
    _
  // Predicated region
  $region14: #{video_depth_forward.30} parent=0 // pred_check
    _
  $region15: #{video_depth_forward.30} parent=0 // pred_check_branch
    %20 = sbr.rel (0) target = $region17
  $region16: #{video_depth_forward.30} parent=0 // pred_region
    _
  $region17: #{video_depth_forward.30} parent=0 // pred_fallthru
    _
  // Predicated region
  $region18: #{video_depth_forward.30} parent=0 // pred_check
    _
  $region19: #{video_depth_forward.30} parent=0 // pred_check_branch
    %22 = sbr.rel (0) target = $region21
  $region20: #{video_depth_forward.30} parent=0 // pred_region
    _
  $region21: #{video_depth_forward.30} parent=0 // pred_fallthru
    _
  // Predicated region
  $region22: #{video_depth_forward.30} parent=0 // pred_check
    _
  $region23: #{video_depth_forward.30} parent=0 // pred_check_branch
    %24 = sbr.rel (0) target = $region25
  $region24: #{video_depth_forward.30} parent=0 // pred_region
    _
  $region25: #{video_depth_forward.30} parent=0 // pred_fallthru
    _
  // Predicated region
  $region26: #{video_depth_forward.30} parent=0 // pred_check
    _
  $region27: #{video_depth_forward.30} parent=0 // pred_check_branch
    %26 = sbr.rel (0) target = $region29
  $region28: #{video_depth_forward.30} parent=0 // pred_region
    _
  $region29: #{video_depth_forward.30} parent=0 // pred_fallthru
    _
  // Predicated region
  $region30: #{video_depth_forward.30} parent=0 // pred_check
    _
  $region31: #{video_depth_forward.30} parent=0 // pred_check_branch
    %28 = sbr.rel (0) target = $region33
  $region32: #{video_depth_forward.30} parent=0 // pred_region
    _
  $region33: #{video_depth_forward.30} parent=0 // pred_fallthru
    _
  %v30 = vld [vmem:[%s0] sm:$0xff]
  %v31 = vld [vmem:[%s0 + $0x8] sm:$0x3]
  %v32 = vld [vmem:[%s2] sm:$0x1]
  %v33 = vld [vmem:[%s3] sm:$0x1]
  %vm34 = vcmask 130048
  %v35 = vsel %vm34, %v30, 0.0
  %36 = vadd.xlane.f32.xlu0 %v35
  %v37 = vpop.xlane.xlu0 %36
  %vm38 = vcmask 123904
  %v39 = vsel %vm38, %v31, 0.0
  %40 = vadd.xlane.f32.xlu0 %v39
  %v41 = vpop.xlane.xlu0 %40
  %v42 = vrcp.pop 16.0
  %v43 = vmul.f32 16.0, %v42
  %v44 = vsub.f32 1.0, %v43
  %v45 = vmul.f32 %v42, %v44
  %v46 = vadd.f32 %v42, %v45
  %vm47 = vweird.f32 %v42
  %v48 = vsel %vm47, %v42, %v46
  %v49 = vmul.f32 %v37, %v48
  %v50 = vmul.f32 %v41, %v48
  %v51 = vsub.f32 %v30, %v49
  %v52 = vsub.f32 %v31, %v50
  %v53 = vmul.f32 %v51, %v51
  %v54 = vmul.f32 %v52, %v52
  %v55 = vsel %vm34, %v53, 0.0
  %56 = vadd.xlane.f32.xlu0 %v55
  %v57 = vpop.xlane.xlu0 %56
  %v58 = vsel %vm38, %v54, 0.0
  %59 = vadd.xlane.f32.xlu0 %v58
  %v60 = vpop.xlane.xlu0 %59
  %v61 = vmul.f32 %v57, %v48
  %v62 = vmul.f32 %v60, %v48
  %v63 = vadd.f32 %v61, 1e-06
  %v64 = vadd.f32 %v62, 1e-06
  %v65 = vrsqrt.pop %v63
  %v66 = vmul.f32 %v65, %v63
  %v67 = vmul.f32 %v66, %v65
  %v68 = vmul.f32 0.5, %v67
  %v69 = vsub.f32 1.5, %v68
  %v70 = vmul.f32 %v65, %v69
  %vm71 = vweird.f32 %v63
  %vm72 = vweird.f32 %v65
  %vm73 = vmor %vm71, %vm72
  %v74 = vsel %vm73, %v65, %v70
  %v75 = vrsqrt.pop %v64
  %v76 = vmul.f32 %v75, %v64
  %v77 = vmul.f32 %v76, %v75
  %v78 = vmul.f32 0.5, %v77
  %v79 = vsub.f32 1.5, %v78
  %v80 = vmul.f32 %v75, %v79
  %vm81 = vweird.f32 %v64
  %vm82 = vweird.f32 %v75
  %vm83 = vmor %vm81, %vm82
  %v84 = vsel %vm83, %v75, %v80
  %v85 = vmul.f32 %v51, %v74
  %v86 = vmul.f32 %v52, %v84
  %v88 = vperm.slane %v32, 0
  %v90 = vmul.f32 %v85, %v88
  %v91 = vmul.f32 %v86, %v88
  %v93 = vperm.slane %v33, 0
  %v95 = vadd.f32 %v90, %v93
  %v96 = vadd.f32 %v91, %v93
  %v97 = vld [vmem:[%s4] sm:$0xf]
  %v98 = vld [vmem:[%s4 + $0x4] sm:$0xf]
  %v99 = vpack.c.bf16 %v96, %v95
  %v100 = vld [vmem:[%s5] sm:$0x1]
  %v102 = vperm.slane %v100, 0
  %v106 = vunpack.c.l.b16 %v97
  %v107 = vunpack.c.l.b16 %v98
  %v108 = vpack.c.b16 %v107, %v106
  %v111 = vsel %vm34, %v99, 0
  %113 = vmatpush.bf16.msra.mxu0 0
  %114 = vmatpush.bf16.msra.mxu0 0
  %115 = vmatpush.bf16.msra.mxu0 0
  %116 = vmatpush.bf16.msra.mxu0 0
  %117 = vmatpush.bf16.msra.mxu0 0
  %118 = vmatpush.bf16.msra.mxu0 0
  %119 = vmatpush.bf16.msra.mxu0 0
  %120 = vmatpush.bf16.msra.mxu0 %v108
  %121 = vmatmul.bf16.gmra.mxu0 %v111
  %v122 = vpop.f32.mrf.mxu0
  %v123 = vadd.f32 %v102, %v122
  %v124 = vpop.f32.mrf.mxu0
  %v125 = vadd.f32 %v102, %v124
  %126 = vdwg.mxu0
  %v127 = vld [vmem:[%s1] sm:$0xff]
  %v128 = vld [vmem:[%s1 + $0x8] sm:$0x3]
  %v129 = vld [vmem:[%s6] sm:$0xf]
  %v130 = vld [vmem:[%s6 + $0x4] sm:$0xf]
  %v131 = vpack.c.bf16 %v125, %v123
  %133 = vrot.lane.b32.xlu0 %v131, 112
  %v134 = vpop.permute.xlu0 %133
  %vm135 = vcmask 64512
  %v137 = vsel %vm135, %v131, 0
  %v140 = vsel %vm135, %v134, 0
  %142 = vmatpush.bf16.xpose.msra.mxu0 0
  %143 = vmatpush.bf16.xpose.msra.mxu0 0
  %144 = vmatpush.bf16.xpose.msra.mxu0 0
  %145 = vmatpush.bf16.xpose.msra.mxu0 0
  %146 = vmatpush.bf16.xpose.msra.mxu0 0
  %147 = vmatpush.bf16.xpose.msra.mxu0 0
  %148 = vmatpush.bf16.xpose.msra.mxu0 0
  %149 = vmatpush.bf16.xpose.msra.mxu0 %v140
  %150 = vmatmul.bf16.gmra.mxu0 %v137
  %v151 = vpop.f32.mrf.mxu0
  %v152 = vadd.f32 0.0, %v151
  %v153 = vpop.f32.mrf.mxu0
  %v154 = vadd.f32 0.0, %v153
  %155 = vdwg.mxu0
  %v156 = vmul.f32 %v152, 0.35355338
  %v157 = vmul.f32 %v154, 0.35355338
  %v158 = vadd.f32 %v156, %v127
  %v159 = vadd.f32 %v157, %v128
  %vm160 = vcmask 80896
  %v161 = vsel %vm160, %v158, -inf
  %162 = vmax.xlane.f32.xlu0 %v161
  %v163 = vpop.xlane.xlu0 %162
  %vm164 = vcmask 74752
  %v165 = vsel %vm164, %v159, -inf
  %166 = vmax.xlane.f32.xlu0 %v165
  %v167 = vpop.xlane.xlu0 %166
  %v168 = vsub.f32 %v158, %v163
  %v169 = vsub.f32 %v159, %v167
  %v170 = vmul.f32 %v168, 1.442695
  %v171 = vpow.pop %v170
  %v172 = vmul.f32 %v169, 1.442695
  %v173 = vpow.pop %v172
  %v174 = vsel %vm160, %v171, 0.0
  %175 = vadd.xlane.f32.xlu0 %v174
  %v176 = vpop.xlane.xlu0 %175
  %v177 = vsel %vm164, %v173, 0.0
  %178 = vadd.xlane.f32.xlu0 %v177
  %v179 = vpop.xlane.xlu0 %178
  %v180 = vrcp.pop %v176
  %v181 = vrcp.pop %v179
  %v182 = vmul.f32 %v171, %v180
  %v183 = vmul.f32 %v173, %v181
  %v184 = vpack.c.bf16 %v183, %v182
  %185 = vrot.lane.b32.xlu0 %v131, 96
  %v186 = vpop.permute.xlu0 %185
  %v188 = vsel %vm160, %v184, 0
  %vm190 = vcmask 1044480
  %v192 = vsel %vm190, %v186, 0
  %194 = vmatpush.bf16.msra.mxu0 0
  %195 = vmatpush.bf16.msra.mxu0 0
  %196 = vmatpush.bf16.msra.mxu0 0
  %197 = vmatpush.bf16.msra.mxu0 0
  %198 = vmatpush.bf16.msra.mxu0 0
  %199 = vmatpush.bf16.msra.mxu0 0
  %200 = vmatpush.bf16.msra.mxu0 0
  %201 = vmatpush.bf16.msra.mxu0 %v192
  %202 = vmatmul.bf16.gmra.mxu0 %v188
  %v203 = vpop.f32.mrf.mxu0
  %v204 = vadd.f32 0.0, %v203
  %v205 = vpop.f32.mrf.mxu0
  %v206 = vadd.f32 0.0, %v205
  %207 = vdwg.mxu0
  %v208 = vpack.c.bf16 %v206, %v204
  %209 = vrot.lane.b32.xlu0 %v131, 120
  %v210 = vpop.permute.xlu0 %209
  %211 = vrot.lane.b32.xlu0 %v131, 104
  %v212 = vpop.permute.xlu0 %211
  %v214 = vsel %vm135, %v210, 0
  %v217 = vsel %vm135, %v212, 0
  %219 = vmatpush.bf16.xpose.msra.mxu0 0
  %220 = vmatpush.bf16.xpose.msra.mxu0 0
  %221 = vmatpush.bf16.xpose.msra.mxu0 0
  %222 = vmatpush.bf16.xpose.msra.mxu0 0
  %223 = vmatpush.bf16.xpose.msra.mxu0 0
  %224 = vmatpush.bf16.xpose.msra.mxu0 0
  %225 = vmatpush.bf16.xpose.msra.mxu0 0
  %226 = vmatpush.bf16.xpose.msra.mxu0 %v217
  %227 = vmatmul.bf16.gmra.mxu0 %v214
  %v228 = vpop.f32.mrf.mxu0
  %v229 = vadd.f32 0.0, %v228
  %v230 = vpop.f32.mrf.mxu0
  %v231 = vadd.f32 0.0, %v230
  %232 = vdwg.mxu0
  %v233 = vmul.f32 %v229, 0.35355338
  %v234 = vmul.f32 %v231, 0.35355338
  %v235 = vadd.f32 %v233, %v127
  %v236 = vadd.f32 %v234, %v128
  %v237 = vsel %vm160, %v235, -inf
  %238 = vmax.xlane.f32.xlu0 %v237
  %v239 = vpop.xlane.xlu0 %238
  %v240 = vsel %vm164, %v236, -inf
  %241 = vmax.xlane.f32.xlu0 %v240
  %v242 = vpop.xlane.xlu0 %241
  %v243 = vsub.f32 %v235, %v239
  %v244 = vsub.f32 %v236, %v242
  %v245 = vmul.f32 %v243, 1.442695
  %v246 = vpow.pop %v245
  %v247 = vmul.f32 %v244, 1.442695
  %v248 = vpow.pop %v247
  %v249 = vsel %vm160, %v246, 0.0
  %250 = vadd.xlane.f32.xlu0 %v249
  %v251 = vpop.xlane.xlu0 %250
  %v252 = vsel %vm164, %v248, 0.0
  %253 = vadd.xlane.f32.xlu0 %v252
  %v254 = vpop.xlane.xlu0 %253
  %v255 = vrcp.pop %v251
  %v256 = vrcp.pop %v254
  %v257 = vmul.f32 %v246, %v255
  %v258 = vmul.f32 %v248, %v256
  %v259 = vpack.c.bf16 %v258, %v257
  %260 = vrot.lane.b32.xlu0 %v131, 88
  %v261 = vpop.permute.xlu0 %260
  %v263 = vsel %vm160, %v259, 0
  %v266 = vsel %vm190, %v261, 0
  %268 = vmatpush.bf16.msra.mxu0 0
  %269 = vmatpush.bf16.msra.mxu0 0
  %270 = vmatpush.bf16.msra.mxu0 0
  %271 = vmatpush.bf16.msra.mxu0 0
  %272 = vmatpush.bf16.msra.mxu0 0
  %273 = vmatpush.bf16.msra.mxu0 0
  %274 = vmatpush.bf16.msra.mxu0 0
  %275 = vmatpush.bf16.msra.mxu0 %v266
  %276 = vmatmul.bf16.gmra.mxu0 %v263
  %v277 = vpop.f32.mrf.mxu0
  %v278 = vadd.f32 0.0, %v277
  %v279 = vpop.f32.mrf.mxu0
  %v280 = vadd.f32 0.0, %v279
  %281 = vdwg.mxu0
  %v282 = vpack.c.bf16 %v280, %v278
  %v284 = vsel %vm135, %v282, 0
  %vm286 = vcmask 1043456
  %v288 = vsel %vm286, %v130, 0
  %290 = vmatpush.bf16.msra.mxu0 0
  %291 = vmatpush.bf16.msra.mxu0 0
  %292 = vmatpush.bf16.msra.mxu0 0
  %293 = vmatpush.bf16.msra.mxu0 0
  %294 = vmatpush.bf16.msra.mxu0 0
  %295 = vmatpush.bf16.msra.mxu0 0
  %296 = vmatpush.bf16.msra.mxu0 0
  %297 = vmatpush.bf16.msra.mxu0 %v288
  %298 = vmatmul.bf16.gmra.mxu0 %v284
  %v299 = vpop.f32.mrf.mxu0
  %v300 = vadd.f32 0.0, %v299
  %v301 = vpop.f32.mrf.mxu0
  %v302 = vadd.f32 0.0, %v301
  %303 = vdwg.mxu0
  %v305 = vsel %vm135, %v208, 0
  %v308 = vsel %vm286, %v129, 0
  %310 = vmatpush.bf16.msra.mxu0 0
  %311 = vmatpush.bf16.msra.mxu0 0
  %312 = vmatpush.bf16.msra.mxu0 0
  %313 = vmatpush.bf16.msra.mxu0 0
  %314 = vmatpush.bf16.msra.mxu0 0
  %315 = vmatpush.bf16.msra.mxu0 0
  %316 = vmatpush.bf16.msra.mxu0 0
  %317 = vmatpush.bf16.msra.mxu0 %v308
  %318 = vmatmul.bf16.gmra.mxu0 %v305
  %v319 = vpop.f32.mrf.mxu0
  %v320 = vadd.f32 %v300, %v319
  %v321 = vpop.f32.mrf.mxu0
  %v322 = vadd.f32 %v302, %v321
  %323 = vdwg.mxu0
  %v324 = vadd.f32 %v30, %v320
  %v325 = vadd.f32 %v31, %v322
  %v326 = vld [vmem:[%s7] sm:$0x1]
  %v328 = vperm.slane %v326, 0
  %v330 = vadd.f32 %v324, %v328
  %v331 = vadd.f32 %v325, %v328
  %332 = vst.msk [vmem:[%s8] sm:$0xff] %vm34, %v330
  %333 = vst.msk [vmem:[%s8 + $0x8] sm:$0x3] %vm38, %v331
  // Predicated region
  $region34: #{video_depth_forward.30} parent=0 // pred_check
    _
  $region35: #{video_depth_forward.30} parent=0 // pred_check_branch
    %335 = sbr.rel (0) target = $region37
  $region36: #{video_depth_forward.30} parent=0 // pred_region
    _
  $region37: #{video_depth_forward.30} parent=0 // pred_fallthru
    _
  // Predicated region
  $region38: #{video_depth_forward.30} parent=0 // pred_check
    _
  $region39: #{video_depth_forward.30} parent=0 // pred_check_branch
    %337 = sbr.rel (0) target = $region41
  $region40: #{video_depth_forward.30} parent=0 // pred_region
    _
  $region41: #{video_depth_forward.30} parent=0 // pred_fallthru
    _

// kernel: video_depth_forward.31
$region0: #{video_depth_forward.31}
  #allocation0 [shape = 'u32[]', space=smem, size = 0x4, offset = 0x4, fixed_abs, tag = 'smem constant byte address 0x4 - core index']
  #allocation1 [shape = 'u32[72,128]{1,0:T(1,128)}', space=vmem, size = 0x9000, scoped, tag = 'internal scratch']
  #allocation2 [shape = 'f32[1,1]{1,0:T(1,128)S(1)}', space=vmem, size = 0x200, scoped, tag = 'scoped memory for video_depth_forward.31']
  %s0 = inlined_call_operand.vmem [shape: f32[10,16], index: 0, kind: input, shape index: {}]
  %s1 = inlined_call_operand.vmem [shape: bf16[16,8], index: 1, kind: input, shape index: {}]
  %s2 = inlined_call_operand.vmem [shape: f32[1,8], index: 2, kind: input, shape index: {}]
  %s3 = inlined_call_operand.vmem [shape: bf16[8,8], index: 3, kind: input, shape index: {}]
  %s4 = inlined_call_operand.vmem [shape: f32[1,8], index: 4, kind: input, shape index: {}]
  %s5 = inlined_call_operand.vmem [shape: f32[1,8], index: 5, kind: input, shape index: {}]
  %s6 = inlined_call_operand.<no memory space> [shape: f32[1,1], index: 6, kind: input, shape index: {}]
  %s7 = inlined_call_operand.vmem [shape: f32[5,784], index: 7, kind: input, shape index: {}]
  %s8 = inlined_call_operand.vmem [shape: f32[2,784], index: 8, kind: output, shape index: {}]
  %s9 = sld [smem:[#allocation0]]
  $region42: #{video_depth_forward.31} parent=0
    _
  %s11 = ssub.s32 1, %s9
  %s12 = scalar_select 0, %s11, %s9
  %v13 = vstv %s6
  %14 = vst [vmem:[#allocation2] sm:$0x1] %v13
  // Predicated region
  $region2: #{video_depth_forward.31} parent=0 // pred_check
    _
  $region3: #{video_depth_forward.31} parent=0 // pred_check_branch
    %16 = sbr.rel (0) target = $region5
  $region4: #{video_depth_forward.31} parent=0 // pred_region
    _
  $region5: #{video_depth_forward.31} parent=0 // pred_fallthru
    _
  // Predicated region
  $region6: #{video_depth_forward.31} parent=0 // pred_check
    _
  $region7: #{video_depth_forward.31} parent=0 // pred_check_branch
    %18 = sbr.rel (0) target = $region9
  $region8: #{video_depth_forward.31} parent=0 // pred_region
    _
  $region9: #{video_depth_forward.31} parent=0 // pred_fallthru
    _
  // Predicated region
  $region10: #{video_depth_forward.31} parent=0 // pred_check
    _
  $region11: #{video_depth_forward.31} parent=0 // pred_check_branch
    %20 = sbr.rel (0) target = $region13
  $region12: #{video_depth_forward.31} parent=0 // pred_region
    _
  $region13: #{video_depth_forward.31} parent=0 // pred_fallthru
    _
  // Predicated region
  $region14: #{video_depth_forward.31} parent=0 // pred_check
    _
  $region15: #{video_depth_forward.31} parent=0 // pred_check_branch
    %22 = sbr.rel (0) target = $region17
  $region16: #{video_depth_forward.31} parent=0 // pred_region
    _
  $region17: #{video_depth_forward.31} parent=0 // pred_fallthru
    _
  // Predicated region
  $region18: #{video_depth_forward.31} parent=0 // pred_check
    _
  $region19: #{video_depth_forward.31} parent=0 // pred_check_branch
    %24 = sbr.rel (0) target = $region21
  $region20: #{video_depth_forward.31} parent=0 // pred_region
    _
  $region21: #{video_depth_forward.31} parent=0 // pred_fallthru
    _
  // Predicated region
  $region22: #{video_depth_forward.31} parent=0 // pred_check
    _
  $region23: #{video_depth_forward.31} parent=0 // pred_check_branch
    %26 = sbr.rel (0) target = $region25
  $region24: #{video_depth_forward.31} parent=0 // pred_region
    _
  $region25: #{video_depth_forward.31} parent=0 // pred_fallthru
    _
  // Predicated region
  $region26: #{video_depth_forward.31} parent=0 // pred_check
    _
  $region27: #{video_depth_forward.31} parent=0 // pred_check_branch
    %28 = sbr.rel (0) target = $region29
  $region28: #{video_depth_forward.31} parent=0 // pred_region
    _
  $region29: #{video_depth_forward.31} parent=0 // pred_fallthru
    _
  // Predicated region
  $region30: #{video_depth_forward.31} parent=0 // pred_check
    _
  $region31: #{video_depth_forward.31} parent=0 // pred_check_branch
    %30 = sbr.rel (0) target = $region33
  $region32: #{video_depth_forward.31} parent=0 // pred_region
    _
  $region33: #{video_depth_forward.31} parent=0 // pred_fallthru
    _
  %v32 = vld [vmem:[%s0] sm:$0xff]
  %v33 = vld [vmem:[%s0 + $0x8] sm:$0x3]
  %v34 = vld [vmem:[%s1] sm:$0xf]
  %v35 = vld [vmem:[%s1 + $0x4] sm:$0xf]
  %v36 = vpack.c.bf16 %v33, %v32
  %v37 = vld [vmem:[%s2] sm:$0x1]
  %v39 = vperm.slane %v37, 0
  %v43 = vunpack.c.l.b16 %v34
  %v44 = vunpack.c.l.b16 %v35
  %v45 = vpack.c.b16 %v44, %v43
  %vm47 = vcmask 130048
  %v49 = vsel %vm47, %v36, 0
  %51 = vmatpush.bf16.msra.mxu0 0
  %52 = vmatpush.bf16.msra.mxu0 0
  %53 = vmatpush.bf16.msra.mxu0 0
  %54 = vmatpush.bf16.msra.mxu0 0
  %55 = vmatpush.bf16.msra.mxu0 0
  %56 = vmatpush.bf16.msra.mxu0 0
  %57 = vmatpush.bf16.msra.mxu0 0
  %58 = vmatpush.bf16.msra.mxu0 %v45
  %59 = vmatmul.bf16.gmra.mxu0 %v49
  %v60 = vpop.f32.mrf.mxu0
  %v61 = vadd.f32 %v39, %v60
  %v62 = vpop.f32.mrf.mxu0
  %v63 = vadd.f32 %v39, %v62
  %64 = vdwg.mxu0
  %v65 = vld [vmem:[%s3] sm:$0xf]
  %v66 = vpack.c.bf16 %v63, %v61
  %v67 = vld [vmem:[%s4] sm:$0x1]
  %v69 = vperm.slane %v67, 0
  %vm71 = vcmask 64512
  %v73 = vsel %vm71, %v66, 0
  %vm75 = vcmask 1043456
  %v77 = vsel %vm75, %v65, 0
  %79 = vmatpush.bf16.msra.mxu0 0
  %80 = vmatpush.bf16.msra.mxu0 0
  %81 = vmatpush.bf16.msra.mxu0 0
  %82 = vmatpush.bf16.msra.mxu0 0
  %83 = vmatpush.bf16.msra.mxu0 0
  %84 = vmatpush.bf16.msra.mxu0 0
  %85 = vmatpush.bf16.msra.mxu0 0
  %86 = vmatpush.bf16.msra.mxu0 %v77
  %87 = vmatmul.bf16.gmra.mxu0 %v73
  %v88 = vpop.f32.mrf.mxu0
  %v89 = vadd.f32 %v69, %v88
  %v90 = vpop.f32.mrf.mxu0
  %v91 = vadd.f32 %v69, %v90
  %92 = vdwg.mxu0
  %v93 = vmax.f32 %v89, 0.0
  %v94 = vmax.f32 %v91, 0.0
  %v95 = vld [vmem:[%s5] sm:$0x1]
  %v97 = vperm.slane %v95, 0
  %v99 = vmul.f32 %v93, %v97
  %v100 = vmul.f32 %v94, %v97
  %v101 = vsel %vm71, %v99, 0.0
  %102 = vadd.xlane.f32.xlu0 %v101
  %v103 = vpop.xlane.xlu0 %102
  %vm104 = vcmask 58368
  %v105 = vsel %vm104, %v100, 0.0
  %106 = vadd.xlane.f32.xlu0 %v105
  %v107 = vpop.xlane.xlu0 %106
  %v108 = vld [vmem:[#allocation2] sm:$0x1]
  %v110 = vperm.slane %v108, 0
  %v112 = vadd.f32 %v103, %v110
  %v113 = vadd.f32 %v107, %v110
  %v114 = vmax.f32 %v112, 0.0
  %v115 = vmax.f32 %v113, 0.0
  %v116 = vld [vmem:[%s7] sm:$0x1f]
  %v117 = vld [vmem:[%s7 + $0x8] sm:$0x1f]
  %v118 = vld [vmem:[%s7 + $0x10] sm:$0x1f]
  %v119 = vld [vmem:[%s7 + $0x18] sm:$0x1f]
  %v120 = vld [vmem:[%s7 + $0x20] sm:$0x1f]
  %v121 = vld [vmem:[%s7 + $0x28] sm:$0x1f]
  %v122 = vld [vmem:[%s7 + $0x30] sm:$0x1f]
  %124 = vset.pattern.permute.xlu0 0
  %125 = vperm.xlu0 %124, %v114
  %v126 = vpop.permute.xlu0 %125
  %v128 = vmul.f32 %v126, %v116
  %v129 = vmul.f32 %v126, %v117
  %v130 = vmul.f32 %v126, %v118
  %v131 = vmul.f32 %v126, %v119
  %v132 = vmul.f32 %v126, %v120
  %v133 = vmul.f32 %v126, %v121
  %v134 = vmul.f32 %v126, %v122
  %vm135 = vcmask 1044480
  %v136 = vsel %vm135, %v128, 0.0
  %v137 = vrot.slane %v136, 4
  %v138 = vadd.f32 %v136, %v137
  %v139 = vrot.slane %v138, 2
  %v140 = vadd.f32 %v138, %v139
  %v141 = vrot.slane %v140, 1
  %v142 = vadd.f32 %v140, %v141
  %v143 = vsel %vm135, %v129, 0.0
  %v144 = vrot.slane %v143, 4
  %v145 = vadd.f32 %v143, %v144
  %v146 = vrot.slane %v145, 2
  %v147 = vadd.f32 %v145, %v146
  %v148 = vrot.slane %v147, 1
  %v149 = vadd.f32 %v147, %v148
  %v150 = vsel %vm135, %v130, 0.0
  %v151 = vrot.slane %v150, 4
  %v152 = vadd.f32 %v150, %v151
  %v153 = vrot.slane %v152, 2
  %v154 = vadd.f32 %v152, %v153
  %v155 = vrot.slane %v154, 1
  %v156 = vadd.f32 %v154, %v155
  %v157 = vsel %vm135, %v131, 0.0
  %v158 = vrot.slane %v157, 4
  %v159 = vadd.f32 %v157, %v158
  %v160 = vrot.slane %v159, 2
  %v161 = vadd.f32 %v159, %v160
  %v162 = vrot.slane %v161, 1
  %v163 = vadd.f32 %v161, %v162
  %v164 = vsel %vm135, %v132, 0.0
  %v165 = vrot.slane %v164, 4
  %v166 = vadd.f32 %v164, %v165
  %v167 = vrot.slane %v166, 2
  %v168 = vadd.f32 %v166, %v167
  %v169 = vrot.slane %v168, 1
  %v170 = vadd.f32 %v168, %v169
  %v171 = vsel %vm135, %v133, 0.0
  %v172 = vrot.slane %v171, 4
  %v173 = vadd.f32 %v171, %v172
  %v174 = vrot.slane %v173, 2
  %v175 = vadd.f32 %v173, %v174
  %v176 = vrot.slane %v175, 1
  %v177 = vadd.f32 %v175, %v176
  %vm178 = vcmask 126976
  %v179 = vsel %vm178, %v134, 0.0
  %v180 = vrot.slane %v179, 4
  %v181 = vadd.f32 %v179, %v180
  %v182 = vrot.slane %v181, 2
  %v183 = vadd.f32 %v181, %v182
  %v184 = vrot.slane %v183, 1
  %v185 = vadd.f32 %v183, %v184
  %v186 = vmax.f32 %v142, 0.0
  %v187 = vmax.f32 %v149, 0.0
  %v188 = vmax.f32 %v156, 0.0
  %v189 = vmax.f32 %v163, 0.0
  %v190 = vmax.f32 %v170, 0.0
  %v191 = vmax.f32 %v177, 0.0
  %v192 = vmax.f32 %v185, 0.0
  %v200 = vrot.slane %v187, 7
  %v201 = vrot.slane %v188, 6
  %v202 = vrot.slane %v189, 5
  %v203 = vrot.slane %v190, 4
  %v204 = vrot.slane %v191, 3
  %v205 = vrot.slane %v192, 2
  %vm206 = vcmask 1040384
  %v207 = vsel %vm206, %v186, %v200
  %vm208 = vcmask 1042434
  %v209 = vsel %vm208, %v201, %v202
  %vm210 = vcmask 1041408
  %v211 = vsel %vm210, %v207, %v209
  %vm212 = vcmask 1044484
  %v213 = vsel %vm212, %v203, %v204
  %vm214 = vcmask 1045508
  %v215 = vsel %vm214, %v213, %v205
  %v216 = vsel %vm75, %v211, %v215
  %v218 = vlaneseq
  %vm219 = vcmp.ge.s32.totalorder %v218, 0
  %vm220 = vcmp.lt.s32.totalorder %v218, 784
  %vm221 = vmand %vm219, %vm220
  %222 = vst.msk [vmem:[%s8] ss:$2 sm:$0x7f] %vm221, %v216
  %224 = vset.pattern.permute.xlu0 0
  %225 = vperm.xlu0 %224, %v115
  %v226 = vpop.permute.xlu0 %225
  %v235 = vrot.slane %v116, 3
  %v236 = vrot.slane %v117, 3
  %v237 = vrot.slane %v118, 3
  %v238 = vrot.slane %v119, 3
  %v239 = vrot.slane %v120, 3
  %v240 = vrot.slane %v121, 3
  %v241 = vrot.slane %v122, 3
  %v249 = vmul.f32 %v126, %v235
  %v250 = vmul.f32 %v126, %v236
  %v251 = vmul.f32 %v126, %v237
  %v252 = vmul.f32 %v126, %v238
  %v253 = vmul.f32 %v126, %v239
  %v254 = vmul.f32 %v126, %v240
  %v255 = vmul.f32 %v126, %v241
  %v256 = vmul.f32 %v226, %v235
  %v257 = vmul.f32 %v226, %v236
  %v258 = vmul.f32 %v226, %v237
  %v259 = vmul.f32 %v226, %v238
  %v260 = vmul.f32 %v226, %v239
  %v261 = vmul.f32 %v226, %v240
  %v262 = vmul.f32 %v226, %v241
  %vm277 = vcmask 1042432
  %v278 = vrot.slane %v249, 5
  %v279 = vrot.slane %v256, 5
  %v280 = vsel %vm277, %v278, %v279
  %v281 = vrot.slane %v250, 5
  %v282 = vrot.slane %v257, 5
  %v283 = vsel %vm277, %v281, %v282
  %v284 = vrot.slane %v251, 5
  %v285 = vrot.slane %v258, 5
  %v286 = vsel %vm277, %v284, %v285
  %v287 = vrot.slane %v252, 5
  %v288 = vrot.slane %v259, 5
  %v289 = vsel %vm277, %v287, %v288
  %v290 = vrot.slane %v253, 5
  %v291 = vrot.slane %v260, 5
  %v292 = vsel %vm277, %v290, %v291
  %v293 = vrot.slane %v254, 5
  %v294 = vrot.slane %v261, 5
  %v295 = vsel %vm277, %v293, %v294
  %v296 = vrot.slane %v255, 5
  %v297 = vrot.slane %v262, 5
  %v298 = vsel %vm277, %v296, %v297
  %v306 = vsel %vm135, %v280, 0.0
  %v307 = vrot.slane %v306, 4
  %v308 = vadd.f32 %v306, %v307
  %v309 = vrot.slane %v308, 2
  %v310 = vadd.f32 %v308, %v309
  %v311 = vrot.slane %v310, 1
  %v312 = vadd.f32 %v310, %v311
  %v313 = vsel %vm135, %v283, 0.0
  %v314 = vrot.slane %v313, 4
  %v315 = vadd.f32 %v313, %v314
  %v316 = vrot.slane %v315, 2
  %v317 = vadd.f32 %v315, %v316
  %v318 = vrot.slane %v317, 1
  %v319 = vadd.f32 %v317, %v318
  %v320 = vsel %vm135, %v286, 0.0
  %v321 = vrot.slane %v320, 4
  %v322 = vadd.f32 %v320, %v321
  %v323 = vrot.slane %v322, 2
  %v324 = vadd.f32 %v322, %v323
  %v325 = vrot.slane %v324, 1
  %v326 = vadd.f32 %v324, %v325
  %v327 = vsel %vm135, %v289, 0.0
  %v328 = vrot.slane %v327, 4
  %v329 = vadd.f32 %v327, %v328
  %v330 = vrot.slane %v329, 2
  %v331 = vadd.f32 %v329, %v330
  %v332 = vrot.slane %v331, 1
  %v333 = vadd.f32 %v331, %v332
  %v334 = vsel %vm135, %v292, 0.0
  %v335 = vrot.slane %v334, 4
  %v336 = vadd.f32 %v334, %v335
  %v337 = vrot.slane %v336, 2
  %v338 = vadd.f32 %v336, %v337
  %v339 = vrot.slane %v338, 1
  %v340 = vadd.f32 %v338, %v339
  %v341 = vsel %vm135, %v295, 0.0
  %v342 = vrot.slane %v341, 4
  %v343 = vadd.f32 %v341, %v342
  %v344 = vrot.slane %v343, 2
  %v345 = vadd.f32 %v343, %v344
  %v346 = vrot.slane %v345, 1
  %v347 = vadd.f32 %v345, %v346
  %v348 = vsel %vm178, %v298, 0.0
  %v349 = vrot.slane %v348, 4
  %v350 = vadd.f32 %v348, %v349
  %v351 = vrot.slane %v350, 2
  %v352 = vadd.f32 %v350, %v351
  %v353 = vrot.slane %v352, 1
  %v354 = vadd.f32 %v352, %v353
  %v355 = vmax.f32 %v312, 0.0
  %v356 = vmax.f32 %v319, 0.0
  %v357 = vmax.f32 %v326, 0.0
  %v358 = vmax.f32 %v333, 0.0
  %v359 = vmax.f32 %v340, 0.0
  %v360 = vmax.f32 %v347, 0.0
  %v361 = vmax.f32 %v354, 0.0
  %v369 = vrot.slane %v356, 7
  %v370 = vrot.slane %v357, 6
  %v371 = vrot.slane %v358, 5
  %v372 = vrot.slane %v359, 4
  %v373 = vrot.slane %v360, 3
  %v374 = vrot.slane %v361, 2
  %v375 = vsel %vm206, %v355, %v369
  %v376 = vsel %vm208, %v370, %v371
  %v377 = vsel %vm210, %v375, %v376
  %v378 = vsel %vm212, %v372, %v373
  %v379 = vsel %vm214, %v378, %v374
  %v380 = vsel %vm75, %v377, %v379
  %s382 = scalar_lea.vmem %s8, 1
  %383 = vst.msk [vmem:[%s382] ss:$2 sm:$0x7f] %vm221, %v380
  // Predicated region
  $region34: #{video_depth_forward.31} parent=0 // pred_check
    _
  $region35: #{video_depth_forward.31} parent=0 // pred_check_branch
    %385 = sbr.rel (0) target = $region37
  $region36: #{video_depth_forward.31} parent=0 // pred_region
    _
  $region37: #{video_depth_forward.31} parent=0 // pred_fallthru
    _
  // Predicated region
  $region38: #{video_depth_forward.31} parent=0 // pred_check
    _
  $region39: #{video_depth_forward.31} parent=0 // pred_check_branch
    %387 = sbr.rel (0) target = $region41
  $region40: #{video_depth_forward.31} parent=0 // pred_region
    _
  $region41: #{video_depth_forward.31} parent=0 // pred_fallthru
    _

</llo_original>
